<compile_context>
chip_gen: v7x
topology: tpu7x:2x2x1
jax: 0.10.0
libtpu: 0.0.40
codegen_flags: <defaults>
</compile_context>

<pallas_src>
import math
from functools import partial

import jax
import jax.numpy as jnp
from jax.experimental import pallas as pl
from jax.experimental.pallas import tpu as pltpu


# ---------------------------------------------------------------- kernel -----
def _mha_kernel(q_ref, k_ref, v_ref, mask_ref, w_ref, b_ref, y_ref, scores_ref,
                *, head_num):
    Bblk, S, F = q_ref.shape          # Bblk == 1 (one batch per grid step)
    H = head_num
    d = F // H

    def proj(x_ref, i):
        # bf16 operands -> MXU, f32 accumulation; bias add + ReLU in f32.
        x = x_ref[...].reshape(Bblk * S, F).astype(jnp.bfloat16)
        y = jnp.dot(x, w_ref[i], preferred_element_type=jnp.float32) + b_ref[i]
        return jnp.maximum(y, 0.0)    # activation = F.relu

    qp = proj(q_ref, 0)               # (B*S, F) f32; 1/sqrt(d) already folded in
    kp = proj(k_ref, 1)
    vp = proj(v_ref, 2)

    def to_heads(x):                  # (B*S, F) -> (B*H, S, d), bf16 for the MXU
        return (x.reshape(Bblk, S, H, d).transpose(0, 2, 1, 3)
                 .reshape(Bblk * H, S, d).astype(jnp.bfloat16))

    qh, kh, vh = to_heads(qp), to_heads(kp), to_heads(vp)

    # scaled logits for all heads at once (scale folded into the q projection)
    s = jnp.einsum('nsd,ntd->nst', qh, kh,
                   preferred_element_type=jnp.float32)          # (B*H, S, S) f32

    # masked_fill(mask == 0, -1e9) — exact torch semantics in the returned scores
    m = mask_ref[...].reshape(Bblk * H, S, S)
    s = jnp.where(m == 0.0, jnp.float32(-1e9), s)

    # lane-dense store of the pre-softmax scores: (B, H, S*S), S*S multiple of 128
    scores_ref[...] = s.reshape(Bblk, H, S * S)

    # softmax over keys (f32 element-wise math, exact reciprocal)
    smax = jnp.max(s, axis=-1, keepdims=True)
    p = jnp.exp(s - smax)
    p = p / jnp.sum(p, axis=-1, keepdims=True)

    # attention-weighted values, all heads batched
    yh = jnp.einsum('nst,ntd->nsd', p.astype(jnp.bfloat16), vh,
                    preferred_element_type=jnp.float32)         # (B*H, S, d) f32

    # merge heads -> single full-K=128 output projection + bias + ReLU
    ym = (yh.reshape(Bblk, H, S, d).transpose(0, 2, 1, 3)
            .reshape(Bblk * S, F).astype(jnp.bfloat16))
    yo = jnp.dot(ym, w_ref[3], preferred_element_type=jnp.float32) + b_ref[3]
    y_ref[...] = jnp.maximum(yo, 0.0).reshape(Bblk, S, F)


# --------------------------------------------------------------- wrapper -----
def multi_head_attention(q, k, v, params, mask=None, *, head_num):
    """Fused Pallas forward of MultiHeadAttention(in_features, head_num, bias=True,
    activation=relu).  Returns (y, scores) like the PyTorch module."""
    B, S, F = q.shape
    H = head_num
    assert F % H == 0
    d = F // H
    if mask is None:
        mask = jnp.ones((B, S, S), jnp.float32)           # no masking

    scale = 1.0 / math.sqrt(d)
    # Pack weights/biases; fold 1/sqrt(d) into the q projection (relu(s*z) = s*relu(z)
    # for s > 0, so this is exact).  Weights bf16 for the MXU, biases f32.
    w_pack = jnp.stack([params["wq"] * scale, params["wk"],
                        params["wv"], params["wo"]]).astype(jnp.bfloat16)   # (4, F, F)
    b_pack = jnp.stack([params["bq"] * scale, params["bk"],
                        params["bv"], params["bo"]]
                       ).astype(jnp.float32).reshape(4, 1, F)               # (4, 1, F)

    # torch does mask.repeat(head_num, 1, 1); batched row n = b*H + h therefore uses
    # mask[(b*H + h) % B].  In (B, H, S, S) layout that is tile(mask,(H,1,1)).reshape,
    # flattened to (B, H, S*S) so the in-kernel mask load is lane-dense.
    mask_bh = jnp.tile(mask.astype(jnp.float32), (H, 1, 1)).reshape(B, H, S * S)

    y, scores_bh = pl.pallas_call(
        partial(_mha_kernel, head_num=H),
        grid=(B,),
        out_shape=(jax.ShapeDtypeStruct((B, S, F), jnp.float32),
                   jax.ShapeDtypeStruct((B, H, S * S), jnp.float32)),
        in_specs=[
            pl.BlockSpec((1, S, F), lambda b: (b, 0, 0)),        # q
            pl.BlockSpec((1, S, F), lambda b: (b, 0, 0)),        # k
            pl.BlockSpec((1, S, F), lambda b: (b, 0, 0)),        # v
            pl.BlockSpec((1, H, S * S), lambda b: (b, 0, 0)),    # mask (lane-dense)
            pl.BlockSpec((4, F, F), lambda b: (0, 0, 0)),        # packed weights (resident)
            pl.BlockSpec((4, 1, F), lambda b: (0, 0, 0)),        # packed biases (resident)
        ],
        out_specs=(
            pl.BlockSpec((1, S, F), lambda b: (b, 0, 0)),        # y
            pl.BlockSpec((1, H, S * S), lambda b: (b, 0, 0)),    # scores (lane-dense)
        ),
        compiler_params=pltpu.CompilerParams(
            dimension_semantics=("parallel",)),                  # v7x: batches across 2 TCs
    )(q, k, v, mask_bh, w_pack, b_pack)

    # torch layout is row b*H + h -> plain reshape, no transpose needed.
    scores = scores_bh.reshape(B * H, S, S)
    return y, scores


# --------------------------------------------- pure-JAX reference (torch) ----
def _reference(q, k, v, params, mask, head_num):
    hi = jax.lax.Precision.HIGHEST
    B, S, F = q.shape
    d = F // head_num
    relu = lambda x: jnp.maximum(x, 0.0)
    qp = relu(jnp.dot(q, params["wq"], precision=hi) + params["bq"])
    kp = relu(jnp.dot(k, params["wk"], precision=hi) + params["bk"])
    vp = relu(jnp.dot(v, params["wv"], precision=hi) + params["bv"])

    def to_batches(x):
        return x.reshape(B, S, head_num, d).transpose(0, 2, 1, 3).reshape(B * head_num, S, d)

    qb, kb, vb = to_batches(qp), to_batches(kp), to_batches(vp)
    scores = jnp.einsum('nsd,ntd->nst', qb, kb, precision=hi) / math.sqrt(d)
    if mask is not None:
        mask_rep = jnp.tile(mask, (head_num, 1, 1))
        scores = jnp.where(mask_rep == 0.0, jnp.float32(-1e9), scores)
    att = jax.nn.softmax(scores, axis=-1)
    yb = jnp.einsum('nst,ntd->nsd', att, vb, precision=hi)
    y = yb.reshape(B, head_num, S, d).transpose(0, 2, 1, 3).reshape(B, S, F)
    y = relu(jnp.dot(y, params["wo"], precision=hi) + params["bo"])
    return y, scores


# ------------------------------------------------------------------ main -----
if __name__ == "__main__":
    B, S, F_IN, H = 2, 16, 128, 4                     # in_features=128, head_num=4

    root = jax.random.PRNGKey(0)
    ks = jax.random.split(root, 12)

    def lin_init(kw, kb, fin, fout):
        # weights stored already transposed: out = x @ w + b  (== torch x @ W.T + b)
        w = jax.random.normal(kw, (fin, fout), jnp.float32) / math.sqrt(fin)
        b = jax.random.normal(kb, (fout,), jnp.float32) * 0.01
        return w, b

    params = {}
    params["wq"], params["bq"] = lin_init(ks[0], ks[1], F_IN, F_IN)
    params["wk"], params["bk"] = lin_init(ks[2], ks[3], F_IN, F_IN)
    params["wv"], params["bv"] = lin_init(ks[4], ks[5], F_IN, F_IN)
    params["wo"], params["bo"] = lin_init(ks[6], ks[7], F_IN, F_IN)

    q = jax.random.normal(ks[8], (B, S, F_IN), jnp.float32)
    k = jax.random.normal(ks[9], (B, S, F_IN), jnp.float32)
    v = jax.random.normal(ks[10], (B, S, F_IN), jnp.float32)
    # causal mask, as MultiHeadAttention.gen_history_mask(x) would produce
    mask = jnp.broadcast_to(jnp.tril(jnp.ones((S, S), jnp.float32)), (B, S, S))

    fwd = jax.jit(partial(multi_head_attention, head_num=H))
    y, scores = fwd(q, k, v, params, mask)
    jax.block_until_ready((y, scores))

    assert y.shape == (B, S, F_IN)
    assert scores.shape == (B * H, S, S)

    # sanity check vs. pure-JAX torch-equivalent reference (tolerance covers the
    # bf16 MXU operands with f32 accumulation used inside the kernel)
    y_ref, s_ref = _reference(q, k, v, params, mask, H)
    assert jnp.allclose(scores, s_ref, atol=3e-2, rtol=3e-2)
    assert jnp.allclose(y, y_ref, atol=3e-2, rtol=3e-2)

    print("KERNEL_OK")
</pallas_src>

<mosaic_0001>
module attributes {stable_mosaic.version = 11 : i64} {
  func.func @_mha_kernel(%arg0: i32, %arg1: memref<1x16x128xf32, #tpu.memory_space<vmem>>, %arg2: memref<1x16x128xf32, #tpu.memory_space<vmem>>, %arg3: memref<1x16x128xf32, #tpu.memory_space<vmem>>, %arg4: memref<1x4x256xf32, #tpu.memory_space<vmem>>, %arg5: memref<4x128x128xbf16, #tpu.memory_space<vmem>>, %arg6: memref<4x1x128xf32, #tpu.memory_space<vmem>>, %arg7: memref<1x16x128xf32, #tpu.memory_space<vmem>>, %arg8: memref<1x4x256xf32, #tpu.memory_space<vmem>>) attributes {dimension_semantics = [#tpu.dimension_semantics<parallel>], iteration_bounds = array<i64: 2>, scalar_prefetch = 0 : i64, scratch_operands = 0 : i64, tpu.core_type = #tpu.core_type<tc>, window_params = [{transform_indices = @transform_0, window_bounds = array<i64: 1, 16, 128>}, {transform_indices = @transform_1, window_bounds = array<i64: 1, 16, 128>}, {transform_indices = @transform_2, window_bounds = array<i64: 1, 16, 128>}, {transform_indices = @transform_3, window_bounds = array<i64: 1, 4, 256>}, {pipeline_mode = #tpu.pipeline_mode<synchronous>, transform_indices = @transform_4, window_bounds = array<i64: 4, 128, 128>}, {pipeline_mode = #tpu.pipeline_mode<synchronous>, transform_indices = @transform_5, window_bounds = array<i64: 4, 1, 128>}, {transform_indices = @transform_6, window_bounds = array<i64: 1, 16, 128>}, {transform_indices = @transform_7, window_bounds = array<i64: 1, 4, 256>}]} {
    %c0 = arith.constant 0 : index
    %c0_0 = arith.constant 0 : index
    %c0_1 = arith.constant 0 : index
    %0 = vector.load %arg1[%c0, %c0_0, %c0_1] : memref<1x16x128xf32, #tpu.memory_space<vmem>>, vector<1x16x128xf32>
    %1 = vector.shape_cast %0 : vector<1x16x128xf32> to vector<16x128xf32>
    %2 = arith.truncf %1 : vector<16x128xf32> to vector<16x128xbf16>
    %c0_2 = arith.constant 0 : index
    %c0_3 = arith.constant 0 : index
    %c0_4 = arith.constant 0 : index
    %3 = vector.load %arg5[%c0_2, %c0_3, %c0_4] : memref<4x128x128xbf16, #tpu.memory_space<vmem>>, vector<1x128x128xbf16>
    %4 = vector.shape_cast %3 : vector<1x128x128xbf16> to vector<128x128xbf16>
    %cst = arith.constant dense<0.000000e+00> : vector<16x128xf32>
    %5 = tpu.matmul %2, %4, %cst {dimension_numbers = #tpu.dot_dimension_numbers<[1], [0], [0], [1], [0, 0, 1, 1], [], []>} : vector<16x128xbf16>, vector<128x128xbf16>, vector<16x128xf32> -> vector<16x128xf32>
    %c0_5 = arith.constant 0 : index
    %c0_6 = arith.constant 0 : index
    %c0_7 = arith.constant 0 : index
    %6 = vector.load %arg6[%c0_5, %c0_6, %c0_7] : memref<4x1x128xf32, #tpu.memory_space<vmem>>, vector<1x1x128xf32>
    %7 = vector.shape_cast %6 : vector<1x1x128xf32> to vector<1x128xf32>
    %8 = vector.broadcast %7 : vector<1x128xf32> to vector<16x128xf32>
    %9 = arith.addf %5, %8 : vector<16x128xf32>
    %cst_8 = arith.constant 0.000000e+00 : f32
    %10 = vector.broadcast %cst_8 : f32 to vector<16x128xf32>
    %11 = arith.maximumf %9, %10 : vector<16x128xf32>
    %c0_9 = arith.constant 0 : index
    %c0_10 = arith.constant 0 : index
    %c0_11 = arith.constant 0 : index
    %12 = vector.load %arg2[%c0_9, %c0_10, %c0_11] : memref<1x16x128xf32, #tpu.memory_space<vmem>>, vector<1x16x128xf32>
    %13 = vector.shape_cast %12 : vector<1x16x128xf32> to vector<16x128xf32>
    %14 = arith.truncf %13 : vector<16x128xf32> to vector<16x128xbf16>
    %c1 = arith.constant 1 : index
    %c0_12 = arith.constant 0 : index
    %c0_13 = arith.constant 0 : index
    %15 = vector.load %arg5[%c1, %c0_12, %c0_13] : memref<4x128x128xbf16, #tpu.memory_space<vmem>>, vector<1x128x128xbf16>
    %16 = vector.shape_cast %15 : vector<1x128x128xbf16> to vector<128x128xbf16>
    %cst_14 = arith.constant dense<0.000000e+00> : vector<16x128xf32>
    %17 = tpu.matmul %14, %16, %cst_14 {dimension_numbers = #tpu.dot_dimension_numbers<[1], [0], [0], [1], [0, 0, 1, 1], [], []>} : vector<16x128xbf16>, vector<128x128xbf16>, vector<16x128xf32> -> vector<16x128xf32>
    %c1_15 = arith.constant 1 : index
    %c0_16 = arith.constant 0 : index
    %c0_17 = arith.constant 0 : index
    %18 = vector.load %arg6[%c1_15, %c0_16, %c0_17] : memref<4x1x128xf32, #tpu.memory_space<vmem>>, vector<1x1x128xf32>
    %19 = vector.shape_cast %18 : vector<1x1x128xf32> to vector<1x128xf32>
    %20 = vector.broadcast %19 : vector<1x128xf32> to vector<16x128xf32>
    %21 = arith.addf %17, %20 : vector<16x128xf32>
    %cst_18 = arith.constant 0.000000e+00 : f32
    %22 = vector.broadcast %cst_18 : f32 to vector<16x128xf32>
    %23 = arith.maximumf %21, %22 : vector<16x128xf32>
    %c0_19 = arith.constant 0 : index
    %c0_20 = arith.constant 0 : index
    %c0_21 = arith.constant 0 : index
    %24 = vector.load %arg3[%c0_19, %c0_20, %c0_21] : memref<1x16x128xf32, #tpu.memory_space<vmem>>, vector<1x16x128xf32>
    %25 = vector.shape_cast %24 : vector<1x16x128xf32> to vector<16x128xf32>
    %26 = arith.truncf %25 : vector<16x128xf32> to vector<16x128xbf16>
    %c2 = arith.constant 2 : index
    %c0_22 = arith.constant 0 : index
    %c0_23 = arith.constant 0 : index
    %27 = vector.load %arg5[%c2, %c0_22, %c0_23] : memref<4x128x128xbf16, #tpu.memory_space<vmem>>, vector<1x128x128xbf16>
    %28 = vector.shape_cast %27 : vector<1x128x128xbf16> to vector<128x128xbf16>
    %cst_24 = arith.constant dense<0.000000e+00> : vector<16x128xf32>
    %29 = tpu.matmul %26, %28, %cst_24 {dimension_numbers = #tpu.dot_dimension_numbers<[1], [0], [0], [1], [0, 0, 1, 1], [], []>} : vector<16x128xbf16>, vector<128x128xbf16>, vector<16x128xf32> -> vector<16x128xf32>
    %c2_25 = arith.constant 2 : index
    %c0_26 = arith.constant 0 : index
    %c0_27 = arith.constant 0 : index
    %30 = vector.load %arg6[%c2_25, %c0_26, %c0_27] : memref<4x1x128xf32, #tpu.memory_space<vmem>>, vector<1x1x128xf32>
    %31 = vector.shape_cast %30 : vector<1x1x128xf32> to vector<1x128xf32>
    %32 = vector.broadcast %31 : vector<1x128xf32> to vector<16x128xf32>
    %33 = arith.addf %29, %32 : vector<16x128xf32>
    %cst_28 = arith.constant 0.000000e+00 : f32
    %34 = vector.broadcast %cst_28 : f32 to vector<16x128xf32>
    %35 = arith.maximumf %33, %34 : vector<16x128xf32>
    %36 = vector.shape_cast %11 : vector<16x128xf32> to vector<1x16x4x32xf32>
    %37 = tpu.transpose %36, [0, 2, 1, 3] : vector<1x16x4x32xf32> -> vector<1x4x16x32xf32>
    %38 = vector.shape_cast %37 : vector<1x4x16x32xf32> to vector<4x16x32xf32>
    %39 = arith.truncf %38 : vector<4x16x32xf32> to vector<4x16x32xbf16>
    %40 = vector.shape_cast %23 : vector<16x128xf32> to vector<1x16x4x32xf32>
    %41 = tpu.transpose %40, [0, 2, 1, 3] : vector<1x16x4x32xf32> -> vector<1x4x16x32xf32>
    %42 = vector.shape_cast %41 : vector<1x4x16x32xf32> to vector<4x16x32xf32>
    %43 = arith.truncf %42 : vector<4x16x32xf32> to vector<4x16x32xbf16>
    %44 = vector.shape_cast %35 : vector<16x128xf32> to vector<1x16x4x32xf32>
    %45 = tpu.transpose %44, [0, 2, 1, 3] : vector<1x16x4x32xf32> -> vector<1x4x16x32xf32>
    %46 = vector.shape_cast %45 : vector<1x4x16x32xf32> to vector<4x16x32xf32>
    %47 = arith.truncf %46 : vector<4x16x32xf32> to vector<4x16x32xbf16>
    "tpu.trace_start"() <{level = 10 : i32, message = "nsd,ntd->nst"}> : () -> ()
    %cst_29 = arith.constant dense<0.000000e+00> : vector<4x16x16xf32>
    %48 = tpu.matmul %39, %43, %cst_29 {dimension_numbers = #tpu.dot_dimension_numbers<[2], [2], [1], [1], [0, 0, 0, 1, 1, 1], [0], [0]>} : vector<4x16x32xbf16>, vector<4x16x32xbf16>, vector<4x16x16xf32> -> vector<4x16x16xf32>
    "tpu.trace_stop"() : () -> ()
    %c0_30 = arith.constant 0 : index
    %c0_31 = arith.constant 0 : index
    %c0_32 = arith.constant 0 : index
    %49 = vector.load %arg4[%c0_30, %c0_31, %c0_32] : memref<1x4x256xf32, #tpu.memory_space<vmem>>, vector<1x4x256xf32>
    %50 = vector.shape_cast %49 : vector<1x4x256xf32> to vector<4x16x16xf32>
    %cst_33 = arith.constant 0.000000e+00 : f32
    %51 = vector.broadcast %cst_33 : f32 to vector<4x16x16xf32>
    %52 = arith.cmpf oeq, %50, %51 : vector<4x16x16xf32>
    %cst_34 = arith.constant -1.000000e+09 : f32
    %53 = vector.broadcast %cst_34 : f32 to vector<4x16x16xf32>
    %54 = arith.select %52, %53, %48 : vector<4x16x16xi1>, vector<4x16x16xf32>
    %55 = vector.shape_cast %54 : vector<4x16x16xf32> to vector<1x4x256xf32>
    %c0_35 = arith.constant 0 : index
    %c0_36 = arith.constant 0 : index
    %c0_37 = arith.constant 0 : index
    %56 = vector.load %arg8[%c0_35, %c0_36, %c0_37] : memref<1x4x256xf32, #tpu.memory_space<vmem>>, vector<1x4x256xf32>
    tpu.vector_store %arg8[%c0_35, %c0_36, %c0_37], %55 {strides = array<i32>} : memref<1x4x256xf32, #tpu.memory_space<vmem>>, vector<1x4x256xf32>,
    %cst_38 = arith.constant dense<0xFF800000> : vector<4x16xf32>
    %57 = vector.multi_reduction <maximumf>, %54, %cst_38 [2] : vector<4x16x16xf32> to vector<4x16xf32>
    %58 = vector.shape_cast %57 : vector<4x16xf32> to vector<4x16x1xf32>
    %59 = vector.broadcast %58 : vector<4x16x1xf32> to vector<4x16x16xf32>
    %60 = arith.subf %54, %59 : vector<4x16x16xf32>
    %61 = math.exp %60 : vector<4x16x16xf32>
    %cst_39 = arith.constant dense<0.000000e+00> : vector<4x16xf32>
    %62 = vector.multi_reduction <add>, %61, %cst_39 [2] : vector<4x16x16xf32> to vector<4x16xf32>
    %63 = vector.shape_cast %62 : vector<4x16xf32> to vector<4x16x1xf32>
    %64 = vector.broadcast %63 : vector<4x16x1xf32> to vector<4x16x16xf32>
    %65 = arith.divf %61, %64 : vector<4x16x16xf32>
    %66 = arith.truncf %65 : vector<4x16x16xf32> to vector<4x16x16xbf16>
    "tpu.trace_start"() <{level = 10 : i32, message = "nst,ntd->nsd"}> : () -> ()
    %cst_40 = arith.constant dense<0.000000e+00> : vector<4x16x32xf32>
    %67 = tpu.matmul %66, %47, %cst_40 {dimension_numbers = #tpu.dot_dimension_numbers<[2], [1], [1], [2], [0, 0, 0, 1, 1, 2], [0], [0]>} : vector<4x16x16xbf16>, vector<4x16x32xbf16>, vector<4x16x32xf32> -> vector<4x16x32xf32>
    "tpu.trace_stop"() : () -> ()
    %68 = vector.shape_cast %67 : vector<4x16x32xf32> to vector<1x4x16x32xf32>
    %69 = tpu.transpose %68, [0, 2, 1, 3] : vector<1x4x16x32xf32> -> vector<1x16x4x32xf32>
    %70 = vector.shape_cast %69 : vector<1x16x4x32xf32> to vector<16x128xf32>
    %71 = arith.truncf %70 : vector<16x128xf32> to vector<16x128xbf16>
    %c3 = arith.constant 3 : index
    %c0_41 = arith.constant 0 : index
    %c0_42 = arith.constant 0 : index
    %72 = vector.load %arg5[%c3, %c0_41, %c0_42] : memref<4x128x128xbf16, #tpu.memory_space<vmem>>, vector<1x128x128xbf16>
    %73 = vector.shape_cast %72 : vector<1x128x128xbf16> to vector<128x128xbf16>
    %cst_43 = arith.constant dense<0.000000e+00> : vector<16x128xf32>
    %74 = tpu.matmul %71, %73, %cst_43 {dimension_numbers = #tpu.dot_dimension_numbers<[1], [0], [0], [1], [0, 0, 1, 1], [], []>} : vector<16x128xbf16>, vector<128x128xbf16>, vector<16x128xf32> -> vector<16x128xf32>
    %c3_44 = arith.constant 3 : index
    %c0_45 = arith.constant 0 : index
    %c0_46 = arith.constant 0 : index
    %75 = vector.load %arg6[%c3_44, %c0_45, %c0_46] : memref<4x1x128xf32, #tpu.memory_space<vmem>>, vector<1x1x128xf32>
    %76 = vector.shape_cast %75 : vector<1x1x128xf32> to vector<1x128xf32>
    %77 = vector.broadcast %76 : vector<1x128xf32> to vector<16x128xf32>
    %78 = arith.addf %74, %77 : vector<16x128xf32>
    %cst_47 = arith.constant 0.000000e+00 : f32
    %79 = vector.broadcast %cst_47 : f32 to vector<16x128xf32>
    %80 = arith.maximumf %78, %79 : vector<16x128xf32>
    %81 = vector.shape_cast %80 : vector<16x128xf32> to vector<1x16x128xf32>
    %c0_48 = arith.constant 0 : index
    %c0_49 = arith.constant 0 : index
    %c0_50 = arith.constant 0 : index
    %82 = vector.load %arg7[%c0_48, %c0_49, %c0_50] : memref<1x16x128xf32, #tpu.memory_space<vmem>>, vector<1x16x128xf32>
    tpu.vector_store %arg7[%c0_48, %c0_49, %c0_50], %81 {strides = array<i32>} : memref<1x16x128xf32, #tpu.memory_space<vmem>>, vector<1x16x128xf32>,
    return
  }
  func.func @transform_0(%arg0: i32) -> (i32, i32, i32) {
    %c0_i32 = arith.constant 0 : i32
    %c0_i32_0 = arith.constant 0 : i32
    %c0_i32_1 = arith.constant 0 : i32
    return %arg0, %c0_i32, %c0_i32_0 : i32, i32, i32
  }
  func.func @transform_1(%arg0: i32) -> (i32, i32, i32) {
    %c0_i32 = arith.constant 0 : i32
    %c0_i32_0 = arith.constant 0 : i32
    %c0_i32_1 = arith.constant 0 : i32
    return %arg0, %c0_i32, %c0_i32_0 : i32, i32, i32
  }
  func.func @transform_2(%arg0: i32) -> (i32, i32, i32) {
    %c0_i32 = arith.constant 0 : i32
    %c0_i32_0 = arith.constant 0 : i32
    %c0_i32_1 = arith.constant 0 : i32
    return %arg0, %c0_i32, %c0_i32_0 : i32, i32, i32
  }
  func.func @transform_3(%arg0: i32) -> (i32, i32, i32) {
    %c0_i32 = arith.constant 0 : i32
    %c0_i32_0 = arith.constant 0 : i32
    %c0_i32_1 = arith.constant 0 : i32
    return %arg0, %c0_i32, %c0_i32_0 : i32, i32, i32
  }
  func.func @transform_4(%arg0: i32) -> (i32, i32, i32) {
    %c0_i32 = arith.constant 0 : i32
    %c0_i32_0 = arith.constant 0 : i32
    %c0_i32_1 = arith.constant 0 : i32
    %c0_i32_2 = arith.constant 0 : i32
    return %c0_i32, %c0_i32_0, %c0_i32_1 : i32, i32, i32
  }
  func.func @transform_5(%arg0: i32) -> (i32, i32, i32) {
    %c0_i32 = arith.constant 0 : i32
    %c0_i32_0 = arith.constant 0 : i32
    %c0_i32_1 = arith.constant 0 : i32
    %c0_i32_2 = arith.constant 0 : i32
    return %c0_i32, %c0_i32_0, %c0_i32_1 : i32, i32, i32
  }
  func.func @transform_6(%arg0: i32) -> (i32, i32, i32) {
    %c0_i32 = arith.constant 0 : i32
    %c0_i32_0 = arith.constant 0 : i32
    %c0_i32_1 = arith.constant 0 : i32
    return %arg0, %c0_i32, %c0_i32_0 : i32, i32, i32
  }
  func.func @transform_7(%arg0: i32) -> (i32, i32, i32) {
    %c0_i32 = arith.constant 0 : i32
    %c0_i32_0 = arith.constant 0 : i32
    %c0_i32_1 = arith.constant 0 : i32
    return %arg0, %c0_i32, %c0_i32_0 : i32, i32, i32
  }
}

</mosaic_0001>

<llo_original>
// kernel: tile.9
$region0: #{tile.9}
  %s0 = inlined_call_operand.vmem [shape: f32[4,2,16,1,16], index: 0, kind: input, shape index: {}]
  %s1 = inlined_call_operand.vmem [shape: f32[2,4,256], index: 1, kind: output, shape index: {}]
  $region1: #{tile.9} parent=0
    #allocation0 [shape = 'u8[16384]{0}', space=vmem, size = 0x4000, scoped, tag = 'scoped mem for output reshape']
    %v2 = vld [vmem:[%s0] ss:$8 sm:$0xf]
    %v3 = vld [vmem:[%s0] ss:$8 sm:$0xf0]
    %vm4 = vcmask 1047556
    %v5 = vsel %vm4, %v3, %v2
    %vm6 = vcmask 130048
    %7 = vst.msk [vmem:[#allocation0] ss:$8 sm:$0x3] %vm6, %v5
    %s8 = scalar_lea.vmem [#allocation0], 4294967281
    %9 = vst.msk [vmem:[%s8] ss:$8 sm:$0xc] %vm6, %v5
    %s10 = scalar_lea.vmem [#allocation0], 4294967266
    %11 = vst.msk [vmem:[%s10] ss:$8 sm:$0x30] %vm6, %v5
    %s12 = scalar_lea.vmem [#allocation0], 4294967251
    %13 = vst.msk [vmem:[%s12] ss:$8 sm:$0xc0] %vm6, %v5
    %s14 = scalar_lea.vmem %s0, 64
    %v15 = vld [vmem:[%s14] ss:$8 sm:$0xf]
    %s16 = scalar_lea.vmem %s0, 64
    %v17 = vld [vmem:[%s16] ss:$8 sm:$0xf0]
    %vm18 = vcmask 1047556
    %v19 = vsel %vm18, %v17, %v15
    %vm20 = vcmask 130048
    %s21 = scalar_lea.vmem [#allocation0], 16
    %22 = vst.msk [vmem:[%s21] ss:$8 sm:$0x3] %vm20, %v19
    %s23 = scalar_lea.vmem [#allocation0], 1
    %24 = vst.msk [vmem:[%s23] ss:$8 sm:$0xc] %vm20, %v19
    %s25 = scalar_lea.vmem [#allocation0], 4294967282
    %26 = vst.msk [vmem:[%s25] ss:$8 sm:$0x30] %vm20, %v19
    %s27 = scalar_lea.vmem [#allocation0], 4294967267
    %28 = vst.msk [vmem:[%s27] ss:$8 sm:$0xc0] %vm20, %v19
    %s29 = scalar_lea.vmem %s0, 7
    %s30 = smov 3
    %v31 = vld [vmem:[%s29] ss:$16 sm:%s30]
    %s32 = scalar_lea.vmem %s0, 7
    %s33 = smov 12
    %v34 = vld [vmem:[%s32] ss:$16 sm:%s33]
    %vm35 = vcmask 1043458
    %v36 = vsel %vm35, %v34, %v31
    %s37 = scalar_lea.vmem %s0, 4294967247
    %s38 = smov 48
    %v39 = vld [vmem:[%s37] ss:$16 sm:%s38]
    %vm40 = vcmask 1045508
    %v41 = vsel %vm40, %v39, %v36
    %s42 = scalar_lea.vmem %s0, 4294967247
    %s43 = smov 192
    %v44 = vld [vmem:[%s42] ss:$16 sm:%s43]
    %vm45 = vcmask 1047558
    %v46 = vsel %vm45, %v44, %v41
    %47 = vrot.lane.b32.xlu0 %v46, 112
    %v48 = vpop.permute.xlu0 %47
    %vm49 = vcmask 1048448
    %50 = vst.msk [vmem:[#allocation0] sm:$0xf] %vm49, %v48
    %s51 = scalar_lea.vmem [#allocation0], 4
    %52 = vst.msk [vmem:[%s51] sm:$0xf0] %vm49, %v48
    %s53 = scalar_lea.vmem %s0, 71
    %s54 = smov 3
    %v55 = vld [vmem:[%s53] ss:$16 sm:%s54]
    %s56 = scalar_lea.vmem %s0, 71
    %s57 = smov 12
    %v58 = vld [vmem:[%s56] ss:$16 sm:%s57]
    %vm59 = vcmask 1043458
    %v60 = vsel %vm59, %v58, %v55
    %s61 = scalar_lea.vmem %s0, 15
    %s62 = smov 48
    %v63 = vld [vmem:[%s61] ss:$16 sm:%s62]
    %vm64 = vcmask 1045508
    %v65 = vsel %vm64, %v63, %v60
    %s66 = scalar_lea.vmem %s0, 15
    %s67 = smov 192
    %v68 = vld [vmem:[%s66] ss:$16 sm:%s67]
    %vm69 = vcmask 1047558
    %v70 = vsel %vm69, %v68, %v65
    %71 = vrot.lane.b32.xlu0 %v70, 112
    %v72 = vpop.permute.xlu0 %71
    %vm73 = vcmask 1048448
    %s74 = scalar_lea.vmem [#allocation0], 16
    %75 = vst.msk [vmem:[%s74] sm:$0xf] %vm73, %v72
    %s76 = scalar_lea.vmem [#allocation0], 20
    %77 = vst.msk [vmem:[%s76] sm:$0xf0] %vm73, %v72
    %s78 = scalar_lea.vmem %s0, 6
    %s79 = smov 3
    %v80 = vld [vmem:[%s78] ss:$16 sm:%s79]
    %s81 = scalar_lea.vmem %s0, 6
    %s82 = smov 12
    %v83 = vld [vmem:[%s81] ss:$16 sm:%s82]
    %vm84 = vcmask 1043458
    %v85 = vsel %vm84, %v83, %v80
    %s86 = scalar_lea.vmem %s0, 4294967246
    %s87 = smov 48
    %v88 = vld [vmem:[%s86] ss:$16 sm:%s87]
    %vm89 = vcmask 1045508
    %v90 = vsel %vm89, %v88, %v85
    %s91 = scalar_lea.vmem %s0, 4294967246
    %s92 = smov 192
    %v93 = vld [vmem:[%s91] ss:$16 sm:%s92]
    %vm94 = vcmask 1047558
    %v95 = vsel %vm94, %v93, %v90
    %96 = vrot.lane.b32.xlu0 %v95, 96
    %v97 = vpop.permute.xlu0 %96
    %vm98 = vcmask 917248
    %99 = vst.msk [vmem:[#allocation0] sm:$0xf] %vm98, %v97
    %s100 = scalar_lea.vmem [#allocation0], 4
    %101 = vst.msk [vmem:[%s100] sm:$0xf0] %vm98, %v97
    %s102 = scalar_lea.vmem %s0, 70
    %s103 = smov 3
    %v104 = vld [vmem:[%s102] ss:$16 sm:%s103]
    %s105 = scalar_lea.vmem %s0, 70
    %s106 = smov 12
    %v107 = vld [vmem:[%s105] ss:$16 sm:%s106]
    %vm108 = vcmask 1043458
    %v109 = vsel %vm108, %v107, %v104
    %s110 = scalar_lea.vmem %s0, 14
    %s111 = smov 48
    %v112 = vld [vmem:[%s110] ss:$16 sm:%s111]
    %vm113 = vcmask 1045508
    %v114 = vsel %vm113, %v112, %v109
    %s115 = scalar_lea.vmem %s0, 14
    %s116 = smov 192
    %v117 = vld [vmem:[%s115] ss:$16 sm:%s116]
    %vm118 = vcmask 1047558
    %v119 = vsel %vm118, %v117, %v114
    %120 = vrot.lane.b32.xlu0 %v119, 96
    %v121 = vpop.permute.xlu0 %120
    %vm122 = vcmask 917248
    %s123 = scalar_lea.vmem [#allocation0], 16
    %124 = vst.msk [vmem:[%s123] sm:$0xf] %vm122, %v121
    %s125 = scalar_lea.vmem [#allocation0], 20
    %126 = vst.msk [vmem:[%s125] sm:$0xf0] %vm122, %v121
    %s127 = scalar_lea.vmem %s0, 5
    %s128 = smov 3
    %v129 = vld [vmem:[%s127] ss:$16 sm:%s128]
    %s130 = scalar_lea.vmem %s0, 5
    %s131 = smov 12
    %v132 = vld [vmem:[%s130] ss:$16 sm:%s131]
    %vm133 = vcmask 1043458
    %v134 = vsel %vm133, %v132, %v129
    %s135 = scalar_lea.vmem %s0, 4294967245
    %s136 = smov 48
    %v137 = vld [vmem:[%s135] ss:$16 sm:%s136]
    %vm138 = vcmask 1045508
    %v139 = vsel %vm138, %v137, %v134
    %s140 = scalar_lea.vmem %s0, 4294967245
    %s141 = smov 192
    %v142 = vld [vmem:[%s140] ss:$16 sm:%s141]
    %vm143 = vcmask 1047558
    %v144 = vsel %vm143, %v142, %v139
    %145 = vrot.lane.b32.xlu0 %v144, 80
    %v146 = vpop.permute.xlu0 %145
    %vm147 = vcmask 786048
    %148 = vst.msk [vmem:[#allocation0] sm:$0xf] %vm147, %v146
    %s149 = scalar_lea.vmem [#allocation0], 4
    %150 = vst.msk [vmem:[%s149] sm:$0xf0] %vm147, %v146
    %s151 = scalar_lea.vmem %s0, 69
    %s152 = smov 3
    %v153 = vld [vmem:[%s151] ss:$16 sm:%s152]
    %s154 = scalar_lea.vmem %s0, 69
    %s155 = smov 12
    %v156 = vld [vmem:[%s154] ss:$16 sm:%s155]
    %vm157 = vcmask 1043458
    %v158 = vsel %vm157, %v156, %v153
    %s159 = scalar_lea.vmem %s0, 13
    %s160 = smov 48
    %v161 = vld [vmem:[%s159] ss:$16 sm:%s160]
    %vm162 = vcmask 1045508
    %v163 = vsel %vm162, %v161, %v158
    %s164 = scalar_lea.vmem %s0, 13
    %s165 = smov 192
    %v166 = vld [vmem:[%s164] ss:$16 sm:%s165]
    %vm167 = vcmask 1047558
    %v168 = vsel %vm167, %v166, %v163
    %169 = vrot.lane.b32.xlu0 %v168, 80
    %v170 = vpop.permute.xlu0 %169
    %vm171 = vcmask 786048
    %s172 = scalar_lea.vmem [#allocation0], 16
    %173 = vst.msk [vmem:[%s172] sm:$0xf] %vm171, %v170
    %s174 = scalar_lea.vmem [#allocation0], 20
    %175 = vst.msk [vmem:[%s174] sm:$0xf0] %vm171, %v170
    %s176 = scalar_lea.vmem %s0, 4
    %s177 = smov 3
    %v178 = vld [vmem:[%s176] ss:$16 sm:%s177]
    %s179 = scalar_lea.vmem %s0, 4
    %s180 = smov 12
    %v181 = vld [vmem:[%s179] ss:$16 sm:%s180]
    %vm182 = vcmask 1043458
    %v183 = vsel %vm182, %v181, %v178
    %s184 = scalar_lea.vmem %s0, 4294967244
    %s185 = smov 48
    %v186 = vld [vmem:[%s184] ss:$16 sm:%s185]
    %vm187 = vcmask 1045508
    %v188 = vsel %vm187, %v186, %v183
    %s189 = scalar_lea.vmem %s0, 4294967244
    %s190 = smov 192
    %v191 = vld [vmem:[%s189] ss:$16 sm:%s190]
    %vm192 = vcmask 1047558
    %v193 = vsel %vm192, %v191, %v188
    %194 = vrot.lane.b32.xlu0 %v193, 64
    %v195 = vpop.permute.xlu0 %194
    %vm196 = vcmask 654848
    %197 = vst.msk [vmem:[#allocation0] sm:$0xf] %vm196, %v195
    %s198 = scalar_lea.vmem [#allocation0], 4
    %199 = vst.msk [vmem:[%s198] sm:$0xf0] %vm196, %v195
    %s200 = scalar_lea.vmem %s0, 68
    %s201 = smov 3
    %v202 = vld [vmem:[%s200] ss:$16 sm:%s201]
    %s203 = scalar_lea.vmem %s0, 68
    %s204 = smov 12
    %v205 = vld [vmem:[%s203] ss:$16 sm:%s204]
    %vm206 = vcmask 1043458
    %v207 = vsel %vm206, %v205, %v202
    %s208 = scalar_lea.vmem %s0, 12
    %s209 = smov 48
    %v210 = vld [vmem:[%s208] ss:$16 sm:%s209]
    %vm211 = vcmask 1045508
    %v212 = vsel %vm211, %v210, %v207
    %s213 = scalar_lea.vmem %s0, 12
    %s214 = smov 192
    %v215 = vld [vmem:[%s213] ss:$16 sm:%s214]
    %vm216 = vcmask 1047558
    %v217 = vsel %vm216, %v215, %v212
    %218 = vrot.lane.b32.xlu0 %v217, 64
    %v219 = vpop.permute.xlu0 %218
    %vm220 = vcmask 654848
    %s221 = scalar_lea.vmem [#allocation0], 16
    %222 = vst.msk [vmem:[%s221] sm:$0xf] %vm220, %v219
    %s223 = scalar_lea.vmem [#allocation0], 20
    %224 = vst.msk [vmem:[%s223] sm:$0xf0] %vm220, %v219
    %s225 = scalar_lea.vmem %s0, 3
    %s226 = smov 3
    %v227 = vld [vmem:[%s225] ss:$16 sm:%s226]
    %s228 = scalar_lea.vmem %s0, 3
    %s229 = smov 12
    %v230 = vld [vmem:[%s228] ss:$16 sm:%s229]
    %vm231 = vcmask 1043458
    %v232 = vsel %vm231, %v230, %v227
    %s233 = scalar_lea.vmem %s0, 4294967243
    %s234 = smov 48
    %v235 = vld [vmem:[%s233] ss:$16 sm:%s234]
    %vm236 = vcmask 1045508
    %v237 = vsel %vm236, %v235, %v232
    %s238 = scalar_lea.vmem %s0, 4294967243
    %s239 = smov 192
    %v240 = vld [vmem:[%s238] ss:$16 sm:%s239]
    %vm241 = vcmask 1047558
    %v242 = vsel %vm241, %v240, %v237
    %243 = vrot.lane.b32.xlu0 %v242, 48
    %v244 = vpop.permute.xlu0 %243
    %vm245 = vcmask 523648
    %246 = vst.msk [vmem:[#allocation0] sm:$0xf] %vm245, %v244
    %s247 = scalar_lea.vmem [#allocation0], 4
    %248 = vst.msk [vmem:[%s247] sm:$0xf0] %vm245, %v244
    %s249 = scalar_lea.vmem %s0, 67
    %s250 = smov 3
    %v251 = vld [vmem:[%s249] ss:$16 sm:%s250]
    %s252 = scalar_lea.vmem %s0, 67
    %s253 = smov 12
    %v254 = vld [vmem:[%s252] ss:$16 sm:%s253]
    %vm255 = vcmask 1043458
    %v256 = vsel %vm255, %v254, %v251
    %s257 = scalar_lea.vmem %s0, 11
    %s258 = smov 48
    %v259 = vld [vmem:[%s257] ss:$16 sm:%s258]
    %vm260 = vcmask 1045508
    %v261 = vsel %vm260, %v259, %v256
    %s262 = scalar_lea.vmem %s0, 11
    %s263 = smov 192
    %v264 = vld [vmem:[%s262] ss:$16 sm:%s263]
    %vm265 = vcmask 1047558
    %v266 = vsel %vm265, %v264, %v261
    %267 = vrot.lane.b32.xlu0 %v266, 48
    %v268 = vpop.permute.xlu0 %267
    %vm269 = vcmask 523648
    %s270 = scalar_lea.vmem [#allocation0], 16
    %271 = vst.msk [vmem:[%s270] sm:$0xf] %vm269, %v268
    %s272 = scalar_lea.vmem [#allocation0], 20
    %273 = vst.msk [vmem:[%s272] sm:$0xf0] %vm269, %v268
    %s274 = scalar_lea.vmem %s0, 2
    %s275 = smov 3
    %v276 = vld [vmem:[%s274] ss:$16 sm:%s275]
    %s277 = scalar_lea.vmem %s0, 2
    %s278 = smov 12
    %v279 = vld [vmem:[%s277] ss:$16 sm:%s278]
    %vm280 = vcmask 1043458
    %v281 = vsel %vm280, %v279, %v276
    %s282 = scalar_lea.vmem %s0, 4294967242
    %s283 = smov 48
    %v284 = vld [vmem:[%s282] ss:$16 sm:%s283]
    %vm285 = vcmask 1045508
    %v286 = vsel %vm285, %v284, %v281
    %s287 = scalar_lea.vmem %s0, 4294967242
    %s288 = smov 192
    %v289 = vld [vmem:[%s287] ss:$16 sm:%s288]
    %vm290 = vcmask 1047558
    %v291 = vsel %vm290, %v289, %v286
    %292 = vrot.lane.b32.xlu0 %v291, 32
    %v293 = vpop.permute.xlu0 %292
    %vm294 = vcmask 392448
    %295 = vst.msk [vmem:[#allocation0] sm:$0xf] %vm294, %v293
    %s296 = scalar_lea.vmem [#allocation0], 4
    %297 = vst.msk [vmem:[%s296] sm:$0xf0] %vm294, %v293
    %s298 = scalar_lea.vmem %s0, 66
    %s299 = smov 3
    %v300 = vld [vmem:[%s298] ss:$16 sm:%s299]
    %s301 = scalar_lea.vmem %s0, 66
    %s302 = smov 12
    %v303 = vld [vmem:[%s301] ss:$16 sm:%s302]
    %vm304 = vcmask 1043458
    %v305 = vsel %vm304, %v303, %v300
    %s306 = scalar_lea.vmem %s0, 10
    %s307 = smov 48
    %v308 = vld [vmem:[%s306] ss:$16 sm:%s307]
    %vm309 = vcmask 1045508
    %v310 = vsel %vm309, %v308, %v305
    %s311 = scalar_lea.vmem %s0, 10
    %s312 = smov 192
    %v313 = vld [vmem:[%s311] ss:$16 sm:%s312]
    %vm314 = vcmask 1047558
    %v315 = vsel %vm314, %v313, %v310
    %316 = vrot.lane.b32.xlu0 %v315, 32
    %v317 = vpop.permute.xlu0 %316
    %vm318 = vcmask 392448
    %s319 = scalar_lea.vmem [#allocation0], 16
    %320 = vst.msk [vmem:[%s319] sm:$0xf] %vm318, %v317
    %s321 = scalar_lea.vmem [#allocation0], 20
    %322 = vst.msk [vmem:[%s321] sm:$0xf0] %vm318, %v317
    %s323 = scalar_lea.vmem %s0, 1
    %s324 = smov 3
    %v325 = vld [vmem:[%s323] ss:$16 sm:%s324]
    %s326 = scalar_lea.vmem %s0, 1
    %s327 = smov 12
    %v328 = vld [vmem:[%s326] ss:$16 sm:%s327]
    %vm329 = vcmask 1043458
    %v330 = vsel %vm329, %v328, %v325
    %s331 = scalar_lea.vmem %s0, 4294967241
    %s332 = smov 48
    %v333 = vld [vmem:[%s331] ss:$16 sm:%s332]
    %vm334 = vcmask 1045508
    %v335 = vsel %vm334, %v333, %v330
    %s336 = scalar_lea.vmem %s0, 4294967241
    %s337 = smov 192
    %v338 = vld [vmem:[%s336] ss:$16 sm:%s337]
    %vm339 = vcmask 1047558
    %v340 = vsel %vm339, %v338, %v335
    %341 = vrot.lane.b32.xlu0 %v340, 16
    %v342 = vpop.permute.xlu0 %341
    %vm343 = vcmask 261248
    %344 = vst.msk [vmem:[#allocation0] sm:$0xf] %vm343, %v342
    %s345 = scalar_lea.vmem [#allocation0], 4
    %346 = vst.msk [vmem:[%s345] sm:$0xf0] %vm343, %v342
    %s347 = scalar_lea.vmem %s0, 65
    %s348 = smov 3
    %v349 = vld [vmem:[%s347] ss:$16 sm:%s348]
    %s350 = scalar_lea.vmem %s0, 65
    %s351 = smov 12
    %v352 = vld [vmem:[%s350] ss:$16 sm:%s351]
    %vm353 = vcmask 1043458
    %v354 = vsel %vm353, %v352, %v349
    %s355 = scalar_lea.vmem %s0, 9
    %s356 = smov 48
    %v357 = vld [vmem:[%s355] ss:$16 sm:%s356]
    %vm358 = vcmask 1045508
    %v359 = vsel %vm358, %v357, %v354
    %s360 = scalar_lea.vmem %s0, 9
    %s361 = smov 192
    %v362 = vld [vmem:[%s360] ss:$16 sm:%s361]
    %vm363 = vcmask 1047558
    %v364 = vsel %vm363, %v362, %v359
    %365 = vrot.lane.b32.xlu0 %v364, 16
    %v366 = vpop.permute.xlu0 %365
    %vm367 = vcmask 261248
    %s368 = scalar_lea.vmem [#allocation0], 16
    %369 = vst.msk [vmem:[%s368] sm:$0xf] %vm367, %v366
    %s370 = scalar_lea.vmem [#allocation0], 20
    %371 = vst.msk [vmem:[%s370] sm:$0xf0] %vm367, %v366
    %s373 = sshllo.u32 0, 4
    %v375 = vld [vmem:[#allocation0] sm:%s373]
    %s376 = sshllo.u32 0, 4
    %377 = vst [vmem:[%s1] sm:%s376] %v375
    %s378 = scalar_lea.vmem [#allocation0], 8
    %v379 = vld [vmem:[%s378] sm:%s373]
    %s380 = sshllo.u32 0, 4
    %s381 = scalar_lea.vmem %s1, 4
    %382 = vst [vmem:[%s381] sm:%s380] %v379
    %s383 = scalar_lea.vmem [#allocation0], 16
    %v384 = vld [vmem:[%s383] sm:%s373]
    %s385 = sshllo.u32 0, 4
    %s386 = smul.addr 4, 2
    %s387 = scalar_lea.vmem %s1, %s386
    %388 = vst [vmem:[%s387] sm:%s385] %v384
    %s389 = scalar_lea.vmem [#allocation0], 24
    %v390 = vld [vmem:[%s389] sm:%s373]
    %s391 = sshllo.u32 0, 4
    %s392 = smul.addr 4, 3
    %s393 = scalar_lea.vmem %s1, %s392
    %394 = vst [vmem:[%s393] sm:%s391] %v390

// kernel: multi_head_attention.1
$region0: #{multi_head_attention.1}
  #allocation0 [shape = 'u32[]', space=smem, size = 0x4, offset = 0x4, fixed_abs, tag = 'smem constant byte address 0x4 - core index']
  #allocation1 [shape = 'u32[144,128]{1,0:T(1,128)}', space=vmem, size = 0x12000, scoped, tag = 'internal scratch']
  %s0 = inlined_call_operand.vmem [shape: f32[2,16,128], index: 0, kind: input, shape index: {}]
  %s1 = inlined_call_operand.vmem [shape: f32[2,16,128], index: 1, kind: input, shape index: {}]
  %s2 = inlined_call_operand.vmem [shape: f32[2,16,128], index: 2, kind: input, shape index: {}]
  %s3 = inlined_call_operand.vmem [shape: f32[2,4,256], index: 3, kind: input, shape index: {}]
  %s4 = inlined_call_operand.vmem [shape: bf16[4,128,128], index: 4, kind: input, shape index: {}]
  %s5 = inlined_call_operand.vmem [shape: f32[4,1,128], index: 5, kind: input, shape index: {}]
  %s6 = inlined_call_operand.hbm [shape: f32[2,16,128], index: 6, kind: output, shape index: {0}]
  %s7 = inlined_call_operand.vmem [shape: f32[2,4,256], index: 7, kind: output, shape index: {1}]
  %8 = xla_tuple %s6, %s7
  %s9 = sld [smem:[#allocation0]]
  $region65: #{multi_head_attention.1} parent=0
    _
  %s11 = ssub.s32 1, %s9
  %s12 = scalar_select 0, %s11, %s9
  $region1: #{multi_head_attention.1} parent=0
    #allocation2 [shape = 'u8[16384]{0}', space=vmem, size = 0x4000, scoped, tag = 'output window, operand 0']
    #allocation3 [shape = 's32[2]{0}', space=sflag, size = 0x8, scoped, tag = 'scoped memory for multi_head_attention.1']
    %13 = vsyncpa [#allocation3], 0
    %s14 = scalar_lea.sflag [#allocation3], 1
    %15 = vsyncpa %s14, 0
    loop: start=0, step=1, limit=4
    $region2: #{multi_head_attention.1} parent=1 // loop_pre_header
      _
    $region3: #{multi_head_attention.1} parent=1 // loop_header
      %s17 = sphi 0, %s21
      %p18 = scmp.ge.s32.totalorder %s17, 4
      %s27 = sphi 0, %s29
      %s30 = sphi 0, %s27
      %s31 = sphi 0, %s30
      %s47 = sphi 0, %s31
      %s53 = sphi 0, %s55
      %s56 = sphi 0, %s53
      %s57 = sphi 0, %s56
      %s73 = sphi 0, %s57
      %s79 = sphi 0, %s81
      %s82 = sphi 0, %s79
      %s83 = sphi 0, %s82
      %s99 = sphi 0, %s83
      %s105 = sphi 0, %s107
      %s108 = sphi 0, %s105
      %s109 = sphi 0, %s108
      %s125 = sphi 0, %s109
      %s129 = sphi 0, %s129
      %s131 = sphi 0, %s129
      %s132 = sphi 0, %s131
      %s146 = sphi 0, %s132
      %s150 = sphi 0, %s150
      %s152 = sphi 0, %s150
      %s153 = sphi 0, %s152
      %s167 = sphi 0, %s153
      %s173 = sphi 0, %s175
      %s176 = sphi 0, %s173
      %s177 = sphi 0, %s176
      %s193 = sphi 0, %s177
      %s199 = sphi 0, %s201
      %s202 = sphi 0, %s199
      %s203 = sphi 0, %s202
      %s219 = sphi 0, %s203
    $region4: #{multi_head_attention.1} parent=1 // loop_header_branch
      %20 = sbr.rel (%p18) target = $region8
    $region5: #{multi_head_attention.1} parent=1 // loop_body
      %s22 = ssub.s32 %s17, 1
      %s23 = ssub.s32 %s17, 2
      %s24 = sadd.s32 %s17, 1
      %s25 = ssub.s32 %s17, %s24
      %p26 = scmp.eq.s32.totalorder %s25, 0
      %s28 = sadd.s32 %s27, 1
      %s29 = scalar_select %p26, %s27, %s28
      %p32 = pneg %p26
      %p33 = scmp.eq.s32.totalorder %s17, 1
      %p34 = por %p32, %p33
      %p35 = scmp.ne.s32.totalorder %s27, %s30
      %p36 = scmp.eq.s32.totalorder %s17, 0
      %p37 = por %p35, %p36
      %p38 = scmp.ne.s32.totalorder %s27, %s30
      %p39 = scmp.eq.s32.totalorder %s22, 1
      %p40 = por %p38, %p39
      %p41 = scmp.ne.s32.totalorder %s30, %s31
      %p42 = scmp.eq.s32.totalorder %s22, 0
      %p43 = por %p41, %p42
      %p44 = scmp.ne.s32.totalorder %s30, %s31
      %p45 = scmp.eq.s32.totalorder %s23, 1
      %p46 = por %p44, %p45
      %p48 = scmp.ne.s32.totalorder %s31, %s47
      %p49 = scmp.eq.s32.totalorder %s23, 0
      %p50 = por %p48, %p49
      %s51 = ssub.s32 %s17, %s24
      %p52 = scmp.eq.s32.totalorder %s51, 0
      %s54 = sadd.s32 %s53, 1
      %s55 = scalar_select %p52, %s53, %s54
      %p58 = pneg %p52
      %p59 = scmp.eq.s32.totalorder %s17, 1
      %p60 = por %p58, %p59
      %p61 = scmp.ne.s32.totalorder %s53, %s56
      %p62 = scmp.eq.s32.totalorder %s17, 0
      %p63 = por %p61, %p62
      %p64 = scmp.ne.s32.totalorder %s53, %s56
      %p65 = scmp.eq.s32.totalorder %s22, 1
      %p66 = por %p64, %p65
      %p67 = scmp.ne.s32.totalorder %s56, %s57
      %p68 = scmp.eq.s32.totalorder %s22, 0
      %p69 = por %p67, %p68
      %p70 = scmp.ne.s32.totalorder %s56, %s57
      %p71 = scmp.eq.s32.totalorder %s23, 1
      %p72 = por %p70, %p71
      %p74 = scmp.ne.s32.totalorder %s57, %s73
      %p75 = scmp.eq.s32.totalorder %s23, 0
      %p76 = por %p74, %p75
      %s77 = ssub.s32 %s17, %s24
      %p78 = scmp.eq.s32.totalorder %s77, 0
      %s80 = sadd.s32 %s79, 1
      %s81 = scalar_select %p78, %s79, %s80
      %p84 = pneg %p78
      %p85 = scmp.eq.s32.totalorder %s17, 1
      %p86 = por %p84, %p85
      %p87 = scmp.ne.s32.totalorder %s79, %s82
      %p88 = scmp.eq.s32.totalorder %s17, 0
      %p89 = por %p87, %p88
      %p90 = scmp.ne.s32.totalorder %s79, %s82
      %p91 = scmp.eq.s32.totalorder %s22, 1
      %p92 = por %p90, %p91
      %p93 = scmp.ne.s32.totalorder %s82, %s83
      %p94 = scmp.eq.s32.totalorder %s22, 0
      %p95 = por %p93, %p94
      %p96 = scmp.ne.s32.totalorder %s82, %s83
      %p97 = scmp.eq.s32.totalorder %s23, 1
      %p98 = por %p96, %p97
      %p100 = scmp.ne.s32.totalorder %s83, %s99
      %p101 = scmp.eq.s32.totalorder %s23, 0
      %p102 = por %p100, %p101
      %s103 = ssub.s32 %s17, %s24
      %p104 = scmp.eq.s32.totalorder %s103, 0
      %s106 = sadd.s32 %s105, 1
      %s107 = scalar_select %p104, %s105, %s106
      %p110 = pneg %p104
      %p111 = scmp.eq.s32.totalorder %s17, 1
      %p112 = por %p110, %p111
      %p113 = scmp.ne.s32.totalorder %s105, %s108
      %p114 = scmp.eq.s32.totalorder %s17, 0
      %p115 = por %p113, %p114
      %p116 = scmp.ne.s32.totalorder %s105, %s108
      %p117 = scmp.eq.s32.totalorder %s22, 1
      %p118 = por %p116, %p117
      %p119 = scmp.ne.s32.totalorder %s108, %s109
      %p120 = scmp.eq.s32.totalorder %s22, 0
      %p121 = por %p119, %p120
      %p122 = scmp.ne.s32.totalorder %s108, %s109
      %p123 = scmp.eq.s32.totalorder %s23, 1
      %p124 = por %p122, %p123
      %p126 = scmp.ne.s32.totalorder %s109, %s125
      %p127 = scmp.eq.s32.totalorder %s23, 0
      %p128 = por %p126, %p127
      %s130 = sadd.s32 %s129, 1
      %p133 = scmp.eq.s32.totalorder %s17, 1
      %p134 = scmp.ne.s32.totalorder %s129, %s131
      %p135 = scmp.eq.s32.totalorder %s17, 0
      %p136 = por %p134, %p135
      %p137 = scmp.ne.s32.totalorder %s129, %s131
      %p138 = scmp.eq.s32.totalorder %s22, 1
      %p139 = por %p137, %p138
      %p140 = scmp.ne.s32.totalorder %s131, %s132
      %p141 = scmp.eq.s32.totalorder %s22, 0
      %p142 = por %p140, %p141
      %p143 = scmp.ne.s32.totalorder %s131, %s132
      %p144 = scmp.eq.s32.totalorder %s23, 1
      %p145 = por %p143, %p144
      %p147 = scmp.ne.s32.totalorder %s132, %s146
      %p148 = scmp.eq.s32.totalorder %s23, 0
      %p149 = por %p147, %p148
      %s151 = sadd.s32 %s150, 1
      %p154 = scmp.eq.s32.totalorder %s17, 1
      %p155 = scmp.ne.s32.totalorder %s150, %s152
      %p156 = scmp.eq.s32.totalorder %s17, 0
      %p157 = por %p155, %p156
      %p158 = scmp.ne.s32.totalorder %s150, %s152
      %p159 = scmp.eq.s32.totalorder %s22, 1
      %p160 = por %p158, %p159
      %p161 = scmp.ne.s32.totalorder %s152, %s153
      %p162 = scmp.eq.s32.totalorder %s22, 0
      %p163 = por %p161, %p162
      %p164 = scmp.ne.s32.totalorder %s152, %s153
      %p165 = scmp.eq.s32.totalorder %s23, 1
      %p166 = por %p164, %p165
      %p168 = scmp.ne.s32.totalorder %s153, %s167
      %p169 = scmp.eq.s32.totalorder %s23, 0
      %p170 = por %p168, %p169
      %s171 = ssub.s32 %s17, %s24
      %p172 = scmp.eq.s32.totalorder %s171, 0
      %s174 = sadd.s32 %s173, 1
      %s175 = scalar_select %p172, %s173, %s174
      %p178 = pneg %p172
      %p179 = scmp.eq.s32.totalorder %s17, 1
      %p180 = por %p178, %p179
      %p181 = scmp.ne.s32.totalorder %s173, %s176
      %p182 = scmp.eq.s32.totalorder %s17, 0
      %p183 = por %p181, %p182
      %p184 = scmp.ne.s32.totalorder %s173, %s176
      %p185 = scmp.eq.s32.totalorder %s22, 1
      %p186 = por %p184, %p185
      %p187 = scmp.ne.s32.totalorder %s176, %s177
      %p188 = scmp.eq.s32.totalorder %s22, 0
      %p189 = por %p187, %p188
      %p190 = scmp.ne.s32.totalorder %s176, %s177
      %p191 = scmp.eq.s32.totalorder %s23, 1
      %p192 = por %p190, %p191
      %p194 = scmp.ne.s32.totalorder %s177, %s193
      %p195 = scmp.eq.s32.totalorder %s23, 0
      %p196 = por %p194, %p195
      %s197 = ssub.s32 %s17, %s24
      %p198 = scmp.eq.s32.totalorder %s197, 0
      %s200 = sadd.s32 %s199, 1
      %s201 = scalar_select %p198, %s199, %s200
      %p204 = pneg %p198
      %p205 = scmp.eq.s32.totalorder %s17, 1
      %p206 = por %p204, %p205
      %p207 = scmp.ne.s32.totalorder %s199, %s202
      %p208 = scmp.eq.s32.totalorder %s17, 0
      %p209 = por %p207, %p208
      %p210 = scmp.ne.s32.totalorder %s199, %s202
      %p211 = scmp.eq.s32.totalorder %s22, 1
      %p212 = por %p210, %p211
      %p213 = scmp.ne.s32.totalorder %s202, %s203
      %p214 = scmp.eq.s32.totalorder %s22, 0
      %p215 = por %p213, %p214
      %p216 = scmp.ne.s32.totalorder %s202, %s203
      %p217 = scmp.eq.s32.totalorder %s23, 1
      %p218 = por %p216, %p217
      %p220 = scmp.ne.s32.totalorder %s203, %s219
      %p221 = scmp.eq.s32.totalorder %s23, 0
      %p222 = por %p220, %p221
      %p223 = scmp.le.s32.totalorder 1, %s17
      %p224 = scmp.lt.s32.totalorder %s17, 3
      %p225 = pnand %p223, %p224
      %p226 = pneg %p225
      // Predicated region
      $region9: #{multi_head_attention.1} parent=5 // pred_check
        _
      $region10: #{multi_head_attention.1} parent=5 // pred_check_branch
        %228 = sbr.rel (%p225) target = $region12
      $region11: #{multi_head_attention.1} parent=5 // pred_region
        %s229 = ssub.s32 %s17, 1
        // Predicated region
        $region13: #{multi_head_attention.1} parent=11 // pred_check
          %p230 = pneg %p142
        $region14: #{multi_head_attention.1} parent=11 // pred_check_branch
          %232 = sbr.rel (%p230) target = $region16
        $region15: #{multi_head_attention.1} parent=11 // pred_region
          _
        $region16: #{multi_head_attention.1} parent=11 // pred_fallthru
          _
        // Predicated region
        $region17: #{multi_head_attention.1} parent=11 // pred_check
          %p233 = pneg %p163
        $region18: #{multi_head_attention.1} parent=11 // pred_check_branch
          %235 = sbr.rel (%p233) target = $region20
        $region19: #{multi_head_attention.1} parent=11 // pred_region
          _
        $region20: #{multi_head_attention.1} parent=11 // pred_fallthru
          _
      $region12: #{multi_head_attention.1} parent=5 // pred_fallthru
        _
      %p236 = scmp.lt.s32.totalorder %s17, 2
      // Predicated region
      $region21: #{multi_head_attention.1} parent=5 // pred_check
        %p237 = pneg %p236
      $region22: #{multi_head_attention.1} parent=5 // pred_check_branch
        %239 = sbr.rel (%p237) target = $region24
      $region23: #{multi_head_attention.1} parent=5 // pred_region
        // Predicated region
        $region25: #{multi_head_attention.1} parent=23 // pred_check
          %p240 = pneg %p37
        $region26: #{multi_head_attention.1} parent=23 // pred_check_branch
          %242 = sbr.rel (%p240) target = $region28
        $region27: #{multi_head_attention.1} parent=23 // pred_region
          %p243 = scmp.lt.s32.totalorder %s17, 1
          %s244 = scalar_select %p243, %s17, 1
          %s245 = smul.addr %s244, 2
          %s246 = smul.addr %s245, 8
          %s247 = scalar_lea.vmem %s0, %s246
        $region28: #{multi_head_attention.1} parent=23 // pred_fallthru
          _
        // Predicated region
        $region29: #{multi_head_attention.1} parent=23 // pred_check
          %p248 = pneg %p63
        $region30: #{multi_head_attention.1} parent=23 // pred_check_branch
          %250 = sbr.rel (%p248) target = $region32
        $region31: #{multi_head_attention.1} parent=23 // pred_region
          %p251 = scmp.lt.s32.totalorder %s17, 1
          %s252 = scalar_select %p251, %s17, 1
          %s253 = smul.addr %s252, 2
          %s254 = smul.addr %s253, 8
          %s255 = scalar_lea.vmem %s1, %s254
        $region32: #{multi_head_attention.1} parent=23 // pred_fallthru
          _
        // Predicated region
        $region33: #{multi_head_attention.1} parent=23 // pred_check
          %p256 = pneg %p89
        $region34: #{multi_head_attention.1} parent=23 // pred_check_branch
          %258 = sbr.rel (%p256) target = $region36
        $region35: #{multi_head_attention.1} parent=23 // pred_region
          %p259 = scmp.lt.s32.totalorder %s17, 1
          %s260 = scalar_select %p259, %s17, 1
          %s261 = smul.addr %s260, 2
          %s262 = smul.addr %s261, 8
          %s263 = scalar_lea.vmem %s2, %s262
        $region36: #{multi_head_attention.1} parent=23 // pred_fallthru
          _
        // Predicated region
        $region37: #{multi_head_attention.1} parent=23 // pred_check
          %p264 = pneg %p115
        $region38: #{multi_head_attention.1} parent=23 // pred_check_branch
          %266 = sbr.rel (%p264) target = $region40
        $region39: #{multi_head_attention.1} parent=23 // pred_region
          %p267 = scmp.lt.s32.totalorder %s17, 1
          %s268 = scalar_select %p267, %s17, 1
          %s269 = smul.addr %s268, 2
          %s270 = smul.addr %s269, 4
          %s271 = scalar_lea.vmem %s3, %s270
        $region40: #{multi_head_attention.1} parent=23 // pred_fallthru
          _
      $region24: #{multi_head_attention.1} parent=5 // pred_fallthru
        _
      %p272 = scmp.le.s32.totalorder 1, %s17
      %p273 = scmp.lt.s32.totalorder %s17, 3
      %p274 = pnand %p272, %p273
      %p275 = pneg %p274
      // Predicated region
      $region41: #{multi_head_attention.1} parent=5 // pred_check
        _
      $region42: #{multi_head_attention.1} parent=5 // pred_check_branch
        %277 = sbr.rel (%p274) target = $region44
      $region43: #{multi_head_attention.1} parent=5 // pred_region
        %s278 = ssub.s32 %s17, 1
        %p279 = scmp.lt.s32.totalorder %s22, 1
        %s280 = scalar_select %p279, %s22, 1
        %s281 = smul.addr %s280, 2
        %s282 = smul.addr %s281, 8
        %s283 = scalar_lea.vmem %s0, %s282
        %p284 = pneg %p43
        %p285 = pneg %p40
        %p286 = scmp.lt.s32.totalorder %s22, 1
        %s287 = scalar_select %p286, %s22, 1
        %s288 = smul.addr %s287, 2
        %s289 = smul.addr %s288, 8
        %s290 = scalar_lea.vmem %s1, %s289
        %p291 = pneg %p69
        %p292 = pneg %p66
        %p293 = scmp.lt.s32.totalorder %s22, 1
        %s294 = scalar_select %p293, %s22, 1
        %s295 = smul.addr %s294, 2
        %s296 = smul.addr %s295, 8
        %s297 = scalar_lea.vmem %s2, %s296
        %p298 = pneg %p95
        %p299 = pneg %p92
        %p300 = scmp.lt.s32.totalorder %s22, 1
        %s301 = scalar_select %p300, %s22, 1
        %s302 = smul.addr %s301, 2
        %s303 = smul.addr %s302, 4
        %s304 = scalar_lea.vmem %s3, %s303
        %p305 = pneg %p121
        %p306 = pneg %p118
        %p307 = pneg %p142
        %p308 = pneg %p139
        %p309 = pneg %p163
        %p310 = pneg %p160
        %p311 = pneg %p189
        %p312 = pneg %p186
        %s313 = sand.u32 %s176, 1
        %s314 = scalar_lea.sflag [#allocation3], %s313
        %s315 = sand.u32 %s176, 1
        %s316 = smul.addr %s315, 16
        %s317 = scalar_lea.vmem [#allocation2], %s316
        %p318 = pneg %p215
        %p319 = pneg %p212
        %p320 = scmp.lt.s32.totalorder %s22, 1
        %s321 = scalar_select %p320, %s22, 1
        %s322 = smul.addr %s321, 2
        %s323 = smul.addr %s322, 4
        %s324 = scalar_lea.vmem %s7, %s323
        %p325 = scmp.lt.s32.totalorder %s22, 1
        %s326 = scalar_select %p325, %s22, 1
        %s327 = smul.addr %s326, 2
        %s328 = smul.addr %s327, 8
        %s329 = scalar_lea.vmem %s0, %s328
        %p330 = scmp.lt.s32.totalorder %s22, 1
        %s331 = scalar_select %p330, %s22, 1
        %s332 = smul.addr %s331, 2
        %s333 = smul.addr %s332, 8
        %s334 = scalar_lea.vmem %s1, %s333
        %p335 = scmp.lt.s32.totalorder %s22, 1
        %s336 = scalar_select %p335, %s22, 1
        %s337 = smul.addr %s336, 2
        %s338 = smul.addr %s337, 8
        %s339 = scalar_lea.vmem %s2, %s338
        %p340 = scmp.lt.s32.totalorder %s22, 1
        %s341 = scalar_select %p340, %s22, 1
        %s342 = smul.addr %s341, 2
        %s343 = smul.addr %s342, 4
        %s344 = scalar_lea.vmem %s3, %s343
        %p345 = scmp.lt.s32.totalorder %s22, 1
        %s346 = scalar_select %p345, %s22, 1
        %s347 = smul.addr %s346, 2
        %s348 = smul.addr %s347, 4
        %s349 = scalar_lea.vmem %s7, %s348
        %v351 = vld [vmem:[%s329] sm:$0xff]
        %v352 = vld [vmem:[%s329 + $0x8] sm:$0xff]
        %v353 = vpack.c.bf16 %v352, %v351
        %v354 = vld [vmem:[%s4] sm:$0xf]
        %v355 = vld [vmem:[%s4 + $0x4] sm:$0xf]
        %v356 = vld [vmem:[%s4 + $0x8] sm:$0xf]
        %v357 = vld [vmem:[%s4 + $0xc] sm:$0xf]
        %v358 = vld [vmem:[%s4 + $0x10] sm:$0xf]
        %v359 = vld [vmem:[%s4 + $0x14] sm:$0xf]
        %v360 = vld [vmem:[%s4 + $0x18] sm:$0xf]
        %v361 = vld [vmem:[%s4 + $0x1c] sm:$0xf]
        %v362 = vld [vmem:[%s4 + $0x20] sm:$0xf]
        %v363 = vld [vmem:[%s4 + $0x24] sm:$0xf]
        %v364 = vld [vmem:[%s4 + $0x28] sm:$0xf]
        %v365 = vld [vmem:[%s4 + $0x2c] sm:$0xf]
        %v366 = vld [vmem:[%s4 + $0x30] sm:$0xf]
        %v367 = vld [vmem:[%s4 + $0x34] sm:$0xf]
        %v368 = vld [vmem:[%s4 + $0x38] sm:$0xf]
        %v369 = vld [vmem:[%s4 + $0x3c] sm:$0xf]
        %v370 = vld [vmem:[%s5] sm:$0x1]
        %v372 = vlaneseq
        %v373 = vshrl.u32 %v372, 7
        %v374 = vsub.s32 0, %v373
        %v375 = vrot.slane %v370, %v374
        %v393 = vunpack.c.l.b16 %v354
        %v394 = vunpack.c.l.b16 %v355
        %v395 = vunpack.c.l.b16 %v356
        %v396 = vunpack.c.l.b16 %v357
        %v397 = vunpack.c.l.b16 %v358
        %v398 = vunpack.c.l.b16 %v359
        %v399 = vunpack.c.l.b16 %v360
        %v400 = vunpack.c.l.b16 %v361
        %v401 = vunpack.c.l.b16 %v362
        %v402 = vunpack.c.l.b16 %v363
        %v403 = vunpack.c.l.b16 %v364
        %v404 = vunpack.c.l.b16 %v365
        %v405 = vunpack.c.l.b16 %v366
        %v406 = vunpack.c.l.b16 %v367
        %v407 = vunpack.c.l.b16 %v368
        %v408 = vunpack.c.l.b16 %v369
        %v409 = vpack.c.b16 %v394, %v393
        %v410 = vpack.c.b16 %v396, %v395
        %v411 = vpack.c.b16 %v398, %v397
        %v412 = vpack.c.b16 %v400, %v399
        %v413 = vpack.c.b16 %v402, %v401
        %v414 = vpack.c.b16 %v404, %v403
        %v415 = vpack.c.b16 %v406, %v405
        %v416 = vpack.c.b16 %v408, %v407
        %425 = vmatprep.subr.bf16.mxu0 0
        %426 = vmatpush1.bf16.msra.mxu0 %v409
        %427 = vmatprep.subr.bf16.mxu0 0
        %428 = vmatpush1.bf16.msra.mxu0 %v410
        %429 = vmatprep.subr.bf16.mxu0 0
        %430 = vmatpush1.bf16.msra.mxu0 %v411
        %431 = vmatprep.subr.bf16.mxu0 0
        %432 = vmatpush1.bf16.msra.mxu0 %v412
        %433 = vmatprep.subr.bf16.mxu0 0
        %434 = vmatpush1.bf16.msra.mxu0 %v413
        %435 = vmatprep.subr.bf16.mxu0 0
        %436 = vmatpush1.bf16.msra.mxu0 %v414
        %437 = vmatprep.subr.bf16.mxu0 0
        %438 = vmatpush1.bf16.msra.mxu0 %v415
        %439 = vmatprep.subr.bf16.mxu0 0
        %440 = vmatpush1.bf16.msra.mxu0 %v416
        %441 = vmatprep.subr.bf16.mxu0 0
        %442 = vmatpush1.bf16.msra.mxu0 0
        %443 = vmatprep.subr.bf16.mxu0 0
        %444 = vmatpush1.bf16.msra.mxu0 0
        %445 = vmatprep.subr.bf16.mxu0 0
        %446 = vmatpush1.bf16.msra.mxu0 0
        %447 = vmatprep.subr.bf16.mxu0 0
        %448 = vmatpush1.bf16.msra.mxu0 0
        %449 = vmatprep.subr.bf16.mxu0 0
        %450 = vmatpush1.bf16.msra.mxu0 0
        %451 = vmatprep.subr.bf16.mxu0 0
        %452 = vmatpush1.bf16.msra.mxu0 0
        %453 = vmatprep.subr.bf16.mxu0 0
        %454 = vmatpush1.bf16.msra.mxu0 0
        %455 = vmatprep.subr.bf16.mxu0 0
        %456 = vmatpush1.bf16.msra.mxu0 0
        %457 = vmatprep.mubr.bf16.mxu0 0
        %458 = vmatmul.mubr.bf16.gmra.mrb[0].mxu0 %v353
        %v459 = vpop.f32.mrb[0].mxu0
        %v460 = vadd.f32 %v375, %v459
        %v461 = vpop.f32.mrb[0].mxu0
        %v462 = vpop.f32.mrb[0].mxu0
        %v463 = vadd.f32 %v375, %v462
        %v464 = vpop.f32.mrb[0].mxu0
        %465 = vdwg.mxu0
        %v466 = vmax.f32 %v460, 0.0
        %v467 = vmax.f32 %v463, 0.0
        %v468 = vld [vmem:[%s334] sm:$0xff]
        %v469 = vld [vmem:[%s334 + $0x8] sm:$0xff]
        %v470 = vpack.c.bf16 %v469, %v468
        %s471 = scalar_lea.vmem %s4, 64
        %v472 = vld [vmem:[%s471] sm:$0xf]
        %v473 = vld [vmem:[%s471 + $0x4] sm:$0xf]
        %v474 = vld [vmem:[%s471 + $0x8] sm:$0xf]
        %v475 = vld [vmem:[%s471 + $0xc] sm:$0xf]
        %v476 = vld [vmem:[%s471 + $0x10] sm:$0xf]
        %v477 = vld [vmem:[%s471 + $0x14] sm:$0xf]
        %v478 = vld [vmem:[%s471 + $0x18] sm:$0xf]
        %v479 = vld [vmem:[%s471 + $0x1c] sm:$0xf]
        %v480 = vld [vmem:[%s471 + $0x20] sm:$0xf]
        %v481 = vld [vmem:[%s471 + $0x24] sm:$0xf]
        %v482 = vld [vmem:[%s471 + $0x28] sm:$0xf]
        %v483 = vld [vmem:[%s471 + $0x2c] sm:$0xf]
        %v484 = vld [vmem:[%s471 + $0x30] sm:$0xf]
        %v485 = vld [vmem:[%s471 + $0x34] sm:$0xf]
        %v486 = vld [vmem:[%s471 + $0x38] sm:$0xf]
        %v487 = vld [vmem:[%s471 + $0x3c] sm:$0xf]
        %s488 = scalar_lea.vmem %s5, 1
        %v489 = vld [vmem:[%s488] sm:$0x1]
        %v491 = vlaneseq
        %v492 = vshrl.u32 %v491, 7
        %v493 = vsub.s32 0, %v492
        %v494 = vrot.slane %v489, %v493
        %v512 = vunpack.c.l.b16 %v472
        %v513 = vunpack.c.l.b16 %v473
        %v514 = vunpack.c.l.b16 %v474
        %v515 = vunpack.c.l.b16 %v475
        %v516 = vunpack.c.l.b16 %v476
        %v517 = vunpack.c.l.b16 %v477
        %v518 = vunpack.c.l.b16 %v478
        %v519 = vunpack.c.l.b16 %v479
        %v520 = vunpack.c.l.b16 %v480
        %v521 = vunpack.c.l.b16 %v481
        %v522 = vunpack.c.l.b16 %v482
        %v523 = vunpack.c.l.b16 %v483
        %v524 = vunpack.c.l.b16 %v484
        %v525 = vunpack.c.l.b16 %v485
        %v526 = vunpack.c.l.b16 %v486
        %v527 = vunpack.c.l.b16 %v487
        %v528 = vpack.c.b16 %v513, %v512
        %v529 = vpack.c.b16 %v515, %v514
        %v530 = vpack.c.b16 %v517, %v516
        %v531 = vpack.c.b16 %v519, %v518
        %v532 = vpack.c.b16 %v521, %v520
        %v533 = vpack.c.b16 %v523, %v522
        %v534 = vpack.c.b16 %v525, %v524
        %v535 = vpack.c.b16 %v527, %v526
        %544 = vmatprep.subr.bf16.mxu0 0
        %545 = vmatpush1.bf16.msra.mxu0 %v528
        %546 = vmatprep.subr.bf16.mxu0 0
        %547 = vmatpush1.bf16.msra.mxu0 %v529
        %548 = vmatprep.subr.bf16.mxu0 0
        %549 = vmatpush1.bf16.msra.mxu0 %v530
        %550 = vmatprep.subr.bf16.mxu0 0
        %551 = vmatpush1.bf16.msra.mxu0 %v531
        %552 = vmatprep.subr.bf16.mxu0 0
        %553 = vmatpush1.bf16.msra.mxu0 %v532
        %554 = vmatprep.subr.bf16.mxu0 0
        %555 = vmatpush1.bf16.msra.mxu0 %v533
        %556 = vmatprep.subr.bf16.mxu0 0
        %557 = vmatpush1.bf16.msra.mxu0 %v534
        %558 = vmatprep.subr.bf16.mxu0 0
        %559 = vmatpush1.bf16.msra.mxu0 %v535
        %560 = vmatprep.subr.bf16.mxu0 0
        %561 = vmatpush1.bf16.msra.mxu0 0
        %562 = vmatprep.subr.bf16.mxu0 0
        %563 = vmatpush1.bf16.msra.mxu0 0
        %564 = vmatprep.subr.bf16.mxu0 0
        %565 = vmatpush1.bf16.msra.mxu0 0
        %566 = vmatprep.subr.bf16.mxu0 0
        %567 = vmatpush1.bf16.msra.mxu0 0
        %568 = vmatprep.subr.bf16.mxu0 0
        %569 = vmatpush1.bf16.msra.mxu0 0
        %570 = vmatprep.subr.bf16.mxu0 0
        %571 = vmatpush1.bf16.msra.mxu0 0
        %572 = vmatprep.subr.bf16.mxu0 0
        %573 = vmatpush1.bf16.msra.mxu0 0
        %574 = vmatprep.subr.bf16.mxu0 0
        %575 = vmatpush1.bf16.msra.mxu0 0
        %576 = vmatprep.mubr.bf16.mxu0 0
        %577 = vmatmul.mubr.bf16.gmra.mrb[0].mxu0 %v470
        %v578 = vpop.f32.mrb[0].mxu0
        %v579 = vadd.f32 %v494, %v578
        %v580 = vpop.f32.mrb[0].mxu0
        %v581 = vpop.f32.mrb[0].mxu0
        %v582 = vadd.f32 %v494, %v581
        %v583 = vpop.f32.mrb[0].mxu0
        %584 = vdwg.mxu0
        %v585 = vmax.f32 %v579, 0.0
        %v586 = vmax.f32 %v582, 0.0
        %v587 = vld [vmem:[%s339] sm:$0xff]
        %v588 = vld [vmem:[%s339 + $0x8] sm:$0xff]
        %v589 = vpack.c.bf16 %v588, %v587
        %s590 = scalar_lea.vmem %s4, 128
        %v591 = vld [vmem:[%s590] sm:$0xf]
        %v592 = vld [vmem:[%s590 + $0x4] sm:$0xf]
        %v593 = vld [vmem:[%s590 + $0x8] sm:$0xf]
        %v594 = vld [vmem:[%s590 + $0xc] sm:$0xf]
        %v595 = vld [vmem:[%s590 + $0x10] sm:$0xf]
        %v596 = vld [vmem:[%s590 + $0x14] sm:$0xf]
        %v597 = vld [vmem:[%s590 + $0x18] sm:$0xf]
        %v598 = vld [vmem:[%s590 + $0x1c] sm:$0xf]
        %v599 = vld [vmem:[%s590 + $0x20] sm:$0xf]
        %v600 = vld [vmem:[%s590 + $0x24] sm:$0xf]
        %v601 = vld [vmem:[%s590 + $0x28] sm:$0xf]
        %v602 = vld [vmem:[%s590 + $0x2c] sm:$0xf]
        %v603 = vld [vmem:[%s590 + $0x30] sm:$0xf]
        %v604 = vld [vmem:[%s590 + $0x34] sm:$0xf]
        %v605 = vld [vmem:[%s590 + $0x38] sm:$0xf]
        %v606 = vld [vmem:[%s590 + $0x3c] sm:$0xf]
        %s607 = scalar_lea.vmem %s5, 2
        %v608 = vld [vmem:[%s607] sm:$0x1]
        %v610 = vlaneseq
        %v611 = vshrl.u32 %v610, 7
        %v612 = vsub.s32 0, %v611
        %v613 = vrot.slane %v608, %v612
        %v631 = vunpack.c.l.b16 %v591
        %v632 = vunpack.c.l.b16 %v592
        %v633 = vunpack.c.l.b16 %v593
        %v634 = vunpack.c.l.b16 %v594
        %v635 = vunpack.c.l.b16 %v595
        %v636 = vunpack.c.l.b16 %v596
        %v637 = vunpack.c.l.b16 %v597
        %v638 = vunpack.c.l.b16 %v598
        %v639 = vunpack.c.l.b16 %v599
        %v640 = vunpack.c.l.b16 %v600
        %v641 = vunpack.c.l.b16 %v601
        %v642 = vunpack.c.l.b16 %v602
        %v643 = vunpack.c.l.b16 %v603
        %v644 = vunpack.c.l.b16 %v604
        %v645 = vunpack.c.l.b16 %v605
        %v646 = vunpack.c.l.b16 %v606
        %v647 = vpack.c.b16 %v632, %v631
        %v648 = vpack.c.b16 %v634, %v633
        %v649 = vpack.c.b16 %v636, %v635
        %v650 = vpack.c.b16 %v638, %v637
        %v651 = vpack.c.b16 %v640, %v639
        %v652 = vpack.c.b16 %v642, %v641
        %v653 = vpack.c.b16 %v644, %v643
        %v654 = vpack.c.b16 %v646, %v645
        %663 = vmatprep.subr.bf16.mxu0 0
        %664 = vmatpush1.bf16.msra.mxu0 %v647
        %665 = vmatprep.subr.bf16.mxu0 0
        %666 = vmatpush1.bf16.msra.mxu0 %v648
        %667 = vmatprep.subr.bf16.mxu0 0
        %668 = vmatpush1.bf16.msra.mxu0 %v649
        %669 = vmatprep.subr.bf16.mxu0 0
        %670 = vmatpush1.bf16.msra.mxu0 %v650
        %671 = vmatprep.subr.bf16.mxu0 0
        %672 = vmatpush1.bf16.msra.mxu0 %v651
        %673 = vmatprep.subr.bf16.mxu0 0
        %674 = vmatpush1.bf16.msra.mxu0 %v652
        %675 = vmatprep.subr.bf16.mxu0 0
        %676 = vmatpush1.bf16.msra.mxu0 %v653
        %677 = vmatprep.subr.bf16.mxu0 0
        %678 = vmatpush1.bf16.msra.mxu0 %v654
        %679 = vmatprep.subr.bf16.mxu0 0
        %680 = vmatpush1.bf16.msra.mxu0 0
        %681 = vmatprep.subr.bf16.mxu0 0
        %682 = vmatpush1.bf16.msra.mxu0 0
        %683 = vmatprep.subr.bf16.mxu0 0
        %684 = vmatpush1.bf16.msra.mxu0 0
        %685 = vmatprep.subr.bf16.mxu0 0
        %686 = vmatpush1.bf16.msra.mxu0 0
        %687 = vmatprep.subr.bf16.mxu0 0
        %688 = vmatpush1.bf16.msra.mxu0 0
        %689 = vmatprep.subr.bf16.mxu0 0
        %690 = vmatpush1.bf16.msra.mxu0 0
        %691 = vmatprep.subr.bf16.mxu0 0
        %692 = vmatpush1.bf16.msra.mxu0 0
        %693 = vmatprep.subr.bf16.mxu0 0
        %694 = vmatpush1.bf16.msra.mxu0 0
        %695 = vmatprep.mubr.bf16.mxu0 0
        %696 = vmatmul.mubr.bf16.gmra.mrb[0].mxu0 %v589
        %v697 = vpop.f32.mrb[0].mxu0
        %v698 = vadd.f32 %v613, %v697
        %v699 = vpop.f32.mrb[0].mxu0
        %v700 = vpop.f32.mrb[0].mxu0
        %v701 = vadd.f32 %v613, %v700
        %v702 = vpop.f32.mrb[0].mxu0
        %703 = vdwg.mxu0
        %v704 = vmax.f32 %v698, 0.0
        %v705 = vmax.f32 %v701, 0.0
        %708 = vrot.lane.b32.xlu0 %v466, 96
        %v709 = vpop.permute.xlu0 %708
        %710 = vrot.lane.b32.xlu0 %v467, 96
        %v711 = vpop.permute.xlu0 %710
        %714 = vrot.lane.b32.xlu0 %v466, 64
        %v715 = vpop.permute.xlu0 %714
        %716 = vrot.lane.b32.xlu0 %v467, 64
        %v717 = vpop.permute.xlu0 %716
        %720 = vrot.lane.b32.xlu0 %v466, 32
        %v721 = vpop.permute.xlu0 %720
        %722 = vrot.lane.b32.xlu0 %v467, 32
        %v723 = vpop.permute.xlu0 %722
        %v726 = vcombine.low %v466, %v715
        %v727 = vcombine.high %v466, %v715
        %v729 = vunpack.c.l.s4 1983009808
        %v730 = vunpack.c.0.s8 %v729
        %v731 = vlaneseq
        %v732 = vshrl.u32 %v731, 7
        %v733 = vsub.s32 %v730, %v732
        %v734 = vrot.slane %v726, %v733
        %v736 = vunpack.c.l.s4 1983009808
        %v737 = vunpack.c.0.s8 %v736
        %v738 = vlaneseq
        %v739 = vshrl.u32 %v738, 7
        %v740 = vsub.s32 %v737, %v739
        %v741 = vrot.slane %v727, %v740
        %v742 = vcombine.low %v709, %v721
        %v743 = vcombine.high %v709, %v721
        %v745 = vunpack.c.l.s4 1983009808
        %v746 = vunpack.c.0.s8 %v745
        %v747 = vlaneseq
        %v748 = vshrl.u32 %v747, 7
        %v749 = vsub.s32 %v746, %v748
        %v750 = vrot.slane %v742, %v749
        %v752 = vunpack.c.l.s4 1983009808
        %v753 = vunpack.c.0.s8 %v752
        %v754 = vlaneseq
        %v755 = vshrl.u32 %v754, 7
        %v756 = vsub.s32 %v753, %v755
        %v757 = vrot.slane %v743, %v756
        %v758 = vcombine.low %v734, %v750
        %v759 = vcombine.high %v734, %v750
        %v761 = vunpack.c.l.s4 1934713408
        %v762 = vunpack.c.0.s8 %v761
        %v763 = vlaneseq
        %v764 = vshrl.u32 %v763, 7
        %v765 = vsub.s32 %v762, %v764
        %v766 = vrot.slane %v758, %v765
        %v768 = vunpack.c.l.s4 1934713408
        %v769 = vunpack.c.0.s8 %v768
        %v770 = vlaneseq
        %v771 = vshrl.u32 %v770, 7
        %v772 = vsub.s32 %v769, %v771
        %v773 = vrot.slane %v759, %v772
        %v774 = vcombine.low %v741, %v757
        %v775 = vcombine.high %v741, %v757
        %v777 = vunpack.c.l.s4 1934713408
        %v778 = vunpack.c.0.s8 %v777
        %v779 = vlaneseq
        %v780 = vshrl.u32 %v779, 7
        %v781 = vsub.s32 %v778, %v780
        %v782 = vrot.slane %v774, %v781
        %v784 = vunpack.c.l.s4 1934713408
        %v785 = vunpack.c.0.s8 %v784
        %v786 = vlaneseq
        %v787 = vshrl.u32 %v786, 7
        %v788 = vsub.s32 %v785, %v787
        %v789 = vrot.slane %v775, %v788
        %v790 = vcombine.high %v766, 0.0
        %v791 = vcombine.high %v773, 0.0
        %v792 = vcombine.high %v782, 0.0
        %v793 = vcombine.high %v789, 0.0
        %v794 = vcombine.low %v467, %v717
        %v795 = vcombine.high %v467, %v717
        %v797 = vunpack.c.l.s4 1983009808
        %v798 = vunpack.c.0.s8 %v797
        %v799 = vlaneseq
        %v800 = vshrl.u32 %v799, 7
        %v801 = vsub.s32 %v798, %v800
        %v802 = vrot.slane %v794, %v801
        %v804 = vunpack.c.l.s4 1983009808
        %v805 = vunpack.c.0.s8 %v804
        %v806 = vlaneseq
        %v807 = vshrl.u32 %v806, 7
        %v808 = vsub.s32 %v805, %v807
        %v809 = vrot.slane %v795, %v808
        %v810 = vcombine.low %v711, %v723
        %v811 = vcombine.high %v711, %v723
        %v813 = vunpack.c.l.s4 1983009808
        %v814 = vunpack.c.0.s8 %v813
        %v815 = vlaneseq
        %v816 = vshrl.u32 %v815, 7
        %v817 = vsub.s32 %v814, %v816
        %v818 = vrot.slane %v810, %v817
        %v820 = vunpack.c.l.s4 1983009808
        %v821 = vunpack.c.0.s8 %v820
        %v822 = vlaneseq
        %v823 = vshrl.u32 %v822, 7
        %v824 = vsub.s32 %v821, %v823
        %v825 = vrot.slane %v811, %v824
        %v826 = vcombine.low %v802, %v818
        %v827 = vcombine.high %v802, %v818
        %v829 = vunpack.c.l.s4 1934713408
        %v830 = vunpack.c.0.s8 %v829
        %v831 = vlaneseq
        %v832 = vshrl.u32 %v831, 7
        %v833 = vsub.s32 %v830, %v832
        %v834 = vrot.slane %v826, %v833
        %v836 = vunpack.c.l.s4 1934713408
        %v837 = vunpack.c.0.s8 %v836
        %v838 = vlaneseq
        %v839 = vshrl.u32 %v838, 7
        %v840 = vsub.s32 %v837, %v839
        %v841 = vrot.slane %v827, %v840
        %v842 = vcombine.low %v809, %v825
        %v843 = vcombine.high %v809, %v825
        %v845 = vunpack.c.l.s4 1934713408
        %v846 = vunpack.c.0.s8 %v845
        %v847 = vlaneseq
        %v848 = vshrl.u32 %v847, 7
        %v849 = vsub.s32 %v846, %v848
        %v850 = vrot.slane %v842, %v849
        %v852 = vunpack.c.l.s4 1934713408
        %v853 = vunpack.c.0.s8 %v852
        %v854 = vlaneseq
        %v855 = vshrl.u32 %v854, 7
        %v856 = vsub.s32 %v853, %v855
        %v857 = vrot.slane %v843, %v856
        %v858 = vcombine.high %v834, 0.0
        %v859 = vcombine.high %v841, 0.0
        %v860 = vcombine.high %v850, 0.0
        %v861 = vcombine.high %v857, 0.0
        %v862 = vcombine.low %v766, %v773
        %v864 = vunpack.c.l.s4 1983009808
        %v865 = vunpack.c.0.s8 %v864
        %v866 = vlaneseq
        %v867 = vshrl.u32 %v866, 7
        %v868 = vsub.s32 %v865, %v867
        %v869 = vrot.slane %v862, %v868
        %v870 = vcombine.low %v790, %v791
        %v872 = vunpack.c.l.s4 1983009808
        %v873 = vunpack.c.0.s8 %v872
        %v874 = vlaneseq
        %v875 = vshrl.u32 %v874, 7
        %v876 = vsub.s32 %v873, %v875
        %v877 = vrot.slane %v870, %v876
        %v878 = vcombine.low %v782, %v789
        %v880 = vunpack.c.l.s4 1983009808
        %v881 = vunpack.c.0.s8 %v880
        %v882 = vlaneseq
        %v883 = vshrl.u32 %v882, 7
        %v884 = vsub.s32 %v881, %v883
        %v885 = vrot.slane %v878, %v884
        %v886 = vcombine.low %v792, %v793
        %v888 = vunpack.c.l.s4 1983009808
        %v889 = vunpack.c.0.s8 %v888
        %v890 = vlaneseq
        %v891 = vshrl.u32 %v890, 7
        %v892 = vsub.s32 %v889, %v891
        %v893 = vrot.slane %v886, %v892
        %v894 = vcombine.low %v869, %v877
        %v895 = vcombine.high %v869, %v877
        %v897 = vunpack.c.l.s4 1934713408
        %v898 = vunpack.c.0.s8 %v897
        %v899 = vlaneseq
        %v900 = vshrl.u32 %v899, 7
        %v901 = vsub.s32 %v898, %v900
        %v902 = vrot.slane %v894, %v901
        %v904 = vunpack.c.l.s4 1934713408
        %v905 = vunpack.c.0.s8 %v904
        %v906 = vlaneseq
        %v907 = vshrl.u32 %v906, 7
        %v908 = vsub.s32 %v905, %v907
        %v909 = vrot.slane %v895, %v908
        %v910 = vcombine.low %v885, %v893
        %v911 = vcombine.high %v885, %v893
        %v913 = vunpack.c.l.s4 1934713408
        %v914 = vunpack.c.0.s8 %v913
        %v915 = vlaneseq
        %v916 = vshrl.u32 %v915, 7
        %v917 = vsub.s32 %v914, %v916
        %v918 = vrot.slane %v910, %v917
        %v920 = vunpack.c.l.s4 1934713408
        %v921 = vunpack.c.0.s8 %v920
        %v922 = vlaneseq
        %v923 = vshrl.u32 %v922, 7
        %v924 = vsub.s32 %v921, %v923
        %v925 = vrot.slane %v911, %v924
        %v926 = vcombine.low %v902, %v918
        %v927 = vcombine.high %v902, %v918
        %v928 = vcombine.low %v909, %v925
        %v929 = vcombine.high %v909, %v925
        %v930 = vcombine.low %v834, %v841
        %v932 = vunpack.c.l.s4 1983009808
        %v933 = vunpack.c.0.s8 %v932
        %v934 = vlaneseq
        %v935 = vshrl.u32 %v934, 7
        %v936 = vsub.s32 %v933, %v935
        %v937 = vrot.slane %v930, %v936
        %v938 = vcombine.low %v858, %v859
        %v940 = vunpack.c.l.s4 1983009808
        %v941 = vunpack.c.0.s8 %v940
        %v942 = vlaneseq
        %v943 = vshrl.u32 %v942, 7
        %v944 = vsub.s32 %v941, %v943
        %v945 = vrot.slane %v938, %v944
        %v946 = vcombine.low %v850, %v857
        %v948 = vunpack.c.l.s4 1983009808
        %v949 = vunpack.c.0.s8 %v948
        %v950 = vlaneseq
        %v951 = vshrl.u32 %v950, 7
        %v952 = vsub.s32 %v949, %v951
        %v953 = vrot.slane %v946, %v952
        %v954 = vcombine.low %v860, %v861
        %v956 = vunpack.c.l.s4 1983009808
        %v957 = vunpack.c.0.s8 %v956
        %v958 = vlaneseq
        %v959 = vshrl.u32 %v958, 7
        %v960 = vsub.s32 %v957, %v959
        %v961 = vrot.slane %v954, %v960
        %v962 = vcombine.low %v937, %v945
        %v963 = vcombine.high %v937, %v945
        %v965 = vunpack.c.l.s4 1934713408
        %v966 = vunpack.c.0.s8 %v965
        %v967 = vlaneseq
        %v968 = vshrl.u32 %v967, 7
        %v969 = vsub.s32 %v966, %v968
        %v970 = vrot.slane %v962, %v969
        %v972 = vunpack.c.l.s4 1934713408
        %v973 = vunpack.c.0.s8 %v972
        %v974 = vlaneseq
        %v975 = vshrl.u32 %v974, 7
        %v976 = vsub.s32 %v973, %v975
        %v977 = vrot.slane %v963, %v976
        %v978 = vcombine.low %v953, %v961
        %v979 = vcombine.high %v953, %v961
        %v981 = vunpack.c.l.s4 1934713408
        %v982 = vunpack.c.0.s8 %v981
        %v983 = vlaneseq
        %v984 = vshrl.u32 %v983, 7
        %v985 = vsub.s32 %v982, %v984
        %v986 = vrot.slane %v978, %v985
        %v988 = vunpack.c.l.s4 1934713408
        %v989 = vunpack.c.0.s8 %v988
        %v990 = vlaneseq
        %v991 = vshrl.u32 %v990, 7
        %v992 = vsub.s32 %v989, %v991
        %v993 = vrot.slane %v979, %v992
        %v994 = vcombine.low %v970, %v986
        %v995 = vcombine.high %v970, %v986
        %v996 = vcombine.low %v977, %v993
        %v997 = vcombine.high %v977, %v993
        %v998 = vpack.c.bf16 %v994, %v926
        %v999 = vpack.c.bf16 %v995, %v927
        %v1000 = vpack.c.bf16 %v996, %v928
        %v1001 = vpack.c.bf16 %v997, %v929
        %1004 = vrot.lane.b32.xlu0 %v585, 96
        %v1005 = vpop.permute.xlu0 %1004
        %1006 = vrot.lane.b32.xlu0 %v586, 96
        %v1007 = vpop.permute.xlu0 %1006
        %1010 = vrot.lane.b32.xlu0 %v585, 64
        %v1011 = vpop.permute.xlu0 %1010
        %1012 = vrot.lane.b32.xlu0 %v586, 64
        %v1013 = vpop.permute.xlu0 %1012
        %1016 = vrot.lane.b32.xlu0 %v585, 32
        %v1017 = vpop.permute.xlu0 %1016
        %1018 = vrot.lane.b32.xlu0 %v586, 32
        %v1019 = vpop.permute.xlu0 %1018
        %v1022 = vcombine.low %v585, %v1011
        %v1023 = vcombine.high %v585, %v1011
        %v1025 = vunpack.c.l.s4 1983009808
        %v1026 = vunpack.c.0.s8 %v1025
        %v1027 = vlaneseq
        %v1028 = vshrl.u32 %v1027, 7
        %v1029 = vsub.s32 %v1026, %v1028
        %v1030 = vrot.slane %v1022, %v1029
        %v1032 = vunpack.c.l.s4 1983009808
        %v1033 = vunpack.c.0.s8 %v1032
        %v1034 = vlaneseq
        %v1035 = vshrl.u32 %v1034, 7
        %v1036 = vsub.s32 %v1033, %v1035
        %v1037 = vrot.slane %v1023, %v1036
        %v1038 = vcombine.low %v1005, %v1017
        %v1039 = vcombine.high %v1005, %v1017
        %v1041 = vunpack.c.l.s4 1983009808
        %v1042 = vunpack.c.0.s8 %v1041
        %v1043 = vlaneseq
        %v1044 = vshrl.u32 %v1043, 7
        %v1045 = vsub.s32 %v1042, %v1044
        %v1046 = vrot.slane %v1038, %v1045
        %v1048 = vunpack.c.l.s4 1983009808
        %v1049 = vunpack.c.0.s8 %v1048
        %v1050 = vlaneseq
        %v1051 = vshrl.u32 %v1050, 7
        %v1052 = vsub.s32 %v1049, %v1051
        %v1053 = vrot.slane %v1039, %v1052
        %v1054 = vcombine.low %v1030, %v1046
        %v1055 = vcombine.high %v1030, %v1046
        %v1057 = vunpack.c.l.s4 1934713408
        %v1058 = vunpack.c.0.s8 %v1057
        %v1059 = vlaneseq
        %v1060 = vshrl.u32 %v1059, 7
        %v1061 = vsub.s32 %v1058, %v1060
        %v1062 = vrot.slane %v1054, %v1061
        %v1064 = vunpack.c.l.s4 1934713408
        %v1065 = vunpack.c.0.s8 %v1064
        %v1066 = vlaneseq
        %v1067 = vshrl.u32 %v1066, 7
        %v1068 = vsub.s32 %v1065, %v1067
        %v1069 = vrot.slane %v1055, %v1068
        %v1070 = vcombine.low %v1037, %v1053
        %v1071 = vcombine.high %v1037, %v1053
        %v1073 = vunpack.c.l.s4 1934713408
        %v1074 = vunpack.c.0.s8 %v1073
        %v1075 = vlaneseq
        %v1076 = vshrl.u32 %v1075, 7
        %v1077 = vsub.s32 %v1074, %v1076
        %v1078 = vrot.slane %v1070, %v1077
        %v1080 = vunpack.c.l.s4 1934713408
        %v1081 = vunpack.c.0.s8 %v1080
        %v1082 = vlaneseq
        %v1083 = vshrl.u32 %v1082, 7
        %v1084 = vsub.s32 %v1081, %v1083
        %v1085 = vrot.slane %v1071, %v1084
        %v1086 = vcombine.high %v1062, 0.0
        %v1087 = vcombine.high %v1069, 0.0
        %v1088 = vcombine.high %v1078, 0.0
        %v1089 = vcombine.high %v1085, 0.0
        %v1090 = vcombine.low %v586, %v1013
        %v1091 = vcombine.high %v586, %v1013
        %v1093 = vunpack.c.l.s4 1983009808
        %v1094 = vunpack.c.0.s8 %v1093
        %v1095 = vlaneseq
        %v1096 = vshrl.u32 %v1095, 7
        %v1097 = vsub.s32 %v1094, %v1096
        %v1098 = vrot.slane %v1090, %v1097
        %v1100 = vunpack.c.l.s4 1983009808
        %v1101 = vunpack.c.0.s8 %v1100
        %v1102 = vlaneseq
        %v1103 = vshrl.u32 %v1102, 7
        %v1104 = vsub.s32 %v1101, %v1103
        %v1105 = vrot.slane %v1091, %v1104
        %v1106 = vcombine.low %v1007, %v1019
        %v1107 = vcombine.high %v1007, %v1019
        %v1109 = vunpack.c.l.s4 1983009808
        %v1110 = vunpack.c.0.s8 %v1109
        %v1111 = vlaneseq
        %v1112 = vshrl.u32 %v1111, 7
        %v1113 = vsub.s32 %v1110, %v1112
        %v1114 = vrot.slane %v1106, %v1113
        %v1116 = vunpack.c.l.s4 1983009808
        %v1117 = vunpack.c.0.s8 %v1116
        %v1118 = vlaneseq
        %v1119 = vshrl.u32 %v1118, 7
        %v1120 = vsub.s32 %v1117, %v1119
        %v1121 = vrot.slane %v1107, %v1120
        %v1122 = vcombine.low %v1098, %v1114
        %v1123 = vcombine.high %v1098, %v1114
        %v1125 = vunpack.c.l.s4 1934713408
        %v1126 = vunpack.c.0.s8 %v1125
        %v1127 = vlaneseq
        %v1128 = vshrl.u32 %v1127, 7
        %v1129 = vsub.s32 %v1126, %v1128
        %v1130 = vrot.slane %v1122, %v1129
        %v1132 = vunpack.c.l.s4 1934713408
        %v1133 = vunpack.c.0.s8 %v1132
        %v1134 = vlaneseq
        %v1135 = vshrl.u32 %v1134, 7
        %v1136 = vsub.s32 %v1133, %v1135
        %v1137 = vrot.slane %v1123, %v1136
        %v1138 = vcombine.low %v1105, %v1121
        %v1139 = vcombine.high %v1105, %v1121
        %v1141 = vunpack.c.l.s4 1934713408
        %v1142 = vunpack.c.0.s8 %v1141
        %v1143 = vlaneseq
        %v1144 = vshrl.u32 %v1143, 7
        %v1145 = vsub.s32 %v1142, %v1144
        %v1146 = vrot.slane %v1138, %v1145
        %v1148 = vunpack.c.l.s4 1934713408
        %v1149 = vunpack.c.0.s8 %v1148
        %v1150 = vlaneseq
        %v1151 = vshrl.u32 %v1150, 7
        %v1152 = vsub.s32 %v1149, %v1151
        %v1153 = vrot.slane %v1139, %v1152
        %v1154 = vcombine.high %v1130, 0.0
        %v1155 = vcombine.high %v1137, 0.0
        %v1156 = vcombine.high %v1146, 0.0
        %v1157 = vcombine.high %v1153, 0.0
        %v1158 = vcombine.low %v1062, %v1069
        %v1160 = vunpack.c.l.s4 1983009808
        %v1161 = vunpack.c.0.s8 %v1160
        %v1162 = vlaneseq
        %v1163 = vshrl.u32 %v1162, 7
        %v1164 = vsub.s32 %v1161, %v1163
        %v1165 = vrot.slane %v1158, %v1164
        %v1166 = vcombine.low %v1086, %v1087
        %v1168 = vunpack.c.l.s4 1983009808
        %v1169 = vunpack.c.0.s8 %v1168
        %v1170 = vlaneseq
        %v1171 = vshrl.u32 %v1170, 7
        %v1172 = vsub.s32 %v1169, %v1171
        %v1173 = vrot.slane %v1166, %v1172
        %v1174 = vcombine.low %v1078, %v1085
        %v1176 = vunpack.c.l.s4 1983009808
        %v1177 = vunpack.c.0.s8 %v1176
        %v1178 = vlaneseq
        %v1179 = vshrl.u32 %v1178, 7
        %v1180 = vsub.s32 %v1177, %v1179
        %v1181 = vrot.slane %v1174, %v1180
        %v1182 = vcombine.low %v1088, %v1089
        %v1184 = vunpack.c.l.s4 1983009808
        %v1185 = vunpack.c.0.s8 %v1184
        %v1186 = vlaneseq
        %v1187 = vshrl.u32 %v1186, 7
        %v1188 = vsub.s32 %v1185, %v1187
        %v1189 = vrot.slane %v1182, %v1188
        %v1190 = vcombine.low %v1165, %v1173
        %v1191 = vcombine.high %v1165, %v1173
        %v1193 = vunpack.c.l.s4 1934713408
        %v1194 = vunpack.c.0.s8 %v1193
        %v1195 = vlaneseq
        %v1196 = vshrl.u32 %v1195, 7
        %v1197 = vsub.s32 %v1194, %v1196
        %v1198 = vrot.slane %v1190, %v1197
        %v1200 = vunpack.c.l.s4 1934713408
        %v1201 = vunpack.c.0.s8 %v1200
        %v1202 = vlaneseq
        %v1203 = vshrl.u32 %v1202, 7
        %v1204 = vsub.s32 %v1201, %v1203
        %v1205 = vrot.slane %v1191, %v1204
        %v1206 = vcombine.low %v1181, %v1189
        %v1207 = vcombine.high %v1181, %v1189
        %v1209 = vunpack.c.l.s4 1934713408
        %v1210 = vunpack.c.0.s8 %v1209
        %v1211 = vlaneseq
        %v1212 = vshrl.u32 %v1211, 7
        %v1213 = vsub.s32 %v1210, %v1212
        %v1214 = vrot.slane %v1206, %v1213
        %v1216 = vunpack.c.l.s4 1934713408
        %v1217 = vunpack.c.0.s8 %v1216
        %v1218 = vlaneseq
        %v1219 = vshrl.u32 %v1218, 7
        %v1220 = vsub.s32 %v1217, %v1219
        %v1221 = vrot.slane %v1207, %v1220
        %v1222 = vcombine.low %v1198, %v1214
        %v1223 = vcombine.high %v1198, %v1214
        %v1224 = vcombine.low %v1205, %v1221
        %v1225 = vcombine.high %v1205, %v1221
        %v1226 = vcombine.low %v1130, %v1137
        %v1228 = vunpack.c.l.s4 1983009808
        %v1229 = vunpack.c.0.s8 %v1228
        %v1230 = vlaneseq
        %v1231 = vshrl.u32 %v1230, 7
        %v1232 = vsub.s32 %v1229, %v1231
        %v1233 = vrot.slane %v1226, %v1232
        %v1234 = vcombine.low %v1154, %v1155
        %v1236 = vunpack.c.l.s4 1983009808
        %v1237 = vunpack.c.0.s8 %v1236
        %v1238 = vlaneseq
        %v1239 = vshrl.u32 %v1238, 7
        %v1240 = vsub.s32 %v1237, %v1239
        %v1241 = vrot.slane %v1234, %v1240
        %v1242 = vcombine.low %v1146, %v1153
        %v1244 = vunpack.c.l.s4 1983009808
        %v1245 = vunpack.c.0.s8 %v1244
        %v1246 = vlaneseq
        %v1247 = vshrl.u32 %v1246, 7
        %v1248 = vsub.s32 %v1245, %v1247
        %v1249 = vrot.slane %v1242, %v1248
        %v1250 = vcombine.low %v1156, %v1157
        %v1252 = vunpack.c.l.s4 1983009808
        %v1253 = vunpack.c.0.s8 %v1252
        %v1254 = vlaneseq
        %v1255 = vshrl.u32 %v1254, 7
        %v1256 = vsub.s32 %v1253, %v1255
        %v1257 = vrot.slane %v1250, %v1256
        %v1258 = vcombine.low %v1233, %v1241
        %v1259 = vcombine.high %v1233, %v1241
        %v1261 = vunpack.c.l.s4 1934713408
        %v1262 = vunpack.c.0.s8 %v1261
        %v1263 = vlaneseq
        %v1264 = vshrl.u32 %v1263, 7
        %v1265 = vsub.s32 %v1262, %v1264
        %v1266 = vrot.slane %v1258, %v1265
        %v1268 = vunpack.c.l.s4 1934713408
        %v1269 = vunpack.c.0.s8 %v1268
        %v1270 = vlaneseq
        %v1271 = vshrl.u32 %v1270, 7
        %v1272 = vsub.s32 %v1269, %v1271
        %v1273 = vrot.slane %v1259, %v1272
        %v1274 = vcombine.low %v1249, %v1257
        %v1275 = vcombine.high %v1249, %v1257
        %v1277 = vunpack.c.l.s4 1934713408
        %v1278 = vunpack.c.0.s8 %v1277
        %v1279 = vlaneseq
        %v1280 = vshrl.u32 %v1279, 7
        %v1281 = vsub.s32 %v1278, %v1280
        %v1282 = vrot.slane %v1274, %v1281
        %v1284 = vunpack.c.l.s4 1934713408
        %v1285 = vunpack.c.0.s8 %v1284
        %v1286 = vlaneseq
        %v1287 = vshrl.u32 %v1286, 7
        %v1288 = vsub.s32 %v1285, %v1287
        %v1289 = vrot.slane %v1275, %v1288
        %v1290 = vcombine.low %v1266, %v1282
        %v1291 = vcombine.high %v1266, %v1282
        %v1292 = vcombine.low %v1273, %v1289
        %v1293 = vcombine.high %v1273, %v1289
        %v1294 = vpack.c.bf16 %v1290, %v1222
        %v1295 = vpack.c.bf16 %v1291, %v1223
        %v1296 = vpack.c.bf16 %v1292, %v1224
        %v1297 = vpack.c.bf16 %v1293, %v1225
        %1300 = vrot.lane.b32.xlu0 %v704, 96
        %v1301 = vpop.permute.xlu0 %1300
        %1302 = vrot.lane.b32.xlu0 %v705, 96
        %v1303 = vpop.permute.xlu0 %1302
        %1306 = vrot.lane.b32.xlu0 %v704, 64
        %v1307 = vpop.permute.xlu0 %1306
        %1308 = vrot.lane.b32.xlu0 %v705, 64
        %v1309 = vpop.permute.xlu0 %1308
        %1312 = vrot.lane.b32.xlu0 %v704, 32
        %v1313 = vpop.permute.xlu0 %1312
        %1314 = vrot.lane.b32.xlu0 %v705, 32
        %v1315 = vpop.permute.xlu0 %1314
        %v1318 = vcombine.low %v704, %v1307
        %v1319 = vcombine.high %v704, %v1307
        %v1321 = vunpack.c.l.s4 1983009808
        %v1322 = vunpack.c.0.s8 %v1321
        %v1323 = vlaneseq
        %v1324 = vshrl.u32 %v1323, 7
        %v1325 = vsub.s32 %v1322, %v1324
        %v1326 = vrot.slane %v1318, %v1325
        %v1328 = vunpack.c.l.s4 1983009808
        %v1329 = vunpack.c.0.s8 %v1328
        %v1330 = vlaneseq
        %v1331 = vshrl.u32 %v1330, 7
        %v1332 = vsub.s32 %v1329, %v1331
        %v1333 = vrot.slane %v1319, %v1332
        %v1334 = vcombine.low %v1301, %v1313
        %v1335 = vcombine.high %v1301, %v1313
        %v1337 = vunpack.c.l.s4 1983009808
        %v1338 = vunpack.c.0.s8 %v1337
        %v1339 = vlaneseq
        %v1340 = vshrl.u32 %v1339, 7
        %v1341 = vsub.s32 %v1338, %v1340
        %v1342 = vrot.slane %v1334, %v1341
        %v1344 = vunpack.c.l.s4 1983009808
        %v1345 = vunpack.c.0.s8 %v1344
        %v1346 = vlaneseq
        %v1347 = vshrl.u32 %v1346, 7
        %v1348 = vsub.s32 %v1345, %v1347
        %v1349 = vrot.slane %v1335, %v1348
        %v1350 = vcombine.low %v1326, %v1342
        %v1351 = vcombine.high %v1326, %v1342
        %v1353 = vunpack.c.l.s4 1934713408
        %v1354 = vunpack.c.0.s8 %v1353
        %v1355 = vlaneseq
        %v1356 = vshrl.u32 %v1355, 7
        %v1357 = vsub.s32 %v1354, %v1356
        %v1358 = vrot.slane %v1350, %v1357
        %v1360 = vunpack.c.l.s4 1934713408
        %v1361 = vunpack.c.0.s8 %v1360
        %v1362 = vlaneseq
        %v1363 = vshrl.u32 %v1362, 7
        %v1364 = vsub.s32 %v1361, %v1363
        %v1365 = vrot.slane %v1351, %v1364
        %v1366 = vcombine.low %v1333, %v1349
        %v1367 = vcombine.high %v1333, %v1349
        %v1369 = vunpack.c.l.s4 1934713408
        %v1370 = vunpack.c.0.s8 %v1369
        %v1371 = vlaneseq
        %v1372 = vshrl.u32 %v1371, 7
        %v1373 = vsub.s32 %v1370, %v1372
        %v1374 = vrot.slane %v1366, %v1373
        %v1376 = vunpack.c.l.s4 1934713408
        %v1377 = vunpack.c.0.s8 %v1376
        %v1378 = vlaneseq
        %v1379 = vshrl.u32 %v1378, 7
        %v1380 = vsub.s32 %v1377, %v1379
        %v1381 = vrot.slane %v1367, %v1380
        %v1382 = vcombine.high %v1358, 0.0
        %v1383 = vcombine.high %v1365, 0.0
        %v1384 = vcombine.high %v1374, 0.0
        %v1385 = vcombine.high %v1381, 0.0
        %v1386 = vcombine.low %v705, %v1309
        %v1387 = vcombine.high %v705, %v1309
        %v1389 = vunpack.c.l.s4 1983009808
        %v1390 = vunpack.c.0.s8 %v1389
        %v1391 = vlaneseq
        %v1392 = vshrl.u32 %v1391, 7
        %v1393 = vsub.s32 %v1390, %v1392
        %v1394 = vrot.slane %v1386, %v1393
        %v1396 = vunpack.c.l.s4 1983009808
        %v1397 = vunpack.c.0.s8 %v1396
        %v1398 = vlaneseq
        %v1399 = vshrl.u32 %v1398, 7
        %v1400 = vsub.s32 %v1397, %v1399
        %v1401 = vrot.slane %v1387, %v1400
        %v1402 = vcombine.low %v1303, %v1315
        %v1403 = vcombine.high %v1303, %v1315
        %v1405 = vunpack.c.l.s4 1983009808
        %v1406 = vunpack.c.0.s8 %v1405
        %v1407 = vlaneseq
        %v1408 = vshrl.u32 %v1407, 7
        %v1409 = vsub.s32 %v1406, %v1408
        %v1410 = vrot.slane %v1402, %v1409
        %v1412 = vunpack.c.l.s4 1983009808
        %v1413 = vunpack.c.0.s8 %v1412
        %v1414 = vlaneseq
        %v1415 = vshrl.u32 %v1414, 7
        %v1416 = vsub.s32 %v1413, %v1415
        %v1417 = vrot.slane %v1403, %v1416
        %v1418 = vcombine.low %v1394, %v1410
        %v1419 = vcombine.high %v1394, %v1410
        %v1421 = vunpack.c.l.s4 1934713408
        %v1422 = vunpack.c.0.s8 %v1421
        %v1423 = vlaneseq
        %v1424 = vshrl.u32 %v1423, 7
        %v1425 = vsub.s32 %v1422, %v1424
        %v1426 = vrot.slane %v1418, %v1425
        %v1428 = vunpack.c.l.s4 1934713408
        %v1429 = vunpack.c.0.s8 %v1428
        %v1430 = vlaneseq
        %v1431 = vshrl.u32 %v1430, 7
        %v1432 = vsub.s32 %v1429, %v1431
        %v1433 = vrot.slane %v1419, %v1432
        %v1434 = vcombine.low %v1401, %v1417
        %v1435 = vcombine.high %v1401, %v1417
        %v1437 = vunpack.c.l.s4 1934713408
        %v1438 = vunpack.c.0.s8 %v1437
        %v1439 = vlaneseq
        %v1440 = vshrl.u32 %v1439, 7
        %v1441 = vsub.s32 %v1438, %v1440
        %v1442 = vrot.slane %v1434, %v1441
        %v1444 = vunpack.c.l.s4 1934713408
        %v1445 = vunpack.c.0.s8 %v1444
        %v1446 = vlaneseq
        %v1447 = vshrl.u32 %v1446, 7
        %v1448 = vsub.s32 %v1445, %v1447
        %v1449 = vrot.slane %v1435, %v1448
        %v1450 = vcombine.high %v1426, 0.0
        %v1451 = vcombine.high %v1433, 0.0
        %v1452 = vcombine.high %v1442, 0.0
        %v1453 = vcombine.high %v1449, 0.0
        %v1454 = vcombine.low %v1358, %v1365
        %v1456 = vunpack.c.l.s4 1983009808
        %v1457 = vunpack.c.0.s8 %v1456
        %v1458 = vlaneseq
        %v1459 = vshrl.u32 %v1458, 7
        %v1460 = vsub.s32 %v1457, %v1459
        %v1461 = vrot.slane %v1454, %v1460
        %v1462 = vcombine.low %v1382, %v1383
        %v1464 = vunpack.c.l.s4 1983009808
        %v1465 = vunpack.c.0.s8 %v1464
        %v1466 = vlaneseq
        %v1467 = vshrl.u32 %v1466, 7
        %v1468 = vsub.s32 %v1465, %v1467
        %v1469 = vrot.slane %v1462, %v1468
        %v1470 = vcombine.low %v1374, %v1381
        %v1472 = vunpack.c.l.s4 1983009808
        %v1473 = vunpack.c.0.s8 %v1472
        %v1474 = vlaneseq
        %v1475 = vshrl.u32 %v1474, 7
        %v1476 = vsub.s32 %v1473, %v1475
        %v1477 = vrot.slane %v1470, %v1476
        %v1478 = vcombine.low %v1384, %v1385
        %v1480 = vunpack.c.l.s4 1983009808
        %v1481 = vunpack.c.0.s8 %v1480
        %v1482 = vlaneseq
        %v1483 = vshrl.u32 %v1482, 7
        %v1484 = vsub.s32 %v1481, %v1483
        %v1485 = vrot.slane %v1478, %v1484
        %v1486 = vcombine.low %v1461, %v1469
        %v1487 = vcombine.high %v1461, %v1469
        %v1489 = vunpack.c.l.s4 1934713408
        %v1490 = vunpack.c.0.s8 %v1489
        %v1491 = vlaneseq
        %v1492 = vshrl.u32 %v1491, 7
        %v1493 = vsub.s32 %v1490, %v1492
        %v1494 = vrot.slane %v1486, %v1493
        %v1496 = vunpack.c.l.s4 1934713408
        %v1497 = vunpack.c.0.s8 %v1496
        %v1498 = vlaneseq
        %v1499 = vshrl.u32 %v1498, 7
        %v1500 = vsub.s32 %v1497, %v1499
        %v1501 = vrot.slane %v1487, %v1500
        %v1502 = vcombine.low %v1477, %v1485
        %v1503 = vcombine.high %v1477, %v1485
        %v1505 = vunpack.c.l.s4 1934713408
        %v1506 = vunpack.c.0.s8 %v1505
        %v1507 = vlaneseq
        %v1508 = vshrl.u32 %v1507, 7
        %v1509 = vsub.s32 %v1506, %v1508
        %v1510 = vrot.slane %v1502, %v1509
        %v1512 = vunpack.c.l.s4 1934713408
        %v1513 = vunpack.c.0.s8 %v1512
        %v1514 = vlaneseq
        %v1515 = vshrl.u32 %v1514, 7
        %v1516 = vsub.s32 %v1513, %v1515
        %v1517 = vrot.slane %v1503, %v1516
        %v1518 = vcombine.low %v1494, %v1510
        %v1519 = vcombine.high %v1494, %v1510
        %v1520 = vcombine.low %v1501, %v1517
        %v1521 = vcombine.high %v1501, %v1517
        %v1522 = vcombine.low %v1426, %v1433
        %v1524 = vunpack.c.l.s4 1983009808
        %v1525 = vunpack.c.0.s8 %v1524
        %v1526 = vlaneseq
        %v1527 = vshrl.u32 %v1526, 7
        %v1528 = vsub.s32 %v1525, %v1527
        %v1529 = vrot.slane %v1522, %v1528
        %v1530 = vcombine.low %v1450, %v1451
        %v1532 = vunpack.c.l.s4 1983009808
        %v1533 = vunpack.c.0.s8 %v1532
        %v1534 = vlaneseq
        %v1535 = vshrl.u32 %v1534, 7
        %v1536 = vsub.s32 %v1533, %v1535
        %v1537 = vrot.slane %v1530, %v1536
        %v1538 = vcombine.low %v1442, %v1449
        %v1540 = vunpack.c.l.s4 1983009808
        %v1541 = vunpack.c.0.s8 %v1540
        %v1542 = vlaneseq
        %v1543 = vshrl.u32 %v1542, 7
        %v1544 = vsub.s32 %v1541, %v1543
        %v1545 = vrot.slane %v1538, %v1544
        %v1546 = vcombine.low %v1452, %v1453
        %v1548 = vunpack.c.l.s4 1983009808
        %v1549 = vunpack.c.0.s8 %v1548
        %v1550 = vlaneseq
        %v1551 = vshrl.u32 %v1550, 7
        %v1552 = vsub.s32 %v1549, %v1551
        %v1553 = vrot.slane %v1546, %v1552
        %v1554 = vcombine.low %v1529, %v1537
        %v1555 = vcombine.high %v1529, %v1537
        %v1557 = vunpack.c.l.s4 1934713408
        %v1558 = vunpack.c.0.s8 %v1557
        %v1559 = vlaneseq
        %v1560 = vshrl.u32 %v1559, 7
        %v1561 = vsub.s32 %v1558, %v1560
        %v1562 = vrot.slane %v1554, %v1561
        %v1564 = vunpack.c.l.s4 1934713408
        %v1565 = vunpack.c.0.s8 %v1564
        %v1566 = vlaneseq
        %v1567 = vshrl.u32 %v1566, 7
        %v1568 = vsub.s32 %v1565, %v1567
        %v1569 = vrot.slane %v1555, %v1568
        %v1570 = vcombine.low %v1545, %v1553
        %v1571 = vcombine.high %v1545, %v1553
        %v1573 = vunpack.c.l.s4 1934713408
        %v1574 = vunpack.c.0.s8 %v1573
        %v1575 = vlaneseq
        %v1576 = vshrl.u32 %v1575, 7
        %v1577 = vsub.s32 %v1574, %v1576
        %v1578 = vrot.slane %v1570, %v1577
        %v1580 = vunpack.c.l.s4 1934713408
        %v1581 = vunpack.c.0.s8 %v1580
        %v1582 = vlaneseq
        %v1583 = vshrl.u32 %v1582, 7
        %v1584 = vsub.s32 %v1581, %v1583
        %v1585 = vrot.slane %v1571, %v1584
        %v1586 = vcombine.low %v1562, %v1578
        %v1587 = vcombine.high %v1562, %v1578
        %v1588 = vcombine.low %v1569, %v1585
        %v1589 = vcombine.high %v1569, %v1585
        %v1590 = vpack.c.bf16 %v1586, %v1518
        %v1591 = vpack.c.bf16 %v1587, %v1519
        %v1592 = vpack.c.bf16 %v1588, %v1520
        %v1593 = vpack.c.bf16 %v1589, %v1521
        %vm1594 = vcmask 261120
        %v1596 = vsel %vm1594, %v998, 0
        %v1599 = vsel %vm1594, %v1294, 0
        %1601 = vmatprep.subr.bf16.mxu0 0
        %1602 = vmatpush1.bf16.xpose.msra.mxu0 %v1599
        %1603 = vmatprep.subr.bf16.mxu0 0
        %1604 = vmatpush1.bf16.xpose.msra.mxu0 0
        %1605 = vmatprep.subr.bf16.mxu0 0
        %1606 = vmatpush1.bf16.xpose.msra.mxu0 0
        %1607 = vmatprep.subr.bf16.mxu0 0
        %1608 = vmatpush1.bf16.xpose.msra.mxu0 0
        %1609 = vmatprep.subr.bf16.mxu0 0
        %1610 = vmatpush1.bf16.xpose.msra.mxu0 0
        %1611 = vmatprep.subr.bf16.mxu0 0
        %1612 = vmatpush1.bf16.xpose.msra.mxu0 0
        %1613 = vmatprep.subr.bf16.mxu0 0
        %1614 = vmatpush1.bf16.xpose.msra.mxu0 0
        %1615 = vmatprep.subr.bf16.mxu0 0
        %1616 = vmatpush1.bf16.xpose.msra.mxu0 0
        %1617 = vmatprep.subr.bf16.mxu0 0
        %1618 = vmatpush1.bf16.xpose.msra.mxu0 0
        %1619 = vmatprep.subr.bf16.mxu0 0
        %1620 = vmatpush1.bf16.xpose.msra.mxu0 0
        %1621 = vmatprep.subr.bf16.mxu0 0
        %1622 = vmatpush1.bf16.xpose.msra.mxu0 0
        %1623 = vmatprep.subr.bf16.mxu0 0
        %1624 = vmatpush1.bf16.xpose.msra.mxu0 0
        %1625 = vmatprep.subr.bf16.mxu0 0
        %1626 = vmatpush1.bf16.xpose.msra.mxu0 0
        %1627 = vmatprep.subr.bf16.mxu0 0
        %1628 = vmatpush1.bf16.xpose.msra.mxu0 0
        %1629 = vmatprep.subr.bf16.mxu0 0
        %1630 = vmatpush1.bf16.xpose.msra.mxu0 0
        %1631 = vmatprep.subr.bf16.mxu0 0
        %1632 = vmatpush1.bf16.xpose.msra.mxu0 0
        %1633 = vmatprep.mubr.bf16.mxu0 0
        %1634 = vmatmul.mubr.bf16.gmra.mrb[0].mxu0 %v1596
        %v1635 = vpop.f32.mrb[0].mxu0
        %v1636 = vadd.f32 0.0, %v1635
        %v1637 = vpop.f32.mrb[0].mxu0
        %v1638 = vpop.f32.mrb[0].mxu0
        %v1639 = vadd.f32 0.0, %v1638
        %v1640 = vpop.f32.mrb[0].mxu0
        %1641 = vdwg.mxu0
        %v1643 = vsel %vm1594, %v999, 0
        %v1646 = vsel %vm1594, %v1295, 0
        %1648 = vmatprep.subr.bf16.mxu0 0
        %1649 = vmatpush1.bf16.xpose.msra.mxu0 %v1646
        %1650 = vmatprep.subr.bf16.mxu0 0
        %1651 = vmatpush1.bf16.xpose.msra.mxu0 0
        %1652 = vmatprep.subr.bf16.mxu0 0
        %1653 = vmatpush1.bf16.xpose.msra.mxu0 0
        %1654 = vmatprep.subr.bf16.mxu0 0
        %1655 = vmatpush1.bf16.xpose.msra.mxu0 0
        %1656 = vmatprep.subr.bf16.mxu0 0
        %1657 = vmatpush1.bf16.xpose.msra.mxu0 0
        %1658 = vmatprep.subr.bf16.mxu0 0
        %1659 = vmatpush1.bf16.xpose.msra.mxu0 0
        %1660 = vmatprep.subr.bf16.mxu0 0
        %1661 = vmatpush1.bf16.xpose.msra.mxu0 0
        %1662 = vmatprep.subr.bf16.mxu0 0
        %1663 = vmatpush1.bf16.xpose.msra.mxu0 0
        %1664 = vmatprep.subr.bf16.mxu0 0
        %1665 = vmatpush1.bf16.xpose.msra.mxu0 0
        %1666 = vmatprep.subr.bf16.mxu0 0
        %1667 = vmatpush1.bf16.xpose.msra.mxu0 0
        %1668 = vmatprep.subr.bf16.mxu0 0
        %1669 = vmatpush1.bf16.xpose.msra.mxu0 0
        %1670 = vmatprep.subr.bf16.mxu0 0
        %1671 = vmatpush1.bf16.xpose.msra.mxu0 0
        %1672 = vmatprep.subr.bf16.mxu0 0
        %1673 = vmatpush1.bf16.xpose.msra.mxu0 0
        %1674 = vmatprep.subr.bf16.mxu0 0
        %1675 = vmatpush1.bf16.xpose.msra.mxu0 0
        %1676 = vmatprep.subr.bf16.mxu0 0
        %1677 = vmatpush1.bf16.xpose.msra.mxu0 0
        %1678 = vmatprep.subr.bf16.mxu0 0
        %1679 = vmatpush1.bf16.xpose.msra.mxu0 0
        %1680 = vmatprep.mubr.bf16.mxu0 0
        %1681 = vmatmul.mubr.bf16.gmra.mrb[0].mxu0 %v1643
        %v1682 = vpop.f32.mrb[0].mxu0
        %v1683 = vadd.f32 0.0, %v1682
        %v1684 = vpop.f32.mrb[0].mxu0
        %v1685 = vpop.f32.mrb[0].mxu0
        %v1686 = vadd.f32 0.0, %v1685
        %v1687 = vpop.f32.mrb[0].mxu0
        %1688 = vdwg.mxu0
        %v1690 = vsel %vm1594, %v1000, 0
        %v1693 = vsel %vm1594, %v1296, 0
        %1695 = vmatprep.subr.bf16.mxu0 0
        %1696 = vmatpush1.bf16.xpose.msra.mxu0 %v1693
        %1697 = vmatprep.subr.bf16.mxu0 0
        %1698 = vmatpush1.bf16.xpose.msra.mxu0 0
        %1699 = vmatprep.subr.bf16.mxu0 0
        %1700 = vmatpush1.bf16.xpose.msra.mxu0 0
        %1701 = vmatprep.subr.bf16.mxu0 0
        %1702 = vmatpush1.bf16.xpose.msra.mxu0 0
        %1703 = vmatprep.subr.bf16.mxu0 0
        %1704 = vmatpush1.bf16.xpose.msra.mxu0 0
        %1705 = vmatprep.subr.bf16.mxu0 0
        %1706 = vmatpush1.bf16.xpose.msra.mxu0 0
        %1707 = vmatprep.subr.bf16.mxu0 0
        %1708 = vmatpush1.bf16.xpose.msra.mxu0 0
        %1709 = vmatprep.subr.bf16.mxu0 0
        %1710 = vmatpush1.bf16.xpose.msra.mxu0 0
        %1711 = vmatprep.subr.bf16.mxu0 0
        %1712 = vmatpush1.bf16.xpose.msra.mxu0 0
        %1713 = vmatprep.subr.bf16.mxu0 0
        %1714 = vmatpush1.bf16.xpose.msra.mxu0 0
        %1715 = vmatprep.subr.bf16.mxu0 0
        %1716 = vmatpush1.bf16.xpose.msra.mxu0 0
        %1717 = vmatprep.subr.bf16.mxu0 0
        %1718 = vmatpush1.bf16.xpose.msra.mxu0 0
        %1719 = vmatprep.subr.bf16.mxu0 0
        %1720 = vmatpush1.bf16.xpose.msra.mxu0 0
        %1721 = vmatprep.subr.bf16.mxu0 0
        %1722 = vmatpush1.bf16.xpose.msra.mxu0 0
        %1723 = vmatprep.subr.bf16.mxu0 0
        %1724 = vmatpush1.bf16.xpose.msra.mxu0 0
        %1725 = vmatprep.subr.bf16.mxu0 0
        %1726 = vmatpush1.bf16.xpose.msra.mxu0 0
        %1727 = vmatprep.mubr.bf16.mxu0 0
        %1728 = vmatmul.mubr.bf16.gmra.mrb[0].mxu0 %v1690
        %v1729 = vpop.f32.mrb[0].mxu0
        %v1730 = vadd.f32 0.0, %v1729
        %v1731 = vpop.f32.mrb[0].mxu0
        %v1732 = vpop.f32.mrb[0].mxu0
        %v1733 = vadd.f32 0.0, %v1732
        %v1734 = vpop.f32.mrb[0].mxu0
        %1735 = vdwg.mxu0
        %v1737 = vsel %vm1594, %v1001, 0
        %v1740 = vsel %vm1594, %v1297, 0
        %1742 = vmatprep.subr.bf16.mxu0 0
        %1743 = vmatpush1.bf16.xpose.msra.mxu0 %v1740
        %1744 = vmatprep.subr.bf16.mxu0 0
        %1745 = vmatpush1.bf16.xpose.msra.mxu0 0
        %1746 = vmatprep.subr.bf16.mxu0 0
        %1747 = vmatpush1.bf16.xpose.msra.mxu0 0
        %1748 = vmatprep.subr.bf16.mxu0 0
        %1749 = vmatpush1.bf16.xpose.msra.mxu0 0
        %1750 = vmatprep.subr.bf16.mxu0 0
        %1751 = vmatpush1.bf16.xpose.msra.mxu0 0
        %1752 = vmatprep.subr.bf16.mxu0 0
        %1753 = vmatpush1.bf16.xpose.msra.mxu0 0
        %1754 = vmatprep.subr.bf16.mxu0 0
        %1755 = vmatpush1.bf16.xpose.msra.mxu0 0
        %1756 = vmatprep.subr.bf16.mxu0 0
        %1757 = vmatpush1.bf16.xpose.msra.mxu0 0
        %1758 = vmatprep.subr.bf16.mxu0 0
        %1759 = vmatpush1.bf16.xpose.msra.mxu0 0
        %1760 = vmatprep.subr.bf16.mxu0 0
        %1761 = vmatpush1.bf16.xpose.msra.mxu0 0
        %1762 = vmatprep.subr.bf16.mxu0 0
        %1763 = vmatpush1.bf16.xpose.msra.mxu0 0
        %1764 = vmatprep.subr.bf16.mxu0 0
        %1765 = vmatpush1.bf16.xpose.msra.mxu0 0
        %1766 = vmatprep.subr.bf16.mxu0 0
        %1767 = vmatpush1.bf16.xpose.msra.mxu0 0
        %1768 = vmatprep.subr.bf16.mxu0 0
        %1769 = vmatpush1.bf16.xpose.msra.mxu0 0
        %1770 = vmatprep.subr.bf16.mxu0 0
        %1771 = vmatpush1.bf16.xpose.msra.mxu0 0
        %1772 = vmatprep.subr.bf16.mxu0 0
        %1773 = vmatpush1.bf16.xpose.msra.mxu0 0
        %1774 = vmatprep.mubr.bf16.mxu0 0
        %1775 = vmatmul.mubr.bf16.gmra.mrb[0].mxu0 %v1737
        %v1776 = vpop.f32.mrb[0].mxu0
        %v1777 = vadd.f32 0.0, %v1776
        %v1778 = vpop.f32.mrb[0].mxu0
        %v1779 = vpop.f32.mrb[0].mxu0
        %v1780 = vadd.f32 0.0, %v1779
        %v1781 = vpop.f32.mrb[0].mxu0
        %1782 = vdwg.mxu0
        %v1783 = vld [vmem:[%s344] sm:$0xff]
        %v1785 = vrot.slane %v1783, 4
        %1787 = vrot.lane.b32.xlu0 %v1783, 112
        %v1788 = vpop.permute.xlu0 %1787
        %v1789 = vrot.slane %v1788, 4
        %1791 = vrot.lane.b32.xlu0 %v1783, 96
        %v1792 = vpop.permute.xlu0 %1791
        %v1793 = vrot.slane %v1792, 4
        %1795 = vrot.lane.b32.xlu0 %v1783, 80
        %v1796 = vpop.permute.xlu0 %1795
        %v1797 = vrot.slane %v1796, 4
        %1799 = vrot.lane.b32.xlu0 %v1783, 64
        %v1800 = vpop.permute.xlu0 %1799
        %v1801 = vrot.slane %v1800, 4
        %1803 = vrot.lane.b32.xlu0 %v1783, 48
        %v1804 = vpop.permute.xlu0 %1803
        %v1805 = vrot.slane %v1804, 4
        %1807 = vrot.lane.b32.xlu0 %v1783, 32
        %v1808 = vpop.permute.xlu0 %1807
        %v1809 = vrot.slane %v1808, 4
        %1811 = vrot.lane.b32.xlu0 %v1783, 16
        %v1812 = vpop.permute.xlu0 %1811
        %v1813 = vrot.slane %v1812, 4
        %v1822 = vcombine.low %v1783, %v1792
        %v1824 = vunpack.c.l.s4 1983009808
        %v1825 = vunpack.c.0.s8 %v1824
        %v1826 = vlaneseq
        %v1827 = vshrl.u32 %v1826, 7
        %v1828 = vsub.s32 %v1825, %v1827
        %v1829 = vrot.slane %v1822, %v1828
        %v1830 = vcombine.low %v1788, %v1796
        %v1832 = vunpack.c.l.s4 1983009808
        %v1833 = vunpack.c.0.s8 %v1832
        %v1834 = vlaneseq
        %v1835 = vshrl.u32 %v1834, 7
        %v1836 = vsub.s32 %v1833, %v1835
        %v1837 = vrot.slane %v1830, %v1836
        %v1838 = vcombine.low %v1829, %v1837
        %v1839 = vcombine.high %v1829, %v1837
        %v1841 = vunpack.c.l.s4 1934713408
        %v1842 = vunpack.c.0.s8 %v1841
        %v1843 = vlaneseq
        %v1844 = vshrl.u32 %v1843, 7
        %v1845 = vsub.s32 %v1842, %v1844
        %v1846 = vrot.slane %v1838, %v1845
        %v1848 = vunpack.c.l.s4 1934713408
        %v1849 = vunpack.c.0.s8 %v1848
        %v1850 = vlaneseq
        %v1851 = vshrl.u32 %v1850, 7
        %v1852 = vsub.s32 %v1849, %v1851
        %v1853 = vrot.slane %v1839, %v1852
        %v1854 = vcombine.high %v1846, 0.0
        %v1855 = vcombine.high %v1853, 0.0
        %v1856 = vcombine.low %v1800, %v1808
        %v1858 = vunpack.c.l.s4 1983009808
        %v1859 = vunpack.c.0.s8 %v1858
        %v1860 = vlaneseq
        %v1861 = vshrl.u32 %v1860, 7
        %v1862 = vsub.s32 %v1859, %v1861
        %v1863 = vrot.slane %v1856, %v1862
        %v1864 = vcombine.low %v1804, %v1812
        %v1866 = vunpack.c.l.s4 1983009808
        %v1867 = vunpack.c.0.s8 %v1866
        %v1868 = vlaneseq
        %v1869 = vshrl.u32 %v1868, 7
        %v1870 = vsub.s32 %v1867, %v1869
        %v1871 = vrot.slane %v1864, %v1870
        %v1872 = vcombine.low %v1863, %v1871
        %v1873 = vcombine.high %v1863, %v1871
        %v1875 = vunpack.c.l.s4 1934713408
        %v1876 = vunpack.c.0.s8 %v1875
        %v1877 = vlaneseq
        %v1878 = vshrl.u32 %v1877, 7
        %v1879 = vsub.s32 %v1876, %v1878
        %v1880 = vrot.slane %v1872, %v1879
        %v1882 = vunpack.c.l.s4 1934713408
        %v1883 = vunpack.c.0.s8 %v1882
        %v1884 = vlaneseq
        %v1885 = vshrl.u32 %v1884, 7
        %v1886 = vsub.s32 %v1883, %v1885
        %v1887 = vrot.slane %v1873, %v1886
        %v1888 = vcombine.high %v1880, 0.0
        %v1889 = vcombine.high %v1887, 0.0
        %v1890 = vcombine.low %v1785, %v1793
        %v1892 = vunpack.c.l.s4 1983009808
        %v1893 = vunpack.c.0.s8 %v1892
        %v1894 = vlaneseq
        %v1895 = vshrl.u32 %v1894, 7
        %v1896 = vsub.s32 %v1893, %v1895
        %v1897 = vrot.slane %v1890, %v1896
        %v1898 = vcombine.low %v1789, %v1797
        %v1900 = vunpack.c.l.s4 1983009808
        %v1901 = vunpack.c.0.s8 %v1900
        %v1902 = vlaneseq
        %v1903 = vshrl.u32 %v1902, 7
        %v1904 = vsub.s32 %v1901, %v1903
        %v1905 = vrot.slane %v1898, %v1904
        %v1906 = vcombine.low %v1897, %v1905
        %v1907 = vcombine.high %v1897, %v1905
        %v1909 = vunpack.c.l.s4 1934713408
        %v1910 = vunpack.c.0.s8 %v1909
        %v1911 = vlaneseq
        %v1912 = vshrl.u32 %v1911, 7
        %v1913 = vsub.s32 %v1910, %v1912
        %v1914 = vrot.slane %v1906, %v1913
        %v1916 = vunpack.c.l.s4 1934713408
        %v1917 = vunpack.c.0.s8 %v1916
        %v1918 = vlaneseq
        %v1919 = vshrl.u32 %v1918, 7
        %v1920 = vsub.s32 %v1917, %v1919
        %v1921 = vrot.slane %v1907, %v1920
        %v1922 = vcombine.high %v1914, 0.0
        %v1923 = vcombine.high %v1921, 0.0
        %v1924 = vcombine.low %v1801, %v1809
        %v1926 = vunpack.c.l.s4 1983009808
        %v1927 = vunpack.c.0.s8 %v1926
        %v1928 = vlaneseq
        %v1929 = vshrl.u32 %v1928, 7
        %v1930 = vsub.s32 %v1927, %v1929
        %v1931 = vrot.slane %v1924, %v1930
        %v1932 = vcombine.low %v1805, %v1813
        %v1934 = vunpack.c.l.s4 1983009808
        %v1935 = vunpack.c.0.s8 %v1934
        %v1936 = vlaneseq
        %v1937 = vshrl.u32 %v1936, 7
        %v1938 = vsub.s32 %v1935, %v1937
        %v1939 = vrot.slane %v1932, %v1938
        %v1940 = vcombine.low %v1931, %v1939
        %v1941 = vcombine.high %v1931, %v1939
        %v1943 = vunpack.c.l.s4 1934713408
        %v1944 = vunpack.c.0.s8 %v1943
        %v1945 = vlaneseq
        %v1946 = vshrl.u32 %v1945, 7
        %v1947 = vsub.s32 %v1944, %v1946
        %v1948 = vrot.slane %v1940, %v1947
        %v1950 = vunpack.c.l.s4 1934713408
        %v1951 = vunpack.c.0.s8 %v1950
        %v1952 = vlaneseq
        %v1953 = vshrl.u32 %v1952, 7
        %v1954 = vsub.s32 %v1951, %v1953
        %v1955 = vrot.slane %v1941, %v1954
        %v1956 = vcombine.high %v1948, 0.0
        %v1957 = vcombine.high %v1955, 0.0
        %vm1958 = vcmp.eq.f32.partialorder %v1846, 0.0
        %vm1959 = vcmp.eq.f32.partialorder %v1880, 0.0
        %vm1960 = vcmp.eq.f32.partialorder %v1914, 0.0
        %vm1961 = vcmp.eq.f32.partialorder %v1948, 0.0
        %vm1962 = vcmp.eq.f32.partialorder %v1854, 0.0
        %vm1963 = vcmp.eq.f32.partialorder %v1888, 0.0
        %vm1964 = vcmp.eq.f32.partialorder %v1922, 0.0
        %vm1965 = vcmp.eq.f32.partialorder %v1956, 0.0
        %vm1966 = vcmp.eq.f32.partialorder %v1853, 0.0
        %vm1967 = vcmp.eq.f32.partialorder %v1887, 0.0
        %vm1968 = vcmp.eq.f32.partialorder %v1921, 0.0
        %vm1969 = vcmp.eq.f32.partialorder %v1955, 0.0
        %vm1970 = vcmp.eq.f32.partialorder %v1855, 0.0
        %vm1971 = vcmp.eq.f32.partialorder %v1889, 0.0
        %vm1972 = vcmp.eq.f32.partialorder %v1923, 0.0
        %vm1973 = vcmp.eq.f32.partialorder %v1957, 0.0
        %v1982 = vcombine.high %v1636, %v1636
        %v1983 = vcombine.high %v1639, %v1639
        %v1984 = vcombine.high %v1683, %v1683
        %v1985 = vcombine.high %v1686, %v1686
        %v1986 = vcombine.high %v1730, %v1730
        %v1987 = vcombine.high %v1733, %v1733
        %v1988 = vcombine.high %v1777, %v1777
        %v1989 = vcombine.high %v1780, %v1780
        %v1998 = vsel %vm1958, -1e+09, %v1636
        %v1999 = vsel %vm1959, -1e+09, %v1982
        %v2000 = vsel %vm1960, -1e+09, %v1639
        %v2001 = vsel %vm1961, -1e+09, %v1983
        %v2002 = vsel %vm1962, -1e+09, %v1683
        %v2003 = vsel %vm1963, -1e+09, %v1984
        %v2004 = vsel %vm1964, -1e+09, %v1686
        %v2005 = vsel %vm1965, -1e+09, %v1985
        %v2006 = vsel %vm1966, -1e+09, %v1730
        %v2007 = vsel %vm1967, -1e+09, %v1986
        %v2008 = vsel %vm1968, -1e+09, %v1733
        %v2009 = vsel %vm1969, -1e+09, %v1987
        %v2010 = vsel %vm1970, -1e+09, %v1777
        %v2011 = vsel %vm1971, -1e+09, %v1988
        %v2012 = vsel %vm1972, -1e+09, %v1780
        %v2013 = vsel %vm1973, -1e+09, %v1989
        %v2014 = vcombine.low %v1998, %v2006
        %v2016 = vunpack.c.l.s4 1983009808
        %v2017 = vunpack.c.0.s8 %v2016
        %v2018 = vlaneseq
        %v2019 = vshrl.u32 %v2018, 7
        %v2020 = vsub.s32 %v2017, %v2019
        %v2021 = vrot.slane %v2014, %v2020
        %v2022 = vcombine.low %v2002, %v2010
        %v2024 = vunpack.c.l.s4 1983009808
        %v2025 = vunpack.c.0.s8 %v2024
        %v2026 = vlaneseq
        %v2027 = vshrl.u32 %v2026, 7
        %v2028 = vsub.s32 %v2025, %v2027
        %v2029 = vrot.slane %v2022, %v2028
        %v2030 = vcombine.low %v2021, %v2029
        %v2031 = vcombine.high %v2021, %v2029
        %v2033 = vunpack.c.l.s4 1934713408
        %v2034 = vunpack.c.0.s8 %v2033
        %v2035 = vlaneseq
        %v2036 = vshrl.u32 %v2035, 7
        %v2037 = vsub.s32 %v2034, %v2036
        %v2038 = vrot.slane %v2030, %v2037
        %v2040 = vunpack.c.l.s4 1934713408
        %v2041 = vunpack.c.0.s8 %v2040
        %v2042 = vlaneseq
        %v2043 = vshrl.u32 %v2042, 7
        %v2044 = vsub.s32 %v2041, %v2043
        %v2045 = vrot.slane %v2031, %v2044
        %v2046 = vcombine.high %v2038, 0.0
        %v2047 = vcombine.high %v2045, 0.0
        %v2048 = vcombine.low %v1999, %v2007
        %v2050 = vunpack.c.l.s4 1983009808
        %v2051 = vunpack.c.0.s8 %v2050
        %v2052 = vlaneseq
        %v2053 = vshrl.u32 %v2052, 7
        %v2054 = vsub.s32 %v2051, %v2053
        %v2055 = vrot.slane %v2048, %v2054
        %v2056 = vcombine.low %v2003, %v2011
        %v2058 = vunpack.c.l.s4 1983009808
        %v2059 = vunpack.c.0.s8 %v2058
        %v2060 = vlaneseq
        %v2061 = vshrl.u32 %v2060, 7
        %v2062 = vsub.s32 %v2059, %v2061
        %v2063 = vrot.slane %v2056, %v2062
        %v2064 = vcombine.low %v2055, %v2063
        %v2065 = vcombine.high %v2055, %v2063
        %v2067 = vunpack.c.l.s4 1934713408
        %v2068 = vunpack.c.0.s8 %v2067
        %v2069 = vlaneseq
        %v2070 = vshrl.u32 %v2069, 7
        %v2071 = vsub.s32 %v2068, %v2070
        %v2072 = vrot.slane %v2064, %v2071
        %v2074 = vunpack.c.l.s4 1934713408
        %v2075 = vunpack.c.0.s8 %v2074
        %v2076 = vlaneseq
        %v2077 = vshrl.u32 %v2076, 7
        %v2078 = vsub.s32 %v2075, %v2077
        %v2079 = vrot.slane %v2065, %v2078
        %v2080 = vcombine.high %v2072, 0.0
        %v2081 = vcombine.high %v2079, 0.0
        %v2082 = vcombine.low %v2000, %v2008
        %v2084 = vunpack.c.l.s4 1983009808
        %v2085 = vunpack.c.0.s8 %v2084
        %v2086 = vlaneseq
        %v2087 = vshrl.u32 %v2086, 7
        %v2088 = vsub.s32 %v2085, %v2087
        %v2089 = vrot.slane %v2082, %v2088
        %v2090 = vcombine.low %v2004, %v2012
        %v2092 = vunpack.c.l.s4 1983009808
        %v2093 = vunpack.c.0.s8 %v2092
        %v2094 = vlaneseq
        %v2095 = vshrl.u32 %v2094, 7
        %v2096 = vsub.s32 %v2093, %v2095
        %v2097 = vrot.slane %v2090, %v2096
        %v2098 = vcombine.low %v2089, %v2097
        %v2099 = vcombine.high %v2089, %v2097
        %v2101 = vunpack.c.l.s4 1934713408
        %v2102 = vunpack.c.0.s8 %v2101
        %v2103 = vlaneseq
        %v2104 = vshrl.u32 %v2103, 7
        %v2105 = vsub.s32 %v2102, %v2104
        %v2106 = vrot.slane %v2098, %v2105
        %v2108 = vunpack.c.l.s4 1934713408
        %v2109 = vunpack.c.0.s8 %v2108
        %v2110 = vlaneseq
        %v2111 = vshrl.u32 %v2110, 7
        %v2112 = vsub.s32 %v2109, %v2111
        %v2113 = vrot.slane %v2099, %v2112
        %v2114 = vcombine.high %v2106, 0.0
        %v2115 = vcombine.high %v2113, 0.0
        %v2116 = vcombine.low %v2001, %v2009
        %v2118 = vunpack.c.l.s4 1983009808
        %v2119 = vunpack.c.0.s8 %v2118
        %v2120 = vlaneseq
        %v2121 = vshrl.u32 %v2120, 7
        %v2122 = vsub.s32 %v2119, %v2121
        %v2123 = vrot.slane %v2116, %v2122
        %v2124 = vcombine.low %v2005, %v2013
        %v2126 = vunpack.c.l.s4 1983009808
        %v2127 = vunpack.c.0.s8 %v2126
        %v2128 = vlaneseq
        %v2129 = vshrl.u32 %v2128, 7
        %v2130 = vsub.s32 %v2127, %v2129
        %v2131 = vrot.slane %v2124, %v2130
        %v2132 = vcombine.low %v2123, %v2131
        %v2133 = vcombine.high %v2123, %v2131
        %v2135 = vunpack.c.l.s4 1934713408
        %v2136 = vunpack.c.0.s8 %v2135
        %v2137 = vlaneseq
        %v2138 = vshrl.u32 %v2137, 7
        %v2139 = vsub.s32 %v2136, %v2138
        %v2140 = vrot.slane %v2132, %v2139
        %v2142 = vunpack.c.l.s4 1934713408
        %v2143 = vunpack.c.0.s8 %v2142
        %v2144 = vlaneseq
        %v2145 = vshrl.u32 %v2144, 7
        %v2146 = vsub.s32 %v2143, %v2145
        %v2147 = vrot.slane %v2133, %v2146
        %v2148 = vcombine.high %v2140, 0.0
        %v2149 = vcombine.high %v2147, 0.0
        %2151 = vrot.lane.b32.xlu0 %v2046, 16
        %v2152 = vpop.permute.xlu0 %2151
        %2155 = vrot.lane.b32.xlu0 %v2045, 32
        %v2156 = vpop.permute.xlu0 %2155
        %2159 = vrot.lane.b32.xlu0 %v2047, 48
        %v2160 = vpop.permute.xlu0 %2159
        %2163 = vrot.lane.b32.xlu0 %v2072, 64
        %v2164 = vpop.permute.xlu0 %2163
        %2167 = vrot.lane.b32.xlu0 %v2080, 80
        %v2168 = vpop.permute.xlu0 %2167
        %2171 = vrot.lane.b32.xlu0 %v2079, 96
        %v2172 = vpop.permute.xlu0 %2171
        %2175 = vrot.lane.b32.xlu0 %v2081, 112
        %v2176 = vpop.permute.xlu0 %2175
        %2179 = vrot.lane.b32.xlu0 %v2114, 16
        %v2180 = vpop.permute.xlu0 %2179
        %2183 = vrot.lane.b32.xlu0 %v2113, 32
        %v2184 = vpop.permute.xlu0 %2183
        %2187 = vrot.lane.b32.xlu0 %v2115, 48
        %v2188 = vpop.permute.xlu0 %2187
        %2191 = vrot.lane.b32.xlu0 %v2140, 64
        %v2192 = vpop.permute.xlu0 %2191
        %2195 = vrot.lane.b32.xlu0 %v2148, 80
        %v2196 = vpop.permute.xlu0 %2195
        %2199 = vrot.lane.b32.xlu0 %v2147, 96
        %v2200 = vpop.permute.xlu0 %2199
        %2203 = vrot.lane.b32.xlu0 %v2149, 112
        %v2204 = vpop.permute.xlu0 %2203
        %vm2206 = vcmask 130048
        %v2207 = vsel %vm2206, %v2038, %v2152
        %v2208 = vsel %vm1594, %v2207, %v2156
        %vm2209 = vcmask 392192
        %v2210 = vsel %vm2209, %v2208, %v2160
        %vm2211 = vcmask 523264
        %v2212 = vsel %vm2211, %v2210, %v2164
        %vm2213 = vcmask 654336
        %v2214 = vsel %vm2213, %v2212, %v2168
        %vm2215 = vcmask 785408
        %v2216 = vsel %vm2215, %v2214, %v2172
        %vm2217 = vcmask 916480
        %v2218 = vsel %vm2217, %v2216, %v2176
        %v2219 = vsel %vm2206, %v2106, %v2180
        %v2220 = vsel %vm1594, %v2219, %v2184
        %v2221 = vsel %vm2209, %v2220, %v2188
        %v2222 = vsel %vm2211, %v2221, %v2192
        %v2223 = vsel %vm2213, %v2222, %v2196
        %v2224 = vsel %vm2215, %v2223, %v2200
        %v2225 = vsel %vm2217, %v2224, %v2204
        %v2228 = vcombine.low %v2218, %v2225
        %2230 = vst [vmem:[%s349] sm:$0xff] %v2228
        %v2247 = vcombine.low %v1998, %v1999
        %v2248 = vcombine.low %v2000, %v2001
        %v2249 = vcombine.low %v2002, %v2003
        %v2250 = vcombine.low %v2004, %v2005
        %v2251 = vcombine.low %v2006, %v2007
        %v2252 = vcombine.low %v2008, %v2009
        %v2253 = vcombine.low %v2010, %v2011
        %v2254 = vcombine.low %v2012, %v2013
        %v2263 = vsel %vm2206, %v2247, -inf
        %2264 = vmax.xlane.f32.xlu0 %v2263
        %v2265 = vpop.xlane.xlu0 %2264
        %v2266 = vsel %vm2206, %v2248, -inf
        %2267 = vmax.xlane.f32.xlu0 %v2266
        %v2268 = vpop.xlane.xlu0 %2267
        %v2269 = vsel %vm2206, %v2249, -inf
        %2270 = vmax.xlane.f32.xlu0 %v2269
        %v2271 = vpop.xlane.xlu0 %2270
        %v2272 = vsel %vm2206, %v2250, -inf
        %2273 = vmax.xlane.f32.xlu0 %v2272
        %v2274 = vpop.xlane.xlu0 %2273
        %v2275 = vsel %vm2206, %v2251, -inf
        %2276 = vmax.xlane.f32.xlu0 %v2275
        %v2277 = vpop.xlane.xlu0 %2276
        %v2278 = vsel %vm2206, %v2252, -inf
        %2279 = vmax.xlane.f32.xlu0 %v2278
        %v2280 = vpop.xlane.xlu0 %2279
        %v2281 = vsel %vm2206, %v2253, -inf
        %2282 = vmax.xlane.f32.xlu0 %v2281
        %v2283 = vpop.xlane.xlu0 %2282
        %v2284 = vsel %vm2206, %v2254, -inf
        %2285 = vmax.xlane.f32.xlu0 %v2284
        %v2286 = vpop.xlane.xlu0 %2285
        %v2296 = vunpack.c.l.s4 839922192
        %v2297 = vunpack.c.0.s8 %v2296
        %v2298 = vlaneseq
        %v2299 = vshrl.u32 %v2298, 7
        %v2300 = vsub.s32 %v2297, %v2299
        %v2301 = vrot.slane %v2265, %v2300
        %v2303 = vunpack.c.l.s4 1985246804
        %v2304 = vunpack.c.0.s8 %v2303
        %v2305 = vlaneseq
        %v2306 = vshrl.u32 %v2305, 7
        %v2307 = vsub.s32 %v2304, %v2306
        %v2308 = vrot.slane %v2265, %v2307
        %v2310 = vunpack.c.l.s4 839922192
        %v2311 = vunpack.c.0.s8 %v2310
        %v2312 = vlaneseq
        %v2313 = vshrl.u32 %v2312, 7
        %v2314 = vsub.s32 %v2311, %v2313
        %v2315 = vrot.slane %v2268, %v2314
        %v2317 = vunpack.c.l.s4 1985246804
        %v2318 = vunpack.c.0.s8 %v2317
        %v2319 = vlaneseq
        %v2320 = vshrl.u32 %v2319, 7
        %v2321 = vsub.s32 %v2318, %v2320
        %v2322 = vrot.slane %v2268, %v2321
        %v2324 = vunpack.c.l.s4 839922192
        %v2325 = vunpack.c.0.s8 %v2324
        %v2326 = vlaneseq
        %v2327 = vshrl.u32 %v2326, 7
        %v2328 = vsub.s32 %v2325, %v2327
        %v2329 = vrot.slane %v2271, %v2328
        %v2331 = vunpack.c.l.s4 1985246804
        %v2332 = vunpack.c.0.s8 %v2331
        %v2333 = vlaneseq
        %v2334 = vshrl.u32 %v2333, 7
        %v2335 = vsub.s32 %v2332, %v2334
        %v2336 = vrot.slane %v2271, %v2335
        %v2338 = vunpack.c.l.s4 839922192
        %v2339 = vunpack.c.0.s8 %v2338
        %v2340 = vlaneseq
        %v2341 = vshrl.u32 %v2340, 7
        %v2342 = vsub.s32 %v2339, %v2341
        %v2343 = vrot.slane %v2274, %v2342
        %v2345 = vunpack.c.l.s4 1985246804
        %v2346 = vunpack.c.0.s8 %v2345
        %v2347 = vlaneseq
        %v2348 = vshrl.u32 %v2347, 7
        %v2349 = vsub.s32 %v2346, %v2348
        %v2350 = vrot.slane %v2274, %v2349
        %v2352 = vunpack.c.l.s4 839922192
        %v2353 = vunpack.c.0.s8 %v2352
        %v2354 = vlaneseq
        %v2355 = vshrl.u32 %v2354, 7
        %v2356 = vsub.s32 %v2353, %v2355
        %v2357 = vrot.slane %v2277, %v2356
        %v2359 = vunpack.c.l.s4 1985246804
        %v2360 = vunpack.c.0.s8 %v2359
        %v2361 = vlaneseq
        %v2362 = vshrl.u32 %v2361, 7
        %v2363 = vsub.s32 %v2360, %v2362
        %v2364 = vrot.slane %v2277, %v2363
        %v2366 = vunpack.c.l.s4 839922192
        %v2367 = vunpack.c.0.s8 %v2366
        %v2368 = vlaneseq
        %v2369 = vshrl.u32 %v2368, 7
        %v2370 = vsub.s32 %v2367, %v2369
        %v2371 = vrot.slane %v2280, %v2370
        %v2373 = vunpack.c.l.s4 1985246804
        %v2374 = vunpack.c.0.s8 %v2373
        %v2375 = vlaneseq
        %v2376 = vshrl.u32 %v2375, 7
        %v2377 = vsub.s32 %v2374, %v2376
        %v2378 = vrot.slane %v2280, %v2377
        %v2380 = vunpack.c.l.s4 839922192
        %v2381 = vunpack.c.0.s8 %v2380
        %v2382 = vlaneseq
        %v2383 = vshrl.u32 %v2382, 7
        %v2384 = vsub.s32 %v2381, %v2383
        %v2385 = vrot.slane %v2283, %v2384
        %v2387 = vunpack.c.l.s4 1985246804
        %v2388 = vunpack.c.0.s8 %v2387
        %v2389 = vlaneseq
        %v2390 = vshrl.u32 %v2389, 7
        %v2391 = vsub.s32 %v2388, %v2390
        %v2392 = vrot.slane %v2283, %v2391
        %v2394 = vunpack.c.l.s4 839922192
        %v2395 = vunpack.c.0.s8 %v2394
        %v2396 = vlaneseq
        %v2397 = vshrl.u32 %v2396, 7
        %v2398 = vsub.s32 %v2395, %v2397
        %v2399 = vrot.slane %v2286, %v2398
        %v2401 = vunpack.c.l.s4 1985246804
        %v2402 = vunpack.c.0.s8 %v2401
        %v2403 = vlaneseq
        %v2404 = vshrl.u32 %v2403, 7
        %v2405 = vsub.s32 %v2402, %v2404
        %v2406 = vrot.slane %v2286, %v2405
        %v2423 = vsub.f32 %v1998, %v2301
        %v2424 = vsub.f32 %v1999, %v2308
        %v2425 = vsub.f32 %v2000, %v2315
        %v2426 = vsub.f32 %v2001, %v2322
        %v2427 = vsub.f32 %v2002, %v2329
        %v2428 = vsub.f32 %v2003, %v2336
        %v2429 = vsub.f32 %v2004, %v2343
        %v2430 = vsub.f32 %v2005, %v2350
        %v2431 = vsub.f32 %v2006, %v2357
        %v2432 = vsub.f32 %v2007, %v2364
        %v2433 = vsub.f32 %v2008, %v2371
        %v2434 = vsub.f32 %v2009, %v2378
        %v2435 = vsub.f32 %v2010, %v2385
        %v2436 = vsub.f32 %v2011, %v2392
        %v2437 = vsub.f32 %v2012, %v2399
        %v2438 = vsub.f32 %v2013, %v2406
        %v2439 = vmul.f32 %v2423, 1.442695
        %v2440 = vpow.pop %v2439
        %v2441 = vmul.f32 %v2424, 1.442695
        %v2442 = vpow.pop %v2441
        %v2443 = vmul.f32 %v2425, 1.442695
        %v2444 = vpow.pop %v2443
        %v2445 = vmul.f32 %v2426, 1.442695
        %v2446 = vpow.pop %v2445
        %v2447 = vmul.f32 %v2427, 1.442695
        %v2448 = vpow.pop %v2447
        %v2449 = vmul.f32 %v2428, 1.442695
        %v2450 = vpow.pop %v2449
        %v2451 = vmul.f32 %v2429, 1.442695
        %v2452 = vpow.pop %v2451
        %v2453 = vmul.f32 %v2430, 1.442695
        %v2454 = vpow.pop %v2453
        %v2455 = vmul.f32 %v2431, 1.442695
        %v2456 = vpow.pop %v2455
        %v2457 = vmul.f32 %v2432, 1.442695
        %v2458 = vpow.pop %v2457
        %v2459 = vmul.f32 %v2433, 1.442695
        %v2460 = vpow.pop %v2459
        %v2461 = vmul.f32 %v2434, 1.442695
        %v2462 = vpow.pop %v2461
        %v2463 = vmul.f32 %v2435, 1.442695
        %v2464 = vpow.pop %v2463
        %v2465 = vmul.f32 %v2436, 1.442695
        %v2466 = vpow.pop %v2465
        %v2467 = vmul.f32 %v2437, 1.442695
        %v2468 = vpow.pop %v2467
        %v2469 = vmul.f32 %v2438, 1.442695
        %v2470 = vpow.pop %v2469
        %v2487 = vcombine.low %v2440, %v2442
        %v2488 = vcombine.low %v2444, %v2446
        %v2489 = vcombine.low %v2448, %v2450
        %v2490 = vcombine.low %v2452, %v2454
        %v2491 = vcombine.low %v2456, %v2458
        %v2492 = vcombine.low %v2460, %v2462
        %v2493 = vcombine.low %v2464, %v2466
        %v2494 = vcombine.low %v2468, %v2470
        %v2503 = vsel %vm2206, %v2487, 0.0
        %2504 = vadd.xlane.f32.xlu0 %v2503
        %v2505 = vpop.xlane.xlu0 %2504
        %v2506 = vsel %vm2206, %v2488, 0.0
        %2507 = vadd.xlane.f32.xlu0 %v2506
        %v2508 = vpop.xlane.xlu0 %2507
        %v2509 = vsel %vm2206, %v2489, 0.0
        %2510 = vadd.xlane.f32.xlu0 %v2509
        %v2511 = vpop.xlane.xlu0 %2510
        %v2512 = vsel %vm2206, %v2490, 0.0
        %2513 = vadd.xlane.f32.xlu0 %v2512
        %v2514 = vpop.xlane.xlu0 %2513
        %v2515 = vsel %vm2206, %v2491, 0.0
        %2516 = vadd.xlane.f32.xlu0 %v2515
        %v2517 = vpop.xlane.xlu0 %2516
        %v2518 = vsel %vm2206, %v2492, 0.0
        %2519 = vadd.xlane.f32.xlu0 %v2518
        %v2520 = vpop.xlane.xlu0 %2519
        %v2521 = vsel %vm2206, %v2493, 0.0
        %2522 = vadd.xlane.f32.xlu0 %v2521
        %v2523 = vpop.xlane.xlu0 %2522
        %v2524 = vsel %vm2206, %v2494, 0.0
        %2525 = vadd.xlane.f32.xlu0 %v2524
        %v2526 = vpop.xlane.xlu0 %2525
        %v2536 = vunpack.c.l.s4 839922192
        %v2537 = vunpack.c.0.s8 %v2536
        %v2538 = vlaneseq
        %v2539 = vshrl.u32 %v2538, 7
        %v2540 = vsub.s32 %v2537, %v2539
        %v2541 = vrot.slane %v2505, %v2540
        %v2543 = vunpack.c.l.s4 1985246804
        %v2544 = vunpack.c.0.s8 %v2543
        %v2545 = vlaneseq
        %v2546 = vshrl.u32 %v2545, 7
        %v2547 = vsub.s32 %v2544, %v2546
        %v2548 = vrot.slane %v2505, %v2547
        %v2550 = vunpack.c.l.s4 839922192
        %v2551 = vunpack.c.0.s8 %v2550
        %v2552 = vlaneseq
        %v2553 = vshrl.u32 %v2552, 7
        %v2554 = vsub.s32 %v2551, %v2553
        %v2555 = vrot.slane %v2508, %v2554
        %v2557 = vunpack.c.l.s4 1985246804
        %v2558 = vunpack.c.0.s8 %v2557
        %v2559 = vlaneseq
        %v2560 = vshrl.u32 %v2559, 7
        %v2561 = vsub.s32 %v2558, %v2560
        %v2562 = vrot.slane %v2508, %v2561
        %v2564 = vunpack.c.l.s4 839922192
        %v2565 = vunpack.c.0.s8 %v2564
        %v2566 = vlaneseq
        %v2567 = vshrl.u32 %v2566, 7
        %v2568 = vsub.s32 %v2565, %v2567
        %v2569 = vrot.slane %v2511, %v2568
        %v2571 = vunpack.c.l.s4 1985246804
        %v2572 = vunpack.c.0.s8 %v2571
        %v2573 = vlaneseq
        %v2574 = vshrl.u32 %v2573, 7
        %v2575 = vsub.s32 %v2572, %v2574
        %v2576 = vrot.slane %v2511, %v2575
        %v2578 = vunpack.c.l.s4 839922192
        %v2579 = vunpack.c.0.s8 %v2578
        %v2580 = vlaneseq
        %v2581 = vshrl.u32 %v2580, 7
        %v2582 = vsub.s32 %v2579, %v2581
        %v2583 = vrot.slane %v2514, %v2582
        %v2585 = vunpack.c.l.s4 1985246804
        %v2586 = vunpack.c.0.s8 %v2585
        %v2587 = vlaneseq
        %v2588 = vshrl.u32 %v2587, 7
        %v2589 = vsub.s32 %v2586, %v2588
        %v2590 = vrot.slane %v2514, %v2589
        %v2592 = vunpack.c.l.s4 839922192
        %v2593 = vunpack.c.0.s8 %v2592
        %v2594 = vlaneseq
        %v2595 = vshrl.u32 %v2594, 7
        %v2596 = vsub.s32 %v2593, %v2595
        %v2597 = vrot.slane %v2517, %v2596
        %v2599 = vunpack.c.l.s4 1985246804
        %v2600 = vunpack.c.0.s8 %v2599
        %v2601 = vlaneseq
        %v2602 = vshrl.u32 %v2601, 7
        %v2603 = vsub.s32 %v2600, %v2602
        %v2604 = vrot.slane %v2517, %v2603
        %v2606 = vunpack.c.l.s4 839922192
        %v2607 = vunpack.c.0.s8 %v2606
        %v2608 = vlaneseq
        %v2609 = vshrl.u32 %v2608, 7
        %v2610 = vsub.s32 %v2607, %v2609
        %v2611 = vrot.slane %v2520, %v2610
        %v2613 = vunpack.c.l.s4 1985246804
        %v2614 = vunpack.c.0.s8 %v2613
        %v2615 = vlaneseq
        %v2616 = vshrl.u32 %v2615, 7
        %v2617 = vsub.s32 %v2614, %v2616
        %v2618 = vrot.slane %v2520, %v2617
        %v2620 = vunpack.c.l.s4 839922192
        %v2621 = vunpack.c.0.s8 %v2620
        %v2622 = vlaneseq
        %v2623 = vshrl.u32 %v2622, 7
        %v2624 = vsub.s32 %v2621, %v2623
        %v2625 = vrot.slane %v2523, %v2624
        %v2627 = vunpack.c.l.s4 1985246804
        %v2628 = vunpack.c.0.s8 %v2627
        %v2629 = vlaneseq
        %v2630 = vshrl.u32 %v2629, 7
        %v2631 = vsub.s32 %v2628, %v2630
        %v2632 = vrot.slane %v2523, %v2631
        %v2634 = vunpack.c.l.s4 839922192
        %v2635 = vunpack.c.0.s8 %v2634
        %v2636 = vlaneseq
        %v2637 = vshrl.u32 %v2636, 7
        %v2638 = vsub.s32 %v2635, %v2637
        %v2639 = vrot.slane %v2526, %v2638
        %v2641 = vunpack.c.l.s4 1985246804
        %v2642 = vunpack.c.0.s8 %v2641
        %v2643 = vlaneseq
        %v2644 = vshrl.u32 %v2643, 7
        %v2645 = vsub.s32 %v2642, %v2644
        %v2646 = vrot.slane %v2526, %v2645
        %v2663 = vrcp.pop %v2541
        %v2664 = vmul.f32 %v2440, %v2663
        %v2665 = vrcp.pop %v2548
        %v2666 = vmul.f32 %v2442, %v2665
        %v2667 = vrcp.pop %v2555
        %v2668 = vmul.f32 %v2444, %v2667
        %v2669 = vrcp.pop %v2562
        %v2670 = vmul.f32 %v2446, %v2669
        %v2671 = vrcp.pop %v2569
        %v2672 = vmul.f32 %v2448, %v2671
        %v2673 = vrcp.pop %v2576
        %v2674 = vmul.f32 %v2450, %v2673
        %v2675 = vrcp.pop %v2583
        %v2676 = vmul.f32 %v2452, %v2675
        %v2677 = vrcp.pop %v2590
        %v2678 = vmul.f32 %v2454, %v2677
        %v2679 = vrcp.pop %v2597
        %v2680 = vmul.f32 %v2456, %v2679
        %v2681 = vrcp.pop %v2604
        %v2682 = vmul.f32 %v2458, %v2681
        %v2683 = vrcp.pop %v2611
        %v2684 = vmul.f32 %v2460, %v2683
        %v2685 = vrcp.pop %v2618
        %v2686 = vmul.f32 %v2462, %v2685
        %v2687 = vrcp.pop %v2625
        %v2688 = vmul.f32 %v2464, %v2687
        %v2689 = vrcp.pop %v2632
        %v2690 = vmul.f32 %v2466, %v2689
        %v2691 = vrcp.pop %v2639
        %v2692 = vmul.f32 %v2468, %v2691
        %v2693 = vrcp.pop %v2646
        %v2694 = vmul.f32 %v2470, %v2693
        %v2711 = vcombine.low %v2664, %v2666
        %v2712 = vcombine.low %v2668, %v2670
        %v2713 = vcombine.low %v2672, %v2674
        %v2714 = vcombine.low %v2676, %v2678
        %v2715 = vcombine.low %v2680, %v2682
        %v2716 = vcombine.low %v2684, %v2686
        %v2717 = vcombine.low %v2688, %v2690
        %v2718 = vcombine.low %v2692, %v2694
        %v2727 = vpack.c.bf16 %v2712, %v2711
        %v2728 = vpack.c.bf16 %v2714, %v2713
        %v2729 = vpack.c.bf16 %v2716, %v2715
        %v2730 = vpack.c.bf16 %v2718, %v2717
        %v2732 = vsel %vm2206, %v2727, 0
        %2734 = vmatprep.subr.bf16.mxu0 0
        %2735 = vmatpush1.bf16.msra.mxu0 %v1590
        %2736 = vmatprep.subr.bf16.mxu0 0
        %2737 = vmatpush1.bf16.msra.mxu0 0
        %2738 = vmatprep.subr.bf16.mxu0 0
        %2739 = vmatpush1.bf16.msra.mxu0 0
        %2740 = vmatprep.subr.bf16.mxu0 0
        %2741 = vmatpush1.bf16.msra.mxu0 0
        %2742 = vmatprep.subr.bf16.mxu0 0
        %2743 = vmatpush1.bf16.msra.mxu0 0
        %2744 = vmatprep.subr.bf16.mxu0 0
        %2745 = vmatpush1.bf16.msra.mxu0 0
        %2746 = vmatprep.subr.bf16.mxu0 0
        %2747 = vmatpush1.bf16.msra.mxu0 0
        %2748 = vmatprep.subr.bf16.mxu0 0
        %2749 = vmatpush1.bf16.msra.mxu0 0
        %2750 = vmatprep.subr.bf16.mxu0 0
        %2751 = vmatpush1.bf16.msra.mxu0 0
        %2752 = vmatprep.subr.bf16.mxu0 0
        %2753 = vmatpush1.bf16.msra.mxu0 0
        %2754 = vmatprep.subr.bf16.mxu0 0
        %2755 = vmatpush1.bf16.msra.mxu0 0
        %2756 = vmatprep.subr.bf16.mxu0 0
        %2757 = vmatpush1.bf16.msra.mxu0 0
        %2758 = vmatprep.subr.bf16.mxu0 0
        %2759 = vmatpush1.bf16.msra.mxu0 0
        %2760 = vmatprep.subr.bf16.mxu0 0
        %2761 = vmatpush1.bf16.msra.mxu0 0
        %2762 = vmatprep.subr.bf16.mxu0 0
        %2763 = vmatpush1.bf16.msra.mxu0 0
        %2764 = vmatprep.subr.bf16.mxu0 0
        %2765 = vmatpush1.bf16.msra.mxu0 0
        %2766 = vmatprep.mubr.bf16.mxu0 0
        %2767 = vmatmul.mubr.bf16.gmra.mrb[0].mxu0 %v2732
        %v2768 = vpop.f32.mrb[0].mxu0
        %v2769 = vadd.f32 0.0, %v2768
        %v2770 = vpop.f32.mrb[0].mxu0
        %v2771 = vpop.f32.mrb[0].mxu0
        %v2772 = vadd.f32 0.0, %v2771
        %v2773 = vpop.f32.mrb[0].mxu0
        %2774 = vdwg.mxu0
        %v2776 = vsel %vm2206, %v2728, 0
        %2778 = vmatprep.subr.bf16.mxu0 0
        %2779 = vmatpush1.bf16.msra.mxu0 %v1591
        %2780 = vmatprep.subr.bf16.mxu0 0
        %2781 = vmatpush1.bf16.msra.mxu0 0
        %2782 = vmatprep.subr.bf16.mxu0 0
        %2783 = vmatpush1.bf16.msra.mxu0 0
        %2784 = vmatprep.subr.bf16.mxu0 0
        %2785 = vmatpush1.bf16.msra.mxu0 0
        %2786 = vmatprep.subr.bf16.mxu0 0
        %2787 = vmatpush1.bf16.msra.mxu0 0
        %2788 = vmatprep.subr.bf16.mxu0 0
        %2789 = vmatpush1.bf16.msra.mxu0 0
        %2790 = vmatprep.subr.bf16.mxu0 0
        %2791 = vmatpush1.bf16.msra.mxu0 0
        %2792 = vmatprep.subr.bf16.mxu0 0
        %2793 = vmatpush1.bf16.msra.mxu0 0
        %2794 = vmatprep.subr.bf16.mxu0 0
        %2795 = vmatpush1.bf16.msra.mxu0 0
        %2796 = vmatprep.subr.bf16.mxu0 0
        %2797 = vmatpush1.bf16.msra.mxu0 0
        %2798 = vmatprep.subr.bf16.mxu0 0
        %2799 = vmatpush1.bf16.msra.mxu0 0
        %2800 = vmatprep.subr.bf16.mxu0 0
        %2801 = vmatpush1.bf16.msra.mxu0 0
        %2802 = vmatprep.subr.bf16.mxu0 0
        %2803 = vmatpush1.bf16.msra.mxu0 0
        %2804 = vmatprep.subr.bf16.mxu0 0
        %2805 = vmatpush1.bf16.msra.mxu0 0
        %2806 = vmatprep.subr.bf16.mxu0 0
        %2807 = vmatpush1.bf16.msra.mxu0 0
        %2808 = vmatprep.subr.bf16.mxu0 0
        %2809 = vmatpush1.bf16.msra.mxu0 0
        %2810 = vmatprep.mubr.bf16.mxu0 0
        %2811 = vmatmul.mubr.bf16.gmra.mrb[0].mxu0 %v2776
        %v2812 = vpop.f32.mrb[0].mxu0
        %v2813 = vadd.f32 0.0, %v2812
        %v2814 = vpop.f32.mrb[0].mxu0
        %v2815 = vpop.f32.mrb[0].mxu0
        %v2816 = vadd.f32 0.0, %v2815
        %v2817 = vpop.f32.mrb[0].mxu0
        %2818 = vdwg.mxu0
        %v2820 = vsel %vm2206, %v2729, 0
        %2822 = vmatprep.subr.bf16.mxu0 0
        %2823 = vmatpush1.bf16.msra.mxu0 %v1592
        %2824 = vmatprep.subr.bf16.mxu0 0
        %2825 = vmatpush1.bf16.msra.mxu0 0
        %2826 = vmatprep.subr.bf16.mxu0 0
        %2827 = vmatpush1.bf16.msra.mxu0 0
        %2828 = vmatprep.subr.bf16.mxu0 0
        %2829 = vmatpush1.bf16.msra.mxu0 0
        %2830 = vmatprep.subr.bf16.mxu0 0
        %2831 = vmatpush1.bf16.msra.mxu0 0
        %2832 = vmatprep.subr.bf16.mxu0 0
        %2833 = vmatpush1.bf16.msra.mxu0 0
        %2834 = vmatprep.subr.bf16.mxu0 0
        %2835 = vmatpush1.bf16.msra.mxu0 0
        %2836 = vmatprep.subr.bf16.mxu0 0
        %2837 = vmatpush1.bf16.msra.mxu0 0
        %2838 = vmatprep.subr.bf16.mxu0 0
        %2839 = vmatpush1.bf16.msra.mxu0 0
        %2840 = vmatprep.subr.bf16.mxu0 0
        %2841 = vmatpush1.bf16.msra.mxu0 0
        %2842 = vmatprep.subr.bf16.mxu0 0
        %2843 = vmatpush1.bf16.msra.mxu0 0
        %2844 = vmatprep.subr.bf16.mxu0 0
        %2845 = vmatpush1.bf16.msra.mxu0 0
        %2846 = vmatprep.subr.bf16.mxu0 0
        %2847 = vmatpush1.bf16.msra.mxu0 0
        %2848 = vmatprep.subr.bf16.mxu0 0
        %2849 = vmatpush1.bf16.msra.mxu0 0
        %2850 = vmatprep.subr.bf16.mxu0 0
        %2851 = vmatpush1.bf16.msra.mxu0 0
        %2852 = vmatprep.subr.bf16.mxu0 0
        %2853 = vmatpush1.bf16.msra.mxu0 0
        %2854 = vmatprep.mubr.bf16.mxu0 0
        %2855 = vmatmul.mubr.bf16.gmra.mrb[0].mxu0 %v2820
        %v2856 = vpop.f32.mrb[0].mxu0
        %v2857 = vadd.f32 0.0, %v2856
        %v2858 = vpop.f32.mrb[0].mxu0
        %v2859 = vpop.f32.mrb[0].mxu0
        %v2860 = vadd.f32 0.0, %v2859
        %v2861 = vpop.f32.mrb[0].mxu0
        %2862 = vdwg.mxu0
        %v2864 = vsel %vm2206, %v2730, 0
        %2866 = vmatprep.subr.bf16.mxu0 0
        %2867 = vmatpush1.bf16.msra.mxu0 %v1593
        %2868 = vmatprep.subr.bf16.mxu0 0
        %2869 = vmatpush1.bf16.msra.mxu0 0
        %2870 = vmatprep.subr.bf16.mxu0 0
        %2871 = vmatpush1.bf16.msra.mxu0 0
        %2872 = vmatprep.subr.bf16.mxu0 0
        %2873 = vmatpush1.bf16.msra.mxu0 0
        %2874 = vmatprep.subr.bf16.mxu0 0
        %2875 = vmatpush1.bf16.msra.mxu0 0
        %2876 = vmatprep.subr.bf16.mxu0 0
        %2877 = vmatpush1.bf16.msra.mxu0 0
        %2878 = vmatprep.subr.bf16.mxu0 0
        %2879 = vmatpush1.bf16.msra.mxu0 0
        %2880 = vmatprep.subr.bf16.mxu0 0
        %2881 = vmatpush1.bf16.msra.mxu0 0
        %2882 = vmatprep.subr.bf16.mxu0 0
        %2883 = vmatpush1.bf16.msra.mxu0 0
        %2884 = vmatprep.subr.bf16.mxu0 0
        %2885 = vmatpush1.bf16.msra.mxu0 0
        %2886 = vmatprep.subr.bf16.mxu0 0
        %2887 = vmatpush1.bf16.msra.mxu0 0
        %2888 = vmatprep.subr.bf16.mxu0 0
        %2889 = vmatpush1.bf16.msra.mxu0 0
        %2890 = vmatprep.subr.bf16.mxu0 0
        %2891 = vmatpush1.bf16.msra.mxu0 0
        %2892 = vmatprep.subr.bf16.mxu0 0
        %2893 = vmatpush1.bf16.msra.mxu0 0
        %2894 = vmatprep.subr.bf16.mxu0 0
        %2895 = vmatpush1.bf16.msra.mxu0 0
        %2896 = vmatprep.subr.bf16.mxu0 0
        %2897 = vmatpush1.bf16.msra.mxu0 0
        %2898 = vmatprep.mubr.bf16.mxu0 0
        %2899 = vmatmul.mubr.bf16.gmra.mrb[0].mxu0 %v2864
        %v2900 = vpop.f32.mrb[0].mxu0
        %v2901 = vadd.f32 0.0, %v2900
        %v2902 = vpop.f32.mrb[0].mxu0
        %v2903 = vpop.f32.mrb[0].mxu0
        %v2904 = vadd.f32 0.0, %v2903
        %v2905 = vpop.f32.mrb[0].mxu0
        %2906 = vdwg.mxu0
        %v2907 = vcombine.low %v2769, %v2857
        %v2908 = vcombine.high %v2769, %v2857
        %v2910 = vunpack.c.l.s4 1983009808
        %v2911 = vunpack.c.0.s8 %v2910
        %v2912 = vlaneseq
        %v2913 = vshrl.u32 %v2912, 7
        %v2914 = vsub.s32 %v2911, %v2913
        %v2915 = vrot.slane %v2907, %v2914
        %v2917 = vunpack.c.l.s4 1983009808
        %v2918 = vunpack.c.0.s8 %v2917
        %v2919 = vlaneseq
        %v2920 = vshrl.u32 %v2919, 7
        %v2921 = vsub.s32 %v2918, %v2920
        %v2922 = vrot.slane %v2908, %v2921
        %v2923 = vcombine.low %v2813, %v2901
        %v2924 = vcombine.high %v2813, %v2901
        %v2926 = vunpack.c.l.s4 1983009808
        %v2927 = vunpack.c.0.s8 %v2926
        %v2928 = vlaneseq
        %v2929 = vshrl.u32 %v2928, 7
        %v2930 = vsub.s32 %v2927, %v2929
        %v2931 = vrot.slane %v2923, %v2930
        %v2933 = vunpack.c.l.s4 1983009808
        %v2934 = vunpack.c.0.s8 %v2933
        %v2935 = vlaneseq
        %v2936 = vshrl.u32 %v2935, 7
        %v2937 = vsub.s32 %v2934, %v2936
        %v2938 = vrot.slane %v2924, %v2937
        %v2939 = vcombine.low %v2915, %v2931
        %v2940 = vcombine.high %v2915, %v2931
        %v2942 = vunpack.c.l.s4 1934713408
        %v2943 = vunpack.c.0.s8 %v2942
        %v2944 = vlaneseq
        %v2945 = vshrl.u32 %v2944, 7
        %v2946 = vsub.s32 %v2943, %v2945
        %v2947 = vrot.slane %v2939, %v2946
        %v2949 = vunpack.c.l.s4 1934713408
        %v2950 = vunpack.c.0.s8 %v2949
        %v2951 = vlaneseq
        %v2952 = vshrl.u32 %v2951, 7
        %v2953 = vsub.s32 %v2950, %v2952
        %v2954 = vrot.slane %v2940, %v2953
        %v2955 = vcombine.low %v2922, %v2938
        %v2956 = vcombine.high %v2922, %v2938
        %v2958 = vunpack.c.l.s4 1934713408
        %v2959 = vunpack.c.0.s8 %v2958
        %v2960 = vlaneseq
        %v2961 = vshrl.u32 %v2960, 7
        %v2962 = vsub.s32 %v2959, %v2961
        %v2963 = vrot.slane %v2955, %v2962
        %v2965 = vunpack.c.l.s4 1934713408
        %v2966 = vunpack.c.0.s8 %v2965
        %v2967 = vlaneseq
        %v2968 = vshrl.u32 %v2967, 7
        %v2969 = vsub.s32 %v2966, %v2968
        %v2970 = vrot.slane %v2956, %v2969
        %v2971 = vcombine.high %v2947, 0.0
        %v2972 = vcombine.high %v2954, 0.0
        %v2973 = vcombine.high %v2963, 0.0
        %v2974 = vcombine.high %v2970, 0.0
        %v2975 = vcombine.low %v2772, %v2860
        %v2976 = vcombine.high %v2772, %v2860
        %v2978 = vunpack.c.l.s4 1983009808
        %v2979 = vunpack.c.0.s8 %v2978
        %v2980 = vlaneseq
        %v2981 = vshrl.u32 %v2980, 7
        %v2982 = vsub.s32 %v2979, %v2981
        %v2983 = vrot.slane %v2975, %v2982
        %v2985 = vunpack.c.l.s4 1983009808
        %v2986 = vunpack.c.0.s8 %v2985
        %v2987 = vlaneseq
        %v2988 = vshrl.u32 %v2987, 7
        %v2989 = vsub.s32 %v2986, %v2988
        %v2990 = vrot.slane %v2976, %v2989
        %v2991 = vcombine.low %v2816, %v2904
        %v2992 = vcombine.high %v2816, %v2904
        %v2994 = vunpack.c.l.s4 1983009808
        %v2995 = vunpack.c.0.s8 %v2994
        %v2996 = vlaneseq
        %v2997 = vshrl.u32 %v2996, 7
        %v2998 = vsub.s32 %v2995, %v2997
        %v2999 = vrot.slane %v2991, %v2998
        %v3001 = vunpack.c.l.s4 1983009808
        %v3002 = vunpack.c.0.s8 %v3001
        %v3003 = vlaneseq
        %v3004 = vshrl.u32 %v3003, 7
        %v3005 = vsub.s32 %v3002, %v3004
        %v3006 = vrot.slane %v2992, %v3005
        %v3007 = vcombine.low %v2983, %v2999
        %v3008 = vcombine.high %v2983, %v2999
        %v3010 = vunpack.c.l.s4 1934713408
        %v3011 = vunpack.c.0.s8 %v3010
        %v3012 = vlaneseq
        %v3013 = vshrl.u32 %v3012, 7
        %v3014 = vsub.s32 %v3011, %v3013
        %v3015 = vrot.slane %v3007, %v3014
        %v3017 = vunpack.c.l.s4 1934713408
        %v3018 = vunpack.c.0.s8 %v3017
        %v3019 = vlaneseq
        %v3020 = vshrl.u32 %v3019, 7
        %v3021 = vsub.s32 %v3018, %v3020
        %v3022 = vrot.slane %v3008, %v3021
        %v3023 = vcombine.low %v2990, %v3006
        %v3024 = vcombine.high %v2990, %v3006
        %v3026 = vunpack.c.l.s4 1934713408
        %v3027 = vunpack.c.0.s8 %v3026
        %v3028 = vlaneseq
        %v3029 = vshrl.u32 %v3028, 7
        %v3030 = vsub.s32 %v3027, %v3029
        %v3031 = vrot.slane %v3023, %v3030
        %v3033 = vunpack.c.l.s4 1934713408
        %v3034 = vunpack.c.0.s8 %v3033
        %v3035 = vlaneseq
        %v3036 = vshrl.u32 %v3035, 7
        %v3037 = vsub.s32 %v3034, %v3036
        %v3038 = vrot.slane %v3024, %v3037
        %v3039 = vcombine.high %v3015, 0.0
        %v3040 = vcombine.high %v3022, 0.0
        %v3041 = vcombine.high %v3031, 0.0
        %v3042 = vcombine.high %v3038, 0.0
        %v3043 = vcombine.low %v2947, %v2954
        %v3045 = vunpack.c.l.s4 1983009808
        %v3046 = vunpack.c.0.s8 %v3045
        %v3047 = vlaneseq
        %v3048 = vshrl.u32 %v3047, 7
        %v3049 = vsub.s32 %v3046, %v3048
        %v3050 = vrot.slane %v3043, %v3049
        %v3051 = vcombine.low %v2971, %v2972
        %v3053 = vunpack.c.l.s4 1983009808
        %v3054 = vunpack.c.0.s8 %v3053
        %v3055 = vlaneseq
        %v3056 = vshrl.u32 %v3055, 7
        %v3057 = vsub.s32 %v3054, %v3056
        %v3058 = vrot.slane %v3051, %v3057
        %v3059 = vcombine.low %v2963, %v2970
        %v3061 = vunpack.c.l.s4 1983009808
        %v3062 = vunpack.c.0.s8 %v3061
        %v3063 = vlaneseq
        %v3064 = vshrl.u32 %v3063, 7
        %v3065 = vsub.s32 %v3062, %v3064
        %v3066 = vrot.slane %v3059, %v3065
        %v3067 = vcombine.low %v2973, %v2974
        %v3069 = vunpack.c.l.s4 1983009808
        %v3070 = vunpack.c.0.s8 %v3069
        %v3071 = vlaneseq
        %v3072 = vshrl.u32 %v3071, 7
        %v3073 = vsub.s32 %v3070, %v3072
        %v3074 = vrot.slane %v3067, %v3073
        %v3075 = vcombine.low %v3050, %v3058
        %v3076 = vcombine.high %v3050, %v3058
        %v3078 = vunpack.c.l.s4 1934713408
        %v3079 = vunpack.c.0.s8 %v3078
        %v3080 = vlaneseq
        %v3081 = vshrl.u32 %v3080, 7
        %v3082 = vsub.s32 %v3079, %v3081
        %v3083 = vrot.slane %v3075, %v3082
        %v3085 = vunpack.c.l.s4 1934713408
        %v3086 = vunpack.c.0.s8 %v3085
        %v3087 = vlaneseq
        %v3088 = vshrl.u32 %v3087, 7
        %v3089 = vsub.s32 %v3086, %v3088
        %v3090 = vrot.slane %v3076, %v3089
        %v3091 = vcombine.low %v3066, %v3074
        %v3092 = vcombine.high %v3066, %v3074
        %v3094 = vunpack.c.l.s4 1934713408
        %v3095 = vunpack.c.0.s8 %v3094
        %v3096 = vlaneseq
        %v3097 = vshrl.u32 %v3096, 7
        %v3098 = vsub.s32 %v3095, %v3097
        %v3099 = vrot.slane %v3091, %v3098
        %v3101 = vunpack.c.l.s4 1934713408
        %v3102 = vunpack.c.0.s8 %v3101
        %v3103 = vlaneseq
        %v3104 = vshrl.u32 %v3103, 7
        %v3105 = vsub.s32 %v3102, %v3104
        %v3106 = vrot.slane %v3092, %v3105
        %v3107 = vcombine.low %v3083, %v3099
        %v3108 = vcombine.high %v3083, %v3099
        %v3109 = vcombine.low %v3090, %v3106
        %v3110 = vcombine.high %v3090, %v3106
        %v3111 = vcombine.low %v3015, %v3022
        %v3113 = vunpack.c.l.s4 1983009808
        %v3114 = vunpack.c.0.s8 %v3113
        %v3115 = vlaneseq
        %v3116 = vshrl.u32 %v3115, 7
        %v3117 = vsub.s32 %v3114, %v3116
        %v3118 = vrot.slane %v3111, %v3117
        %v3119 = vcombine.low %v3039, %v3040
        %v3121 = vunpack.c.l.s4 1983009808
        %v3122 = vunpack.c.0.s8 %v3121
        %v3123 = vlaneseq
        %v3124 = vshrl.u32 %v3123, 7
        %v3125 = vsub.s32 %v3122, %v3124
        %v3126 = vrot.slane %v3119, %v3125
        %v3127 = vcombine.low %v3031, %v3038
        %v3129 = vunpack.c.l.s4 1983009808
        %v3130 = vunpack.c.0.s8 %v3129
        %v3131 = vlaneseq
        %v3132 = vshrl.u32 %v3131, 7
        %v3133 = vsub.s32 %v3130, %v3132
        %v3134 = vrot.slane %v3127, %v3133
        %v3135 = vcombine.low %v3041, %v3042
        %v3137 = vunpack.c.l.s4 1983009808
        %v3138 = vunpack.c.0.s8 %v3137
        %v3139 = vlaneseq
        %v3140 = vshrl.u32 %v3139, 7
        %v3141 = vsub.s32 %v3138, %v3140
        %v3142 = vrot.slane %v3135, %v3141
        %v3143 = vcombine.low %v3118, %v3126
        %v3144 = vcombine.high %v3118, %v3126
        %v3146 = vunpack.c.l.s4 1934713408
        %v3147 = vunpack.c.0.s8 %v3146
        %v3148 = vlaneseq
        %v3149 = vshrl.u32 %v3148, 7
        %v3150 = vsub.s32 %v3147, %v3149
        %v3151 = vrot.slane %v3143, %v3150
        %v3153 = vunpack.c.l.s4 1934713408
        %v3154 = vunpack.c.0.s8 %v3153
        %v3155 = vlaneseq
        %v3156 = vshrl.u32 %v3155, 7
        %v3157 = vsub.s32 %v3154, %v3156
        %v3158 = vrot.slane %v3144, %v3157
        %v3159 = vcombine.low %v3134, %v3142
        %v3160 = vcombine.high %v3134, %v3142
        %v3162 = vunpack.c.l.s4 1934713408
        %v3163 = vunpack.c.0.s8 %v3162
        %v3164 = vlaneseq
        %v3165 = vshrl.u32 %v3164, 7
        %v3166 = vsub.s32 %v3163, %v3165
        %v3167 = vrot.slane %v3159, %v3166
        %v3169 = vunpack.c.l.s4 1934713408
        %v3170 = vunpack.c.0.s8 %v3169
        %v3171 = vlaneseq
        %v3172 = vshrl.u32 %v3171, 7
        %v3173 = vsub.s32 %v3170, %v3172
        %v3174 = vrot.slane %v3160, %v3173
        %v3175 = vcombine.low %v3151, %v3167
        %v3176 = vcombine.high %v3151, %v3167
        %v3177 = vcombine.low %v3158, %v3174
        %v3178 = vcombine.high %v3158, %v3174
        %3181 = vrot.lane.b32.xlu0 %v3108, 32
        %v3182 = vpop.permute.xlu0 %3181
        %3183 = vrot.lane.b32.xlu0 %v3176, 32
        %v3184 = vpop.permute.xlu0 %3183
        %3189 = vrot.lane.b32.xlu0 %v3109, 64
        %v3190 = vpop.permute.xlu0 %3189
        %3191 = vrot.lane.b32.xlu0 %v3177, 64
        %v3192 = vpop.permute.xlu0 %3191
        %3197 = vrot.lane.b32.xlu0 %v3110, 96
        %v3198 = vpop.permute.xlu0 %3197
        %3199 = vrot.lane.b32.xlu0 %v3178, 96
        %v3200 = vpop.permute.xlu0 %3199
        %v3203 = vsel %vm1594, %v3107, %v3182
        %v3204 = vsel %vm1594, %v3175, %v3184
        %v3205 = vsel %vm2211, %v3203, %v3190
        %v3206 = vsel %vm2211, %v3204, %v3192
        %v3207 = vsel %vm2215, %v3205, %v3198
        %v3208 = vsel %vm2215, %v3206, %v3200
        %v3209 = vpack.c.bf16 %v3208, %v3207
        %s3210 = scalar_lea.vmem %s4, 192
        %v3211 = vld [vmem:[%s3210] sm:$0xf]
        %v3212 = vld [vmem:[%s3210 + $0x4] sm:$0xf]
        %v3213 = vld [vmem:[%s3210 + $0x8] sm:$0xf]
        %v3214 = vld [vmem:[%s3210 + $0xc] sm:$0xf]
        %v3215 = vld [vmem:[%s3210 + $0x10] sm:$0xf]
        %v3216 = vld [vmem:[%s3210 + $0x14] sm:$0xf]
        %v3217 = vld [vmem:[%s3210 + $0x18] sm:$0xf]
        %v3218 = vld [vmem:[%s3210 + $0x1c] sm:$0xf]
        %v3219 = vld [vmem:[%s3210 + $0x20] sm:$0xf]
        %v3220 = vld [vmem:[%s3210 + $0x24] sm:$0xf]
        %v3221 = vld [vmem:[%s3210 + $0x28] sm:$0xf]
        %v3222 = vld [vmem:[%s3210 + $0x2c] sm:$0xf]
        %v3223 = vld [vmem:[%s3210 + $0x30] sm:$0xf]
        %v3224 = vld [vmem:[%s3210 + $0x34] sm:$0xf]
        %v3225 = vld [vmem:[%s3210 + $0x38] sm:$0xf]
        %v3226 = vld [vmem:[%s3210 + $0x3c] sm:$0xf]
        %s3227 = scalar_lea.vmem %s5, 3
        %v3228 = vld [vmem:[%s3227] sm:$0x1]
        %v3230 = vlaneseq
        %v3231 = vshrl.u32 %v3230, 7
        %v3232 = vsub.s32 0, %v3231
        %v3233 = vrot.slane %v3228, %v3232
        %v3251 = vunpack.c.l.b16 %v3211
        %v3252 = vunpack.c.l.b16 %v3212
        %v3253 = vunpack.c.l.b16 %v3213
        %v3254 = vunpack.c.l.b16 %v3214
        %v3255 = vunpack.c.l.b16 %v3215
        %v3256 = vunpack.c.l.b16 %v3216
        %v3257 = vunpack.c.l.b16 %v3217
        %v3258 = vunpack.c.l.b16 %v3218
        %v3259 = vunpack.c.l.b16 %v3219
        %v3260 = vunpack.c.l.b16 %v3220
        %v3261 = vunpack.c.l.b16 %v3221
        %v3262 = vunpack.c.l.b16 %v3222
        %v3263 = vunpack.c.l.b16 %v3223
        %v3264 = vunpack.c.l.b16 %v3224
        %v3265 = vunpack.c.l.b16 %v3225
        %v3266 = vunpack.c.l.b16 %v3226
        %v3267 = vpack.c.b16 %v3252, %v3251
        %v3268 = vpack.c.b16 %v3254, %v3253
        %v3269 = vpack.c.b16 %v3256, %v3255
        %v3270 = vpack.c.b16 %v3258, %v3257
        %v3271 = vpack.c.b16 %v3260, %v3259
        %v3272 = vpack.c.b16 %v3262, %v3261
        %v3273 = vpack.c.b16 %v3264, %v3263
        %v3274 = vpack.c.b16 %v3266, %v3265
        %3283 = vmatprep.subr.bf16.mxu0 0
        %3284 = vmatpush1.bf16.msra.mxu0 %v3267
        %3285 = vmatprep.subr.bf16.mxu0 0
        %3286 = vmatpush1.bf16.msra.mxu0 %v3268
        %3287 = vmatprep.subr.bf16.mxu0 0
        %3288 = vmatpush1.bf16.msra.mxu0 %v3269
        %3289 = vmatprep.subr.bf16.mxu0 0
        %3290 = vmatpush1.bf16.msra.mxu0 %v3270
        %3291 = vmatprep.subr.bf16.mxu0 0
        %3292 = vmatpush1.bf16.msra.mxu0 %v3271
        %3293 = vmatprep.subr.bf16.mxu0 0
        %3294 = vmatpush1.bf16.msra.mxu0 %v3272
        %3295 = vmatprep.subr.bf16.mxu0 0
        %3296 = vmatpush1.bf16.msra.mxu0 %v3273
        %3297 = vmatprep.subr.bf16.mxu0 0
        %3298 = vmatpush1.bf16.msra.mxu0 %v3274
        %3299 = vmatprep.subr.bf16.mxu0 0
        %3300 = vmatpush1.bf16.msra.mxu0 0
        %3301 = vmatprep.subr.bf16.mxu0 0
        %3302 = vmatpush1.bf16.msra.mxu0 0
        %3303 = vmatprep.subr.bf16.mxu0 0
        %3304 = vmatpush1.bf16.msra.mxu0 0
        %3305 = vmatprep.subr.bf16.mxu0 0
        %3306 = vmatpush1.bf16.msra.mxu0 0
        %3307 = vmatprep.subr.bf16.mxu0 0
        %3308 = vmatpush1.bf16.msra.mxu0 0
        %3309 = vmatprep.subr.bf16.mxu0 0
        %3310 = vmatpush1.bf16.msra.mxu0 0
        %3311 = vmatprep.subr.bf16.mxu0 0
        %3312 = vmatpush1.bf16.msra.mxu0 0
        %3313 = vmatprep.subr.bf16.mxu0 0
        %3314 = vmatpush1.bf16.msra.mxu0 0
        %3315 = vmatprep.mubr.bf16.mxu0 0
        %3316 = vmatmul.mubr.bf16.gmra.mrb[0].mxu0 %v3209
        %v3317 = vpop.f32.mrb[0].mxu0
        %v3318 = vadd.f32 %v3233, %v3317
        %v3319 = vpop.f32.mrb[0].mxu0
        %v3320 = vpop.f32.mrb[0].mxu0
        %v3321 = vadd.f32 %v3233, %v3320
        %v3322 = vpop.f32.mrb[0].mxu0
        %3323 = vdwg.mxu0
        %v3324 = vmax.f32 %v3318, 0.0
        %v3325 = vmax.f32 %v3321, 0.0
        %3326 = vst [vmem:[%s317] sm:$0xff] %v3324
        %3327 = vst [vmem:[%s317 + $0x8] sm:$0xff] %v3325
        %s3328 = sand.u32 %s176, 1
        %s3329 = scalar_lea.sflag [#allocation3], %s3328
        %s3330 = sand.u32 %s176, 1
        %s3331 = smul.addr %s3330, 16
        %s3332 = scalar_lea.vmem [#allocation2], %s3331
        %p3333 = scmp.lt.s32.totalorder %s22, 1
        %s3334 = scalar_select %p3333, %s22, 1
        %s3335 = smul.addr %s3334, 2
        %s3336 = smul.addr %s3335, 4
        %s3337 = scalar_lea.vmem %s7, %s3336
        // Predicated region
        $region45: #{multi_head_attention.1} parent=43 // pred_check
          %p3338 = pneg %p186
        $region46: #{multi_head_attention.1} parent=43 // pred_check_branch
          %3340 = sbr.rel (%p3338) target = $region48
        $region47: #{multi_head_attention.1} parent=43 // pred_region
          %s3342 = ssub.s32 256, 256
          %3343 = vsyncadd %s3329, %s3342
          %s3344 = smul.addr %s22, 2
          %s3345 = smul.addr %s3344, 128
          %s3346 = scalar_lea.hbm %s6, %s3345
          %s3347 = sshll.u32 %s3332, 4
          %s3348 = int_to_ptr.vmem [resolvable:$true] %s3347
          %3353 = dma.vmem_to_hbm [thread:$0]  %s3348, 256, %s3346, %s3329, 128, 128, 8
        $region48: #{multi_head_attention.1} parent=43 // pred_fallthru
          _
        // Predicated region
        $region49: #{multi_head_attention.1} parent=43 // pred_check
          %p3354 = pneg %p212
        $region50: #{multi_head_attention.1} parent=43 // pred_check_branch
          %3356 = sbr.rel (%p3354) target = $region52
        $region51: #{multi_head_attention.1} parent=43 // pred_region
          _
        $region52: #{multi_head_attention.1} parent=43 // pred_fallthru
          _
      $region44: #{multi_head_attention.1} parent=5 // pred_fallthru
        _
      %p3357 = scmp.le.s32.totalorder 2, %s17
      // Predicated region
      $region53: #{multi_head_attention.1} parent=5 // pred_check
        %p3358 = pneg %p3357
      $region54: #{multi_head_attention.1} parent=5 // pred_check_branch
        %3360 = sbr.rel (%p3358) target = $region56
      $region55: #{multi_head_attention.1} parent=5 // pred_region
        %s3361 = ssub.s32 %s17, 2
        // Predicated region
        $region57: #{multi_head_attention.1} parent=55 // pred_check
          %p3362 = pneg %p192
        $region58: #{multi_head_attention.1} parent=55 // pred_check_branch
          %3364 = sbr.rel (%p3362) target = $region60
        $region59: #{multi_head_attention.1} parent=55 // pred_region
          %s3365 = sand.u32 %s177, 1
          %s3366 = scalar_lea.sflag [#allocation3], %s3365
          %s3367 = sand.u32 %s177, 1
          %s3368 = smul.addr %s3367, 16
          %s3369 = scalar_lea.vmem [#allocation2], %s3368
          %3370 = dma.done %s3366, 256
        $region60: #{multi_head_attention.1} parent=55 // pred_fallthru
          _
        // Predicated region
        $region61: #{multi_head_attention.1} parent=55 // pred_check
          %p3371 = pneg %p218
        $region62: #{multi_head_attention.1} parent=55 // pred_check_branch
          %3373 = sbr.rel (%p3371) target = $region64
        $region63: #{multi_head_attention.1} parent=55 // pred_region
          %p3374 = scmp.lt.s32.totalorder %s23, 1
          %s3375 = scalar_select %p3374, %s23, 1
          %s3376 = smul.addr %s3375, 2
          %s3377 = smul.addr %s3376, 4
          %s3378 = scalar_lea.vmem %s7, %s3377
        $region64: #{multi_head_attention.1} parent=55 // pred_fallthru
          _
      $region56: #{multi_head_attention.1} parent=5 // pred_fallthru
        _
    $region6: #{multi_head_attention.1} parent=1 // loop_footer
      %s21 = sadd.s32 1, %s17
    $region7: #{multi_head_attention.1} parent=1 // loop_footer_branch
      %16 = sbr.rel target = $region3
    $region8: #{multi_head_attention.1} parent=1 // loop_exit
      _
    %3379 = vsyncpa [#allocation3], 1
    %s3380 = scalar_lea.sflag [#allocation3], 1
    %3381 = vsyncpa %s3380, 1

</llo_original>
